<compile_context>
chip_gen: v6e
topology: v6e:2x2x1
jax: 0.10.0
libtpu: 0.0.40
codegen_flags: <defaults>
</compile_context>

<pallas_src>
import functools

import jax
import jax.numpy as jnp
import numpy as np
from jax import lax
from jax.experimental import pallas as pl
from jax.experimental.pallas import tpu as pltpu


def _layernorm(v, w, b, eps=1e-5):
    mu = jnp.mean(v, axis=-1, keepdims=True)
    var = jnp.mean((v - mu) ** 2, axis=-1, keepdims=True)
    return (v - mu) / jnp.sqrt(var + eps) * w + b


def _gelu_exact(x):
    # nn.GELU() default is the exact (erf) formulation.
    return 0.5 * x * (1.0 + lax.erf(x * 0.7071067811865476))


def transformer_block_kernel(
    # inputs
    xq_ref, xkv_ref,
    wq_ref, bq_ref, wk_ref, bk_ref, wv_ref, bv_ref,
    wo_ref, bo_ref,
    ln1w_ref, ln1b_ref,
    w1_ref, b1_ref, w2_ref, b2_ref,
    ln2w_ref, ln2b_ref,
    # outputs
    o_ref,
    # scratch
    q_scr, m_scr, l_scr, acc_scr, k_cache, v_cache,
    *, n_heads,
):
    H = n_heads
    qi = pl.program_id(1)
    ki = pl.program_id(2)
    n_kv = pl.num_programs(2)

    # ---- init (first KV tile for this (batch, q-tile)): Q projection + softmax state ----
    @pl.when(ki == 0)
    def _init():
        xq = xq_ref[...].astype(jnp.bfloat16)                     # (tq, D)
        tq, D = xq.shape
        xqb = jnp.broadcast_to(xq[None], (H, tq, D))              # (H, tq, D)
        # Wq / bq already carry the 1/sqrt(head_dim) scale (folded in the wrapper).
        q = jnp.einsum("hqd,hde->hqe", xqb, wq_ref[...],
                       preferred_element_type=jnp.float32) + bq_ref[...]
        q_scr[...] = q.astype(jnp.bfloat16)
        m_scr[...] = jnp.full(m_scr.shape, -jnp.inf, jnp.float32)
        l_scr[...] = jnp.zeros(l_scr.shape, jnp.float32)
        acc_scr[...] = jnp.zeros(acc_scr.shape, jnp.float32)

    # ---- K/V projection: only on the first query tile; cached in VMEM for later q tiles ----
    @pl.when(qi == 0)
    def _project_kv():
        xkv = xkv_ref[...].astype(jnp.bfloat16)                   # (tkv, D)
        tkv, D = xkv.shape
        xkb = jnp.broadcast_to(xkv[None], (H, tkv, D))            # (H, tkv, D)
        k = jnp.einsum("hkd,hde->hke", xkb, wk_ref[...],
                       preferred_element_type=jnp.float32) + bk_ref[...]
        v = jnp.einsum("hkd,hde->hke", xkb, wv_ref[...],
                       preferred_element_type=jnp.float32) + bv_ref[...]
        k_cache[ki] = k.astype(jnp.bfloat16)
        v_cache[ki] = v.astype(jnp.bfloat16)

    # ---- flash-attention step over one KV tile (reads the VMEM K/V cache) ----
    k = k_cache[ki]                                               # (H, tkv, hd) bf16
    v = v_cache[ki]

    s = jnp.einsum("hqe,hke->hqk", q_scr[...], k,
                   preferred_element_type=jnp.float32)            # (H, tq, tkv)
    m_prev = m_scr[...]
    m_new = jnp.maximum(m_prev, jnp.max(s, axis=-1, keepdims=True))
    alpha = jnp.exp(m_prev - m_new)
    p = jnp.exp(s - m_new)
    l_scr[...] = alpha * l_scr[...] + jnp.sum(p, axis=-1, keepdims=True)
    acc_scr[...] = alpha * acc_scr[...] + jnp.einsum(
        "hqk,hke->hqe", p.astype(jnp.bfloat16), v, preferred_element_type=jnp.float32)
    m_scr[...] = m_new

    # ---- finalize (last KV tile): out-proj + LN1 + MLP + LN2, single lane-dense store ----
    @pl.when(ki == n_kv - 1)
    def _finalize():
        inv_l = pl.reciprocal(l_scr[...], approx=True)            # EUP slot, ~free
        attn = (acc_scr[...] * inv_l).astype(jnp.bfloat16)        # (H, tq, hd)
        # concat-of-heads @ Wo  ==  sum_h (attn_h @ Wo_h)
        proj_h = jnp.einsum("hqe,hed->hqd", attn, wo_ref[...],
                            preferred_element_type=jnp.float32)   # (H, tq, D)
        proj = jnp.sum(proj_h, axis=0) + bo_ref[...]              # (tq, D)

        x_res = xq_ref[...].astype(jnp.float32)
        x1 = _layernorm(proj + x_res, ln1w_ref[...], ln1b_ref[...])

        h1 = jnp.dot(x1.astype(jnp.bfloat16), w1_ref[...],
                     preferred_element_type=jnp.float32) + b1_ref[...]
        h1 = _gelu_exact(h1)
        h2 = jnp.dot(h1.astype(jnp.bfloat16), w2_ref[...],
                     preferred_element_type=jnp.float32) + b2_ref[...]

        x2 = _layernorm(h2 + x1, ln2w_ref[...], ln2b_ref[...])
        o_ref[...] = x2.astype(o_ref.dtype)


def transformer_block(x, params, n_heads, *, q_tile=256, kv_tile=512):
    B, S, D = x.shape
    H = n_heads
    assert D % H == 0, "n_dims must be divisible by n_heads"
    hd = D // H
    tq = min(q_tile, S)
    tkv = min(kv_tile, S)
    assert S % tq == 0 and S % tkv == 0, "S must be divisible by the tile sizes"
    n_kv = S // tkv
    scale = 1.0 / float(np.sqrt(hd))

    bf16, f32 = jnp.bfloat16, jnp.float32

    def split_in(w):  # (D, D) stored (in, out); columns grouped per head -> (H, D, hd)
        return jnp.transpose(w.reshape(D, H, hd), (1, 0, 2))

    # One-time (plain JAX) weight prep: per-head layout, bf16, scale folded into Wq/bq.
    weights = (
        (split_in(params["wq"]) * scale).astype(bf16),           # wq  (H, D, hd)
        (params["bq"].reshape(H, 1, hd) * scale).astype(f32),    # bq  (H, 1, hd)
        split_in(params["wk"]).astype(bf16),                     # wk  (H, D, hd)
        params["bk"].reshape(H, 1, hd).astype(f32),              # bk
        split_in(params["wv"]).astype(bf16),                     # wv
        params["bv"].reshape(H, 1, hd).astype(f32),              # bv
        params["wo"].reshape(H, hd, D).astype(bf16),             # wo  (H, hd, D)
        params["bo"].astype(f32),                                # bo  (1, D)
        params["ln1_w"].astype(f32), params["ln1_b"].astype(f32),
        params["w1"].astype(bf16), params["b1"].astype(f32),
        params["w2"].astype(bf16), params["b2"].astype(f32),
        params["ln2_w"].astype(f32), params["ln2_b"].astype(f32),
    )

    grid = (B, S // tq, n_kv)

    def full_spec(a):  # grid-invariant, stays VMEM-resident across the grid
        nd = a.ndim
        return pl.BlockSpec(a.shape, lambda b, qi, ki, _nd=nd: (0,) * _nd)

    # kv rows only needed while the VMEM K/V cache is being filled (qi == 0);
    # afterwards pin the block index so the pipeline does not re-fetch them.
    def xkv_index_map(b, qi, ki):
        return (b, jnp.where(qi == 0, ki, 0), 0)

    in_specs = (
        [pl.BlockSpec((pl.Squeezed(), tq, D), lambda b, qi, ki: (b, qi, 0)),   # x (query rows)
         pl.BlockSpec((pl.Squeezed(), tkv, D), xkv_index_map)]                 # x (key/value rows)
        + [full_spec(w) for w in weights]
    )
    out_spec = pl.BlockSpec((pl.Squeezed(), tq, D), lambda b, qi, ki: (b, qi, 0))

    scratch = [
        pltpu.VMEM((H, tq, hd), jnp.bfloat16),        # q (pre-scaled)
        pltpu.VMEM((H, tq, 1), jnp.float32),          # running max
        pltpu.VMEM((H, tq, 1), jnp.float32),          # running denominator
        pltpu.VMEM((H, tq, hd), jnp.float32),         # output accumulator
        pltpu.VMEM((n_kv, H, tkv, hd), jnp.bfloat16),  # K cache (full sequence, current batch)
        pltpu.VMEM((n_kv, H, tkv, hd), jnp.bfloat16),  # V cache
    ]

    wbytes = sum(int(np.prod(w.shape)) * w.dtype.itemsize for w in weights)
    flops = int(16 * B * S * D * D + 4 * B * S * S * D)
    transcendentals = int(B * H * S * S + 2 * B * S * D)
    bytes_accessed = int(3 * B * S * D * 4 + wbytes)

    kernel = functools.partial(transformer_block_kernel, n_heads=H)
    return pl.pallas_call(
        kernel,
        out_shape=jax.ShapeDtypeStruct((B, S, D), x.dtype),
        grid_spec=pltpu.PrefetchScalarGridSpec(
            num_scalar_prefetch=0,
            grid=grid,
            in_specs=in_specs,
            out_specs=out_spec,
            scratch_shapes=scratch,
        ),
        compiler_params=pltpu.CompilerParams(
            # batch axis sharded across TensorCores; the q-tile axis must run sequentially
            # so the K/V cache filled at qi == 0 is visible to later query tiles.
            dimension_semantics=("parallel", "arbitrary", "arbitrary"),
            vmem_limit_bytes=64 * 1024 * 1024,
        ),
        cost_estimate=pl.CostEstimate(
            flops=flops, transcendentals=transcendentals, bytes_accessed=bytes_accessed),
    )(x, x, *weights)


def reference_block(x, params, n_heads):
    """Pure-JAX f32 reference of the same math (PyTorch semantics) for validation."""
    B, S, D = x.shape
    hd = D // n_heads
    scale = 1.0 / np.sqrt(hd)

    q = x @ params["wq"] + params["bq"]
    k = x @ params["wk"] + params["bk"]
    v = x @ params["wv"] + params["bv"]

    def split(t):  # (B,S,D) -> (B,H,S,hd)
        return t.reshape(B, S, n_heads, hd).transpose(0, 2, 1, 3)

    qh, kh, vh = split(q), split(k), split(v)
    s = jnp.einsum("bhqd,bhkd->bhqk", qh, kh) * scale
    p = jax.nn.softmax(s, axis=-1)
    attn = jnp.einsum("bhqk,bhkd->bhqd", p, vh).transpose(0, 2, 1, 3).reshape(B, S, D)

    proj = attn @ params["wo"] + params["bo"]

    def ln(v_, w, b, eps=1e-5):
        mu = jnp.mean(v_, axis=-1, keepdims=True)
        var = jnp.mean((v_ - mu) ** 2, axis=-1, keepdims=True)
        return (v_ - mu) / jnp.sqrt(var + eps) * w + b

    x1 = ln(proj + x, params["ln1_w"], params["ln1_b"])
    h1 = x1 @ params["w1"] + params["b1"]
    h1 = 0.5 * h1 * (1.0 + lax.erf(h1 / jnp.sqrt(2.0)))
    h2 = h1 @ params["w2"] + params["b2"]
    return ln(h2 + x1, params["ln2_w"], params["ln2_b"])


def init_params(key, n_dims):
    D = n_dims
    ks = jax.random.split(key, 8)
    std = 0.02
    return {
        # stored pre-transposed: (in, out), so the math is x @ W (== PyTorch x @ W.T)
        "wq": jax.random.normal(ks[0], (D, D), jnp.float32) * std,
        "wk": jax.random.normal(ks[1], (D, D), jnp.float32) * std,
        "wv": jax.random.normal(ks[2], (D, D), jnp.float32) * std,
        "bq": jax.random.normal(ks[3], (1, D), jnp.float32) * std,
        "bk": jax.random.normal(ks[4], (1, D), jnp.float32) * std,
        "bv": jax.random.normal(ks[5], (1, D), jnp.float32) * std,
        "wo": jax.random.normal(ks[6], (D, D), jnp.float32) * std,
        "bo": jnp.zeros((1, D), jnp.float32),
        "ln1_w": jnp.ones((1, D), jnp.float32),
        "ln1_b": jnp.zeros((1, D), jnp.float32),
        "w1": jax.random.normal(ks[7], (D, 2 * D), jnp.float32) * std,
        "b1": jnp.zeros((1, 2 * D), jnp.float32),
        "w2": jax.random.normal(jax.random.fold_in(key, 99), (2 * D, D), jnp.float32) * std,
        "b2": jnp.zeros((1, D), jnp.float32),
        "ln2_w": jnp.ones((1, D), jnp.float32),
        "ln2_b": jnp.zeros((1, D), jnp.float32),
    }


if __name__ == "__main__":
    B, S, D, H = 2, 8, 32, 4
    key = jax.random.PRNGKey(0)
    kx, kp = jax.random.split(key)
    x = jax.random.normal(kx, (B, S, D), jnp.float32)
    params = init_params(kp, D)

    out = transformer_block(x, params, H)
    out = jax.block_until_ready(out)

    ref = reference_block(x, params, H)
    # bf16 matmul operands + approx reciprocal -> compare with bf16-level tolerance.
    np.testing.assert_allclose(np.asarray(out), np.asarray(ref), rtol=2e-2, atol=2e-2)

    print("KERNEL_OK")
</pallas_src>

<mosaic_0001>
module attributes {stable_mosaic.version = 11 : i64} {
  func.func @transformer_block_kernel(%arg0: i32, %arg1: i32, %arg2: i32, %arg3: memref<1x8x32xf32, #tpu.memory_space<vmem>>, %arg4: memref<1x8x32xf32, #tpu.memory_space<vmem>>, %arg5: memref<4x32x8xbf16, #tpu.memory_space<vmem>>, %arg6: memref<4x1x8xf32, #tpu.memory_space<vmem>>, %arg7: memref<4x32x8xbf16, #tpu.memory_space<vmem>>, %arg8: memref<4x1x8xf32, #tpu.memory_space<vmem>>, %arg9: memref<4x32x8xbf16, #tpu.memory_space<vmem>>, %arg10: memref<4x1x8xf32, #tpu.memory_space<vmem>>, %arg11: memref<4x8x32xbf16, #tpu.memory_space<vmem>>, %arg12: memref<1x32xf32, #tpu.memory_space<vmem>>, %arg13: memref<1x32xf32, #tpu.memory_space<vmem>>, %arg14: memref<1x32xf32, #tpu.memory_space<vmem>>, %arg15: memref<32x64xbf16, #tpu.memory_space<vmem>>, %arg16: memref<1x64xf32, #tpu.memory_space<vmem>>, %arg17: memref<64x32xbf16, #tpu.memory_space<vmem>>, %arg18: memref<1x32xf32, #tpu.memory_space<vmem>>, %arg19: memref<1x32xf32, #tpu.memory_space<vmem>>, %arg20: memref<1x32xf32, #tpu.memory_space<vmem>>, %arg21: memref<1x8x32xf32, #tpu.memory_space<vmem>>, %arg22: memref<4x8x8xbf16, #tpu.memory_space<vmem>>, %arg23: memref<4x8x1xf32, #tpu.memory_space<vmem>>, %arg24: memref<4x8x1xf32, #tpu.memory_space<vmem>>, %arg25: memref<4x8x8xf32, #tpu.memory_space<vmem>>, %arg26: memref<1x4x8x8xbf16, #tpu.memory_space<vmem>>, %arg27: memref<1x4x8x8xbf16, #tpu.memory_space<vmem>>) attributes {dimension_semantics = [#tpu.dimension_semantics<parallel>, #tpu.dimension_semantics<arbitrary>, #tpu.dimension_semantics<arbitrary>], iteration_bounds = array<i64: 2, 1, 1>, scalar_prefetch = 0 : i64, scratch_operands = 6 : i64, tpu.core_type = #tpu.core_type<tc>, window_params = [{transform_indices = @transform_0, window_bounds = array<i64: 1, 8, 32>}, {transform_indices = @transform_1, window_bounds = array<i64: 1, 8, 32>}, {pipeline_mode = #tpu.pipeline_mode<synchronous>, transform_indices = @transform_2, window_bounds = array<i64: 4, 32, 8>}, {pipeline_mode = #tpu.pipeline_mode<synchronous>, transform_indices = @transform_3, window_bounds = array<i64: 4, 1, 8>}, {pipeline_mode = #tpu.pipeline_mode<synchronous>, transform_indices = @transform_4, window_bounds = array<i64: 4, 32, 8>}, {pipeline_mode = #tpu.pipeline_mode<synchronous>, transform_indices = @transform_5, window_bounds = array<i64: 4, 1, 8>}, {pipeline_mode = #tpu.pipeline_mode<synchronous>, transform_indices = @transform_6, window_bounds = array<i64: 4, 32, 8>}, {pipeline_mode = #tpu.pipeline_mode<synchronous>, transform_indices = @transform_7, window_bounds = array<i64: 4, 1, 8>}, {pipeline_mode = #tpu.pipeline_mode<synchronous>, transform_indices = @transform_8, window_bounds = array<i64: 4, 8, 32>}, {pipeline_mode = #tpu.pipeline_mode<synchronous>, transform_indices = @transform_9, window_bounds = array<i64: 1, 32>}, {pipeline_mode = #tpu.pipeline_mode<synchronous>, transform_indices = @transform_10, window_bounds = array<i64: 1, 32>}, {pipeline_mode = #tpu.pipeline_mode<synchronous>, transform_indices = @transform_11, window_bounds = array<i64: 1, 32>}, {pipeline_mode = #tpu.pipeline_mode<synchronous>, transform_indices = @transform_12, window_bounds = array<i64: 32, 64>}, {pipeline_mode = #tpu.pipeline_mode<synchronous>, transform_indices = @transform_13, window_bounds = array<i64: 1, 64>}, {pipeline_mode = #tpu.pipeline_mode<synchronous>, transform_indices = @transform_14, window_bounds = array<i64: 64, 32>}, {pipeline_mode = #tpu.pipeline_mode<synchronous>, transform_indices = @transform_15, window_bounds = array<i64: 1, 32>}, {pipeline_mode = #tpu.pipeline_mode<synchronous>, transform_indices = @transform_16, window_bounds = array<i64: 1, 32>}, {pipeline_mode = #tpu.pipeline_mode<synchronous>, transform_indices = @transform_17, window_bounds = array<i64: 1, 32>}, {transform_indices = @transform_18, window_bounds = array<i64: 1, 8, 32>}]} {
    %c0_i32 = arith.constant 0 : i32
    %0 = arith.cmpi eq, %arg2, %c0_i32 : i32
    %1 = arith.extui %0 : i1 to i32
    %c0_i32_0 = arith.constant 0 : i32
    %2 = arith.cmpi ne, %1, %c0_i32_0 : i32
    scf.if %2 {
      %c0_34 = arith.constant 0 : index
      %c0_35 = arith.constant 0 : index
      %c0_36 = arith.constant 0 : index
      %40 = vector.load %arg3[%c0_34, %c0_35, %c0_36] : memref<1x8x32xf32, #tpu.memory_space<vmem>>, vector<1x8x32xf32>
      %41 = vector.shape_cast %40 : vector<1x8x32xf32> to vector<8x32xf32>
      %42 = arith.truncf %41 : vector<8x32xf32> to vector<8x32xbf16>
      %43 = vector.shape_cast %42 : vector<8x32xbf16> to vector<1x8x32xbf16>
      %44 = vector.shape_cast %43 : vector<1x8x32xbf16> to vector<1x8x32xbf16>
      %45 = vector.broadcast %44 : vector<1x8x32xbf16> to vector<4x8x32xbf16>
      %c0_37 = arith.constant 0 : index
      %c0_38 = arith.constant 0 : index
      %c0_39 = arith.constant 0 : index
      %46 = vector.load %arg5[%c0_37, %c0_38, %c0_39] : memref<4x32x8xbf16, #tpu.memory_space<vmem>>, vector<4x32x8xbf16>
      "tpu.trace_start"() <{level = 10 : i32, message = "hqd,hde->hqe"}> : () -> ()
      %cst_40 = arith.constant dense<0.000000e+00> : vector<4x8x8xf32>
      %47 = tpu.matmul %45, %46, %cst_40 {dimension_numbers = #tpu.dot_dimension_numbers<[2], [1], [1], [2], [0, 0, 0, 1, 1, 2], [0], [0]>} : vector<4x8x32xbf16>, vector<4x32x8xbf16>, vector<4x8x8xf32> -> vector<4x8x8xf32>
      "tpu.trace_stop"() : () -> ()
      %c0_41 = arith.constant 0 : index
      %c0_42 = arith.constant 0 : index
      %c0_43 = arith.constant 0 : index
      %48 = vector.load %arg6[%c0_41, %c0_42, %c0_43] : memref<4x1x8xf32, #tpu.memory_space<vmem>>, vector<4x1x8xf32>
      %49 = vector.broadcast %48 : vector<4x1x8xf32> to vector<4x8x8xf32>
      %50 = arith.addf %47, %49 : vector<4x8x8xf32>
      %51 = arith.truncf %50 : vector<4x8x8xf32> to vector<4x8x8xbf16>
      %c0_44 = arith.constant 0 : index
      %c0_45 = arith.constant 0 : index
      %c0_46 = arith.constant 0 : index
      %52 = vector.load %arg22[%c0_44, %c0_45, %c0_46] : memref<4x8x8xbf16, #tpu.memory_space<vmem>>, vector<4x8x8xbf16>
      tpu.vector_store %arg22[%c0_44, %c0_45, %c0_46], %51 {strides = array<i32>} : memref<4x8x8xbf16, #tpu.memory_space<vmem>>, vector<4x8x8xbf16>,
      %cst_47 = arith.constant 0xFF800000 : f32
      %53 = vector.broadcast %cst_47 : f32 to vector<4x8x1xf32>
      %c0_48 = arith.constant 0 : index
      %c0_49 = arith.constant 0 : index
      %c0_50 = arith.constant 0 : index
      %54 = vector.load %arg23[%c0_48, %c0_49, %c0_50] : memref<4x8x1xf32, #tpu.memory_space<vmem>>, vector<4x8x1xf32>
      tpu.vector_store %arg23[%c0_48, %c0_49, %c0_50], %53 {strides = array<i32>} : memref<4x8x1xf32, #tpu.memory_space<vmem>>, vector<4x8x1xf32>,
      %cst_51 = arith.constant 0.000000e+00 : f32
      %55 = vector.broadcast %cst_51 : f32 to vector<4x8x1xf32>
      %c0_52 = arith.constant 0 : index
      %c0_53 = arith.constant 0 : index
      %c0_54 = arith.constant 0 : index
      %56 = vector.load %arg24[%c0_52, %c0_53, %c0_54] : memref<4x8x1xf32, #tpu.memory_space<vmem>>, vector<4x8x1xf32>
      tpu.vector_store %arg24[%c0_52, %c0_53, %c0_54], %55 {strides = array<i32>} : memref<4x8x1xf32, #tpu.memory_space<vmem>>, vector<4x8x1xf32>,
      %cst_55 = arith.constant 0.000000e+00 : f32
      %57 = vector.broadcast %cst_55 : f32 to vector<4x8x8xf32>
      %c0_56 = arith.constant 0 : index
      %c0_57 = arith.constant 0 : index
      %c0_58 = arith.constant 0 : index
      %58 = vector.load %arg25[%c0_56, %c0_57, %c0_58] : memref<4x8x8xf32, #tpu.memory_space<vmem>>, vector<4x8x8xf32>
      tpu.vector_store %arg25[%c0_56, %c0_57, %c0_58], %57 {strides = array<i32>} : memref<4x8x8xf32, #tpu.memory_space<vmem>>, vector<4x8x8xf32>,
    } else {
    }
    %c0_i32_1 = arith.constant 0 : i32
    %3 = arith.cmpi eq, %arg1, %c0_i32_1 : i32
    %4 = arith.extui %3 : i1 to i32
    %c0_i32_2 = arith.constant 0 : i32
    %5 = arith.cmpi ne, %4, %c0_i32_2 : i32
    scf.if %5 {
      %c0_34 = arith.constant 0 : index
      %c0_35 = arith.constant 0 : index
      %c0_36 = arith.constant 0 : index
      %40 = vector.load %arg4[%c0_34, %c0_35, %c0_36] : memref<1x8x32xf32, #tpu.memory_space<vmem>>, vector<1x8x32xf32>
      %41 = vector.shape_cast %40 : vector<1x8x32xf32> to vector<8x32xf32>
      %42 = arith.truncf %41 : vector<8x32xf32> to vector<8x32xbf16>
      %43 = vector.shape_cast %42 : vector<8x32xbf16> to vector<1x8x32xbf16>
      %44 = vector.shape_cast %43 : vector<1x8x32xbf16> to vector<1x8x32xbf16>
      %45 = vector.broadcast %44 : vector<1x8x32xbf16> to vector<4x8x32xbf16>
      %c0_37 = arith.constant 0 : index
      %c0_38 = arith.constant 0 : index
      %c0_39 = arith.constant 0 : index
      %46 = vector.load %arg7[%c0_37, %c0_38, %c0_39] : memref<4x32x8xbf16, #tpu.memory_space<vmem>>, vector<4x32x8xbf16>
      "tpu.trace_start"() <{level = 10 : i32, message = "hkd,hde->hke"}> : () -> ()
      %cst_40 = arith.constant dense<0.000000e+00> : vector<4x8x8xf32>
      %47 = tpu.matmul %45, %46, %cst_40 {dimension_numbers = #tpu.dot_dimension_numbers<[2], [1], [1], [2], [0, 0, 0, 1, 1, 2], [0], [0]>} : vector<4x8x32xbf16>, vector<4x32x8xbf16>, vector<4x8x8xf32> -> vector<4x8x8xf32>
      "tpu.trace_stop"() : () -> ()
      %c0_41 = arith.constant 0 : index
      %c0_42 = arith.constant 0 : index
      %c0_43 = arith.constant 0 : index
      %48 = vector.load %arg8[%c0_41, %c0_42, %c0_43] : memref<4x1x8xf32, #tpu.memory_space<vmem>>, vector<4x1x8xf32>
      %49 = vector.broadcast %48 : vector<4x1x8xf32> to vector<4x8x8xf32>
      %50 = arith.addf %47, %49 : vector<4x8x8xf32>
      %c0_44 = arith.constant 0 : index
      %c0_45 = arith.constant 0 : index
      %c0_46 = arith.constant 0 : index
      %51 = vector.load %arg9[%c0_44, %c0_45, %c0_46] : memref<4x32x8xbf16, #tpu.memory_space<vmem>>, vector<4x32x8xbf16>
      "tpu.trace_start"() <{level = 10 : i32, message = "hkd,hde->hke"}> : () -> ()
      %cst_47 = arith.constant dense<0.000000e+00> : vector<4x8x8xf32>
      %52 = tpu.matmul %45, %51, %cst_47 {dimension_numbers = #tpu.dot_dimension_numbers<[2], [1], [1], [2], [0, 0, 0, 1, 1, 2], [0], [0]>} : vector<4x8x32xbf16>, vector<4x32x8xbf16>, vector<4x8x8xf32> -> vector<4x8x8xf32>
      "tpu.trace_stop"() : () -> ()
      %c0_48 = arith.constant 0 : index
      %c0_49 = arith.constant 0 : index
      %c0_50 = arith.constant 0 : index
      %53 = vector.load %arg10[%c0_48, %c0_49, %c0_50] : memref<4x1x8xf32, #tpu.memory_space<vmem>>, vector<4x1x8xf32>
      %54 = vector.broadcast %53 : vector<4x1x8xf32> to vector<4x8x8xf32>
      %55 = arith.addf %52, %54 : vector<4x8x8xf32>
      %56 = arith.truncf %50 : vector<4x8x8xf32> to vector<4x8x8xbf16>
      %57 = arith.index_cast %arg2 : i32 to index
      %c0_51 = arith.constant 0 : index
      %c0_52 = arith.constant 0 : index
      %c0_53 = arith.constant 0 : index
      %58 = vector.load %arg26[%57, %c0_51, %c0_52, %c0_53] : memref<1x4x8x8xbf16, #tpu.memory_space<vmem>>, vector<1x4x8x8xbf16>
      %59 = vector.shape_cast %58 : vector<1x4x8x8xbf16> to vector<4x8x8xbf16>
      %60 = vector.shape_cast %56 : vector<4x8x8xbf16> to vector<1x4x8x8xbf16>
      tpu.vector_store %arg26[%57, %c0_51, %c0_52, %c0_53], %60 {strides = array<i32>} : memref<1x4x8x8xbf16, #tpu.memory_space<vmem>>, vector<1x4x8x8xbf16>,
      %61 = arith.truncf %55 : vector<4x8x8xf32> to vector<4x8x8xbf16>
      %62 = arith.index_cast %arg2 : i32 to index
      %c0_54 = arith.constant 0 : index
      %c0_55 = arith.constant 0 : index
      %c0_56 = arith.constant 0 : index
      %63 = vector.load %arg27[%62, %c0_54, %c0_55, %c0_56] : memref<1x4x8x8xbf16, #tpu.memory_space<vmem>>, vector<1x4x8x8xbf16>
      %64 = vector.shape_cast %63 : vector<1x4x8x8xbf16> to vector<4x8x8xbf16>
      %65 = vector.shape_cast %61 : vector<4x8x8xbf16> to vector<1x4x8x8xbf16>
      tpu.vector_store %arg27[%62, %c0_54, %c0_55, %c0_56], %65 {strides = array<i32>} : memref<1x4x8x8xbf16, #tpu.memory_space<vmem>>, vector<1x4x8x8xbf16>,
    } else {
    }
    %6 = arith.index_cast %arg2 : i32 to index
    %c0 = arith.constant 0 : index
    %c0_3 = arith.constant 0 : index
    %c0_4 = arith.constant 0 : index
    %7 = vector.load %arg26[%6, %c0, %c0_3, %c0_4] : memref<1x4x8x8xbf16, #tpu.memory_space<vmem>>, vector<1x4x8x8xbf16>
    %8 = vector.shape_cast %7 : vector<1x4x8x8xbf16> to vector<4x8x8xbf16>
    %9 = arith.index_cast %arg2 : i32 to index
    %c0_5 = arith.constant 0 : index
    %c0_6 = arith.constant 0 : index
    %c0_7 = arith.constant 0 : index
    %10 = vector.load %arg27[%9, %c0_5, %c0_6, %c0_7] : memref<1x4x8x8xbf16, #tpu.memory_space<vmem>>, vector<1x4x8x8xbf16>
    %11 = vector.shape_cast %10 : vector<1x4x8x8xbf16> to vector<4x8x8xbf16>
    %c0_8 = arith.constant 0 : index
    %c0_9 = arith.constant 0 : index
    %c0_10 = arith.constant 0 : index
    %12 = vector.load %arg22[%c0_8, %c0_9, %c0_10] : memref<4x8x8xbf16, #tpu.memory_space<vmem>>, vector<4x8x8xbf16>
    "tpu.trace_start"() <{level = 10 : i32, message = "hqe,hke->hqk"}> : () -> ()
    %cst = arith.constant dense<0.000000e+00> : vector<4x8x8xf32>
    %13 = tpu.matmul %12, %8, %cst {dimension_numbers = #tpu.dot_dimension_numbers<[2], [2], [1], [1], [0, 0, 0, 1, 1, 1], [0], [0]>} : vector<4x8x8xbf16>, vector<4x8x8xbf16>, vector<4x8x8xf32> -> vector<4x8x8xf32>
    "tpu.trace_stop"() : () -> ()
    %c0_11 = arith.constant 0 : index
    %c0_12 = arith.constant 0 : index
    %c0_13 = arith.constant 0 : index
    %14 = vector.load %arg23[%c0_11, %c0_12, %c0_13] : memref<4x8x1xf32, #tpu.memory_space<vmem>>, vector<4x8x1xf32>
    %cst_14 = arith.constant dense<0xFF800000> : vector<4x8xf32>
    %15 = vector.multi_reduction <maximumf>, %13, %cst_14 [2] : vector<4x8x8xf32> to vector<4x8xf32>
    %16 = vector.shape_cast %15 : vector<4x8xf32> to vector<4x8x1xf32>
    %17 = arith.maximumf %14, %16 : vector<4x8x1xf32>
    %18 = arith.subf %14, %17 : vector<4x8x1xf32>
    %19 = math.exp %18 : vector<4x8x1xf32>
    %20 = vector.broadcast %17 : vector<4x8x1xf32> to vector<4x8x8xf32>
    %21 = arith.subf %13, %20 : vector<4x8x8xf32>
    %22 = math.exp %21 : vector<4x8x8xf32>
    %c0_15 = arith.constant 0 : index
    %c0_16 = arith.constant 0 : index
    %c0_17 = arith.constant 0 : index
    %23 = vector.load %arg24[%c0_15, %c0_16, %c0_17] : memref<4x8x1xf32, #tpu.memory_space<vmem>>, vector<4x8x1xf32>
    %24 = arith.mulf %19, %23 : vector<4x8x1xf32>
    %cst_18 = arith.constant dense<0.000000e+00> : vector<4x8xf32>
    %25 = vector.multi_reduction <add>, %22, %cst_18 [2] : vector<4x8x8xf32> to vector<4x8xf32>
    %26 = vector.shape_cast %25 : vector<4x8xf32> to vector<4x8x1xf32>
    %27 = arith.addf %24, %26 : vector<4x8x1xf32>
    %c0_19 = arith.constant 0 : index
    %c0_20 = arith.constant 0 : index
    %c0_21 = arith.constant 0 : index
    %28 = vector.load %arg24[%c0_19, %c0_20, %c0_21] : memref<4x8x1xf32, #tpu.memory_space<vmem>>, vector<4x8x1xf32>
    tpu.vector_store %arg24[%c0_19, %c0_20, %c0_21], %27 {strides = array<i32>} : memref<4x8x1xf32, #tpu.memory_space<vmem>>, vector<4x8x1xf32>,
    %c0_22 = arith.constant 0 : index
    %c0_23 = arith.constant 0 : index
    %c0_24 = arith.constant 0 : index
    %29 = vector.load %arg25[%c0_22, %c0_23, %c0_24] : memref<4x8x8xf32, #tpu.memory_space<vmem>>, vector<4x8x8xf32>
    %30 = vector.broadcast %19 : vector<4x8x1xf32> to vector<4x8x8xf32>
    %31 = arith.mulf %30, %29 : vector<4x8x8xf32>
    %32 = arith.truncf %22 : vector<4x8x8xf32> to vector<4x8x8xbf16>
    "tpu.trace_start"() <{level = 10 : i32, message = "hqk,hke->hqe"}> : () -> ()
    %cst_25 = arith.constant dense<0.000000e+00> : vector<4x8x8xf32>
    %33 = tpu.matmul %32, %11, %cst_25 {dimension_numbers = #tpu.dot_dimension_numbers<[2], [1], [1], [2], [0, 0, 0, 1, 1, 2], [0], [0]>} : vector<4x8x8xbf16>, vector<4x8x8xbf16>, vector<4x8x8xf32> -> vector<4x8x8xf32>
    "tpu.trace_stop"() : () -> ()
    %34 = arith.addf %31, %33 : vector<4x8x8xf32>
    %c0_26 = arith.constant 0 : index
    %c0_27 = arith.constant 0 : index
    %c0_28 = arith.constant 0 : index
    %35 = vector.load %arg25[%c0_26, %c0_27, %c0_28] : memref<4x8x8xf32, #tpu.memory_space<vmem>>, vector<4x8x8xf32>
    tpu.vector_store %arg25[%c0_26, %c0_27, %c0_28], %34 {strides = array<i32>} : memref<4x8x8xf32, #tpu.memory_space<vmem>>, vector<4x8x8xf32>,
    %c0_29 = arith.constant 0 : index
    %c0_30 = arith.constant 0 : index
    %c0_31 = arith.constant 0 : index
    %36 = vector.load %arg23[%c0_29, %c0_30, %c0_31] : memref<4x8x1xf32, #tpu.memory_space<vmem>>, vector<4x8x1xf32>
    tpu.vector_store %arg23[%c0_29, %c0_30, %c0_31], %17 {strides = array<i32>} : memref<4x8x1xf32, #tpu.memory_space<vmem>>, vector<4x8x1xf32>,
    %c0_i32_32 = arith.constant 0 : i32
    %37 = arith.cmpi eq, %arg2, %c0_i32_32 : i32
    %38 = arith.extui %37 : i1 to i32
    %c0_i32_33 = arith.constant 0 : i32
    %39 = arith.cmpi ne, %38, %c0_i32_33 : i32
    scf.if %39 {
      %c0_34 = arith.constant 0 : index
      %c0_35 = arith.constant 0 : index
      %c0_36 = arith.constant 0 : index
      %40 = vector.load %arg24[%c0_34, %c0_35, %c0_36] : memref<4x8x1xf32, #tpu.memory_space<vmem>>, vector<4x8x1xf32>
      %41 = tpu.reciprocal %40 {approx = true} : vector<4x8x1xf32> -> vector<4x8x1xf32>
      %c0_37 = arith.constant 0 : index
      %c0_38 = arith.constant 0 : index
      %c0_39 = arith.constant 0 : index
      %42 = vector.load %arg25[%c0_37, %c0_38, %c0_39] : memref<4x8x8xf32, #tpu.memory_space<vmem>>, vector<4x8x8xf32>
      %43 = vector.broadcast %41 : vector<4x8x1xf32> to vector<4x8x8xf32>
      %44 = arith.mulf %42, %43 : vector<4x8x8xf32>
      %45 = arith.truncf %44 : vector<4x8x8xf32> to vector<4x8x8xbf16>
      %c0_40 = arith.constant 0 : index
      %c0_41 = arith.constant 0 : index
      %c0_42 = arith.constant 0 : index
      %46 = vector.load %arg11[%c0_40, %c0_41, %c0_42] : memref<4x8x32xbf16, #tpu.memory_space<vmem>>, vector<4x8x32xbf16>
      "tpu.trace_start"() <{level = 10 : i32, message = "hqe,hed->hqd"}> : () -> ()
      %cst_43 = arith.constant dense<0.000000e+00> : vector<4x8x32xf32>
      %47 = tpu.matmul %45, %46, %cst_43 {dimension_numbers = #tpu.dot_dimension_numbers<[2], [1], [1], [2], [0, 0, 0, 1, 1, 2], [0], [0]>} : vector<4x8x8xbf16>, vector<4x8x32xbf16>, vector<4x8x32xf32> -> vector<4x8x32xf32>
      "tpu.trace_stop"() : () -> ()
      %cst_44 = arith.constant dense<0.000000e+00> : vector<8x32xf32>
      %48 = vector.multi_reduction <add>, %47, %cst_44 [0] : vector<4x8x32xf32> to vector<8x32xf32>
      %c0_45 = arith.constant 0 : index
      %c0_46 = arith.constant 0 : index
      %49 = vector.load %arg12[%c0_45, %c0_46] : memref<1x32xf32, #tpu.memory_space<vmem>>, vector<1x32xf32>
      %50 = vector.broadcast %49 : vector<1x32xf32> to vector<8x32xf32>
      %51 = arith.addf %48, %50 : vector<8x32xf32>
      %c0_47 = arith.constant 0 : index
      %c0_48 = arith.constant 0 : index
      %c0_49 = arith.constant 0 : index
      %52 = vector.load %arg3[%c0_47, %c0_48, %c0_49] : memref<1x8x32xf32, #tpu.memory_space<vmem>>, vector<1x8x32xf32>
      %53 = vector.shape_cast %52 : vector<1x8x32xf32> to vector<8x32xf32>
      %54 = arith.addf %51, %53 : vector<8x32xf32>
      %c0_50 = arith.constant 0 : index
      %c0_51 = arith.constant 0 : index
      %55 = vector.load %arg13[%c0_50, %c0_51] : memref<1x32xf32, #tpu.memory_space<vmem>>, vector<1x32xf32>
      %c0_52 = arith.constant 0 : index
      %c0_53 = arith.constant 0 : index
      %56 = vector.load %arg14[%c0_52, %c0_53] : memref<1x32xf32, #tpu.memory_space<vmem>>, vector<1x32xf32>
      %cst_54 = arith.constant dense<0.000000e+00> : vector<8xf32>
      %57 = vector.multi_reduction <add>, %54, %cst_54 [1] : vector<8x32xf32> to vector<8xf32>
      %58 = vector.shape_cast %57 : vector<8xf32> to vector<8x1xf32>
      %cst_55 = arith.constant 3.200000e+01 : f32
      %59 = vector.broadcast %cst_55 : f32 to vector<8x1xf32>
      %60 = arith.divf %58, %59 : vector<8x1xf32>
      %61 = vector.broadcast %60 : vector<8x1xf32> to vector<8x32xf32>
      %62 = arith.subf %54, %61 : vector<8x32xf32>
      %63 = arith.mulf %62, %62 : vector<8x32xf32>
      %cst_56 = arith.constant dense<0.000000e+00> : vector<8xf32>
      %64 = vector.multi_reduction <add>, %63, %cst_56 [1] : vector<8x32xf32> to vector<8xf32>
      %65 = vector.shape_cast %64 : vector<8xf32> to vector<8x1xf32>
      %cst_57 = arith.constant 3.200000e+01 : f32
      %66 = vector.broadcast %cst_57 : f32 to vector<8x1xf32>
      %67 = arith.divf %65, %66 : vector<8x1xf32>
      %68 = vector.broadcast %60 : vector<8x1xf32> to vector<8x32xf32>
      %69 = arith.subf %54, %68 : vector<8x32xf32>
      %cst_58 = arith.constant 9.99999974E-6 : f32
      %70 = vector.broadcast %cst_58 : f32 to vector<8x1xf32>
      %71 = arith.addf %67, %70 : vector<8x1xf32>
      %72 = math.sqrt %71 : vector<8x1xf32>
      %73 = vector.broadcast %72 : vector<8x1xf32> to vector<8x32xf32>
      %74 = arith.divf %69, %73 : vector<8x32xf32>
      %75 = vector.broadcast %55 : vector<1x32xf32> to vector<8x32xf32>
      %76 = arith.mulf %74, %75 : vector<8x32xf32>
      %77 = vector.broadcast %56 : vector<1x32xf32> to vector<8x32xf32>
      %78 = arith.addf %76, %77 : vector<8x32xf32>
      %79 = arith.truncf %78 : vector<8x32xf32> to vector<8x32xbf16>
      %c0_59 = arith.constant 0 : index
      %c0_60 = arith.constant 0 : index
      %80 = vector.load %arg15[%c0_59, %c0_60] : memref<32x64xbf16, #tpu.memory_space<vmem>>, vector<32x64xbf16>
      %cst_61 = arith.constant dense<0.000000e+00> : vector<8x64xf32>
      %81 = tpu.matmul %79, %80, %cst_61 {dimension_numbers = #tpu.dot_dimension_numbers<[1], [0], [0], [1], [0, 0, 1, 1], [], []>} : vector<8x32xbf16>, vector<32x64xbf16>, vector<8x64xf32> -> vector<8x64xf32>
      %c0_62 = arith.constant 0 : index
      %c0_63 = arith.constant 0 : index
      %82 = vector.load %arg16[%c0_62, %c0_63] : memref<1x64xf32, #tpu.memory_space<vmem>>, vector<1x64xf32>
      %83 = vector.broadcast %82 : vector<1x64xf32> to vector<8x64xf32>
      %84 = arith.addf %81, %83 : vector<8x64xf32>
      %cst_64 = arith.constant 5.000000e-01 : f32
      %85 = vector.broadcast %cst_64 : f32 to vector<8x64xf32>
      %86 = arith.mulf %85, %84 : vector<8x64xf32>
      %cst_65 = arith.constant 0.707106769 : f32
      %87 = vector.broadcast %cst_65 : f32 to vector<8x64xf32>
      %88 = arith.mulf %84, %87 : vector<8x64xf32>
      %89 = math.erf %88 : vector<8x64xf32>
      %cst_66 = arith.constant 1.000000e+00 : f32
      %90 = vector.broadcast %cst_66 : f32 to vector<8x64xf32>
      %91 = arith.addf %90, %89 : vector<8x64xf32>
      %92 = arith.mulf %86, %91 : vector<8x64xf32>
      %93 = arith.truncf %92 : vector<8x64xf32> to vector<8x64xbf16>
      %c0_67 = arith.constant 0 : index
      %c0_68 = arith.constant 0 : index
      %94 = vector.load %arg17[%c0_67, %c0_68] : memref<64x32xbf16, #tpu.memory_space<vmem>>, vector<64x32xbf16>
      %cst_69 = arith.constant dense<0.000000e+00> : vector<8x32xf32>
      %95 = tpu.matmul %93, %94, %cst_69 {dimension_numbers = #tpu.dot_dimension_numbers<[1], [0], [0], [1], [0, 0, 1, 1], [], []>} : vector<8x64xbf16>, vector<64x32xbf16>, vector<8x32xf32> -> vector<8x32xf32>
      %c0_70 = arith.constant 0 : index
      %c0_71 = arith.constant 0 : index
      %96 = vector.load %arg18[%c0_70, %c0_71] : memref<1x32xf32, #tpu.memory_space<vmem>>, vector<1x32xf32>
      %97 = vector.broadcast %96 : vector<1x32xf32> to vector<8x32xf32>
      %98 = arith.addf %95, %97 : vector<8x32xf32>
      %99 = arith.addf %98, %78 : vector<8x32xf32>
      %c0_72 = arith.constant 0 : index
      %c0_73 = arith.constant 0 : index
      %100 = vector.load %arg19[%c0_72, %c0_73] : memref<1x32xf32, #tpu.memory_space<vmem>>, vector<1x32xf32>
      %c0_74 = arith.constant 0 : index
      %c0_75 = arith.constant 0 : index
      %101 = vector.load %arg20[%c0_74, %c0_75] : memref<1x32xf32, #tpu.memory_space<vmem>>, vector<1x32xf32>
      %cst_76 = arith.constant dense<0.000000e+00> : vector<8xf32>
      %102 = vector.multi_reduction <add>, %99, %cst_76 [1] : vector<8x32xf32> to vector<8xf32>
      %103 = vector.shape_cast %102 : vector<8xf32> to vector<8x1xf32>
      %cst_77 = arith.constant 3.200000e+01 : f32
      %104 = vector.broadcast %cst_77 : f32 to vector<8x1xf32>
      %105 = arith.divf %103, %104 : vector<8x1xf32>
      %106 = vector.broadcast %105 : vector<8x1xf32> to vector<8x32xf32>
      %107 = arith.subf %99, %106 : vector<8x32xf32>
      %108 = arith.mulf %107, %107 : vector<8x32xf32>
      %cst_78 = arith.constant dense<0.000000e+00> : vector<8xf32>
      %109 = vector.multi_reduction <add>, %108, %cst_78 [1] : vector<8x32xf32> to vector<8xf32>
      %110 = vector.shape_cast %109 : vector<8xf32> to vector<8x1xf32>
      %cst_79 = arith.constant 3.200000e+01 : f32
      %111 = vector.broadcast %cst_79 : f32 to vector<8x1xf32>
      %112 = arith.divf %110, %111 : vector<8x1xf32>
      %113 = vector.broadcast %105 : vector<8x1xf32> to vector<8x32xf32>
      %114 = arith.subf %99, %113 : vector<8x32xf32>
      %cst_80 = arith.constant 9.99999974E-6 : f32
      %115 = vector.broadcast %cst_80 : f32 to vector<8x1xf32>
      %116 = arith.addf %112, %115 : vector<8x1xf32>
      %117 = math.sqrt %116 : vector<8x1xf32>
      %118 = vector.broadcast %117 : vector<8x1xf32> to vector<8x32xf32>
      %119 = arith.divf %114, %118 : vector<8x32xf32>
      %120 = vector.broadcast %100 : vector<1x32xf32> to vector<8x32xf32>
      %121 = arith.mulf %119, %120 : vector<8x32xf32>
      %122 = vector.broadcast %101 : vector<1x32xf32> to vector<8x32xf32>
      %123 = arith.addf %121, %122 : vector<8x32xf32>
      %c0_81 = arith.constant 0 : index
      %c0_82 = arith.constant 0 : index
      %c0_83 = arith.constant 0 : index
      %124 = vector.load %arg21[%c0_81, %c0_82, %c0_83] : memref<1x8x32xf32, #tpu.memory_space<vmem>>, vector<1x8x32xf32>
      %125 = vector.shape_cast %124 : vector<1x8x32xf32> to vector<8x32xf32>
      %126 = vector.shape_cast %123 : vector<8x32xf32> to vector<1x8x32xf32>
      tpu.vector_store %arg21[%c0_81, %c0_82, %c0_83], %126 {strides = array<i32>} : memref<1x8x32xf32, #tpu.memory_space<vmem>>, vector<1x8x32xf32>,
    } else {
    }
    return
  }
  func.func @transform_0(%arg0: i32, %arg1: i32, %arg2: i32) -> (i32, i32, i32) {
    %c0_i32 = arith.constant 0 : i32
    %c0_i32_0 = arith.constant 0 : i32
    return %arg0, %arg1, %c0_i32 : i32, i32, i32
  }
  func.func @transform_1(%arg0: i32, %arg1: i32, %arg2: i32) -> (i32, i32, i32) {
    %c0_i32 = arith.constant 0 : i32
    %0 = arith.cmpi eq, %arg1, %c0_i32 : i32
    %c0_i32_0 = arith.constant 0 : i32
    %1 = arith.select %0, %arg2, %c0_i32_0 : i32
    %c0_i32_1 = arith.constant 0 : i32
    %c0_i32_2 = arith.constant 0 : i32
    return %arg0, %1, %c0_i32_1 : i32, i32, i32
  }
  func.func @transform_2(%arg0: i32, %arg1: i32, %arg2: i32) -> (i32, i32, i32) {
    %c0_i32 = arith.constant 0 : i32
    %c0_i32_0 = arith.constant 0 : i32
    %c0_i32_1 = arith.constant 0 : i32
    %c0_i32_2 = arith.constant 0 : i32
    return %c0_i32, %c0_i32_0, %c0_i32_1 : i32, i32, i32
  }
  func.func @transform_3(%arg0: i32, %arg1: i32, %arg2: i32) -> (i32, i32, i32) {
    %c0_i32 = arith.constant 0 : i32
    %c0_i32_0 = arith.constant 0 : i32
    %c0_i32_1 = arith.constant 0 : i32
    %c0_i32_2 = arith.constant 0 : i32
    return %c0_i32, %c0_i32_0, %c0_i32_1 : i32, i32, i32
  }
  func.func @transform_4(%arg0: i32, %arg1: i32, %arg2: i32) -> (i32, i32, i32) {
    %c0_i32 = arith.constant 0 : i32
    %c0_i32_0 = arith.constant 0 : i32
    %c0_i32_1 = arith.constant 0 : i32
    %c0_i32_2 = arith.constant 0 : i32
    return %c0_i32, %c0_i32_0, %c0_i32_1 : i32, i32, i32
  }
  func.func @transform_5(%arg0: i32, %arg1: i32, %arg2: i32) -> (i32, i32, i32) {
    %c0_i32 = arith.constant 0 : i32
    %c0_i32_0 = arith.constant 0 : i32
    %c0_i32_1 = arith.constant 0 : i32
    %c0_i32_2 = arith.constant 0 : i32
    return %c0_i32, %c0_i32_0, %c0_i32_1 : i32, i32, i32
  }
  func.func @transform_6(%arg0: i32, %arg1: i32, %arg2: i32) -> (i32, i32, i32) {
    %c0_i32 = arith.constant 0 : i32
    %c0_i32_0 = arith.constant 0 : i32
    %c0_i32_1 = arith.constant 0 : i32
    %c0_i32_2 = arith.constant 0 : i32
    return %c0_i32, %c0_i32_0, %c0_i32_1 : i32, i32, i32
  }
  func.func @transform_7(%arg0: i32, %arg1: i32, %arg2: i32) -> (i32, i32, i32) {
    %c0_i32 = arith.constant 0 : i32
    %c0_i32_0 = arith.constant 0 : i32
    %c0_i32_1 = arith.constant 0 : i32
    %c0_i32_2 = arith.constant 0 : i32
    return %c0_i32, %c0_i32_0, %c0_i32_1 : i32, i32, i32
  }
  func.func @transform_8(%arg0: i32, %arg1: i32, %arg2: i32) -> (i32, i32, i32) {
    %c0_i32 = arith.constant 0 : i32
    %c0_i32_0 = arith.constant 0 : i32
    %c0_i32_1 = arith.constant 0 : i32
    %c0_i32_2 = arith.constant 0 : i32
    return %c0_i32, %c0_i32_0, %c0_i32_1 : i32, i32, i32
  }
  func.func @transform_9(%arg0: i32, %arg1: i32, %arg2: i32) -> (i32, i32) {
    %c0_i32 = arith.constant 0 : i32
    %c0_i32_0 = arith.constant 0 : i32
    %c0_i32_1 = arith.constant 0 : i32
    return %c0_i32, %c0_i32_0 : i32, i32
  }
  func.func @transform_10(%arg0: i32, %arg1: i32, %arg2: i32) -> (i32, i32) {
    %c0_i32 = arith.constant 0 : i32
    %c0_i32_0 = arith.constant 0 : i32
    %c0_i32_1 = arith.constant 0 : i32
    return %c0_i32, %c0_i32_0 : i32, i32
  }
  func.func @transform_11(%arg0: i32, %arg1: i32, %arg2: i32) -> (i32, i32) {
    %c0_i32 = arith.constant 0 : i32
    %c0_i32_0 = arith.constant 0 : i32
    %c0_i32_1 = arith.constant 0 : i32
    return %c0_i32, %c0_i32_0 : i32, i32
  }
  func.func @transform_12(%arg0: i32, %arg1: i32, %arg2: i32) -> (i32, i32) {
    %c0_i32 = arith.constant 0 : i32
    %c0_i32_0 = arith.constant 0 : i32
    %c0_i32_1 = arith.constant 0 : i32
    return %c0_i32, %c0_i32_0 : i32, i32
  }
  func.func @transform_13(%arg0: i32, %arg1: i32, %arg2: i32) -> (i32, i32) {
    %c0_i32 = arith.constant 0 : i32
    %c0_i32_0 = arith.constant 0 : i32
    %c0_i32_1 = arith.constant 0 : i32
    return %c0_i32, %c0_i32_0 : i32, i32
  }
  func.func @transform_14(%arg0: i32, %arg1: i32, %arg2: i32) -> (i32, i32) {
    %c0_i32 = arith.constant 0 : i32
    %c0_i32_0 = arith.constant 0 : i32
    %c0_i32_1 = arith.constant 0 : i32
    return %c0_i32, %c0_i32_0 : i32, i32
  }
  func.func @transform_15(%arg0: i32, %arg1: i32, %arg2: i32) -> (i32, i32) {
    %c0_i32 = arith.constant 0 : i32
    %c0_i32_0 = arith.constant 0 : i32
    %c0_i32_1 = arith.constant 0 : i32
    return %c0_i32, %c0_i32_0 : i32, i32
  }
  func.func @transform_16(%arg0: i32, %arg1: i32, %arg2: i32) -> (i32, i32) {
    %c0_i32 = arith.constant 0 : i32
    %c0_i32_0 = arith.constant 0 : i32
    %c0_i32_1 = arith.constant 0 : i32
    return %c0_i32, %c0_i32_0 : i32, i32
  }
  func.func @transform_17(%arg0: i32, %arg1: i32, %arg2: i32) -> (i32, i32) {
    %c0_i32 = arith.constant 0 : i32
    %c0_i32_0 = arith.constant 0 : i32
    %c0_i32_1 = arith.constant 0 : i32
    return %c0_i32, %c0_i32_0 : i32, i32
  }
  func.func @transform_18(%arg0: i32, %arg1: i32, %arg2: i32) -> (i32, i32, i32) {
    %c0_i32 = arith.constant 0 : i32
    %c0_i32_0 = arith.constant 0 : i32
    return %arg0, %arg1, %c0_i32 : i32, i32, i32
  }
}

</mosaic_0001>

<llo_original>
// kernel: tpu_custom_call.1
$region0: #{tpu_custom_call.1}
  #allocation0 [shape = 'u32[]', space=smem, size = 0x4, offset = 0x4, fixed_abs, tag = 'smem constant byte address 0x4 - core index']
  #allocation1 [shape = 'u32[144,128]{1,0:T(1,128)}', space=vmem, size = 0x12000, scoped, tag = 'internal scratch']
  #allocation2 [shape = 'bf16[4,8,8]{2,1,0:T(8,128)(2,1)}', space=vmem, size = 0x2000, scoped, tag = 'scratch operand']
  #allocation3 [shape = 'f32[4,8,1]{2,1,0:T(8,128)}', space=vmem, size = 0x4000, scoped, tag = 'scratch operand']
  #allocation4 [shape = 'f32[4,8,1]{2,1,0:T(8,128)}', space=vmem, size = 0x4000, scoped, tag = 'scratch operand']
  #allocation5 [shape = 'f32[4,8,8]{2,1,0:T(8,128)}', space=vmem, size = 0x4000, scoped, tag = 'scratch operand']
  #allocation6 [shape = 'bf16[1,4,8,8]{3,2,1,0:T(8,128)(2,1)}', space=vmem, size = 0x2000, scoped, tag = 'scratch operand']
  #allocation7 [shape = 'bf16[1,4,8,8]{3,2,1,0:T(8,128)(2,1)}', space=vmem, size = 0x2000, scoped, tag = 'scratch operand']
  %s0 = inlined_call_operand.vmem [shape: f32[2,8,32], index: 0, kind: input, shape index: {}]
  %s1 = inlined_call_operand.vmem [shape: f32[2,8,32], index: 1, kind: input, shape index: {}]
  %s2 = inlined_call_operand.vmem [shape: bf16[4,32,8], index: 2, kind: input, shape index: {}]
  %s3 = inlined_call_operand.vmem [shape: f32[4,1,8], index: 3, kind: input, shape index: {}]
  %s4 = inlined_call_operand.vmem [shape: bf16[4,32,8], index: 4, kind: input, shape index: {}]
  %s5 = inlined_call_operand.vmem [shape: f32[4,1,8], index: 5, kind: input, shape index: {}]
  %s6 = inlined_call_operand.vmem [shape: bf16[4,32,8], index: 6, kind: input, shape index: {}]
  %s7 = inlined_call_operand.vmem [shape: f32[4,1,8], index: 7, kind: input, shape index: {}]
  %s8 = inlined_call_operand.vmem [shape: bf16[4,8,32], index: 8, kind: input, shape index: {}]
  %s9 = inlined_call_operand.vmem [shape: f32[1,32], index: 9, kind: input, shape index: {}]
  %s10 = inlined_call_operand.vmem [shape: f32[1,32], index: 10, kind: input, shape index: {}]
  %s11 = inlined_call_operand.vmem [shape: f32[1,32], index: 11, kind: input, shape index: {}]
  %s12 = inlined_call_operand.vmem [shape: bf16[32,64], index: 12, kind: input, shape index: {}]
  %s13 = inlined_call_operand.vmem [shape: f32[1,64], index: 13, kind: input, shape index: {}]
  %s14 = inlined_call_operand.vmem [shape: bf16[64,32], index: 14, kind: input, shape index: {}]
  %s15 = inlined_call_operand.vmem [shape: f32[1,32], index: 15, kind: input, shape index: {}]
  %s16 = inlined_call_operand.vmem [shape: f32[1,32], index: 16, kind: input, shape index: {}]
  %s17 = inlined_call_operand.vmem [shape: f32[1,32], index: 17, kind: input, shape index: {}]
  %s18 = inlined_call_operand.hbm [shape: f32[2,8,32], index: 18, kind: output, shape index: {}]
  %s19 = sld [smem:[#allocation0]]
  $region117: #{tpu_custom_call.1} parent=0
    _
  %s21 = ssub.s32 1, %s19
  %s22 = scalar_select 0, %s21, %s19
  $region1: #{tpu_custom_call.1} parent=0
    #allocation8 [shape = 'u8[8192]{0}', space=vmem, size = 0x2000, scoped, tag = 'output window, operand 0']
    #allocation9 [shape = 's32[2]{0}', space=sflag, size = 0x8, scoped, tag = 'scoped memory for tpu_custom_call.1']
    %23 = vsyncpa [#allocation9], 0
    %s24 = scalar_lea.sflag [#allocation9], 1
    %25 = vsyncpa %s24, 0
    loop: start=0, step=1, limit=4
    $region2: #{tpu_custom_call.1} parent=1 // loop_pre_header
      _
    $region3: #{tpu_custom_call.1} parent=1 // loop_header
      %s27 = sphi 0, %s31
      %p28 = scmp.ge.s32.totalorder %s27, 4
      %s34 = sphi 0, %s53
      %s35 = sphi 0, %s49
      %s36 = sphi 0, %s45
      %s37 = sphi 0, %s34
      %s38 = sphi 0, %s35
      %s39 = sphi 0, %s36
      %s40 = sphi 0, %s37
      %s41 = sphi 0, %s38
      %s42 = sphi 0, %s39
      %s58 = sphi 0, %s60
      %s61 = sphi 0, %s58
      %s62 = sphi 0, %s61
      %s78 = sphi 0, %s62
      %s90 = sphi 0, %s92
      %s93 = sphi 0, %s90
      %s94 = sphi 0, %s93
      %s110 = sphi 0, %s94
      %s114 = sphi 0, %s114
      %s116 = sphi 0, %s114
      %s117 = sphi 0, %s116
      %s131 = sphi 0, %s117
      %s135 = sphi 0, %s135
      %s137 = sphi 0, %s135
      %s138 = sphi 0, %s137
      %s152 = sphi 0, %s138
      %s156 = sphi 0, %s156
      %s158 = sphi 0, %s156
      %s159 = sphi 0, %s158
      %s173 = sphi 0, %s159
      %s177 = sphi 0, %s177
      %s179 = sphi 0, %s177
      %s180 = sphi 0, %s179
      %s194 = sphi 0, %s180
      %s198 = sphi 0, %s198
      %s200 = sphi 0, %s198
      %s201 = sphi 0, %s200
      %s215 = sphi 0, %s201
      %s219 = sphi 0, %s219
      %s221 = sphi 0, %s219
      %s222 = sphi 0, %s221
      %s236 = sphi 0, %s222
      %s240 = sphi 0, %s240
      %s242 = sphi 0, %s240
      %s243 = sphi 0, %s242
      %s257 = sphi 0, %s243
      %s261 = sphi 0, %s261
      %s263 = sphi 0, %s261
      %s264 = sphi 0, %s263
      %s278 = sphi 0, %s264
      %s282 = sphi 0, %s282
      %s284 = sphi 0, %s282
      %s285 = sphi 0, %s284
      %s299 = sphi 0, %s285
      %s303 = sphi 0, %s303
      %s305 = sphi 0, %s303
      %s306 = sphi 0, %s305
      %s320 = sphi 0, %s306
      %s324 = sphi 0, %s324
      %s326 = sphi 0, %s324
      %s327 = sphi 0, %s326
      %s341 = sphi 0, %s327
      %s345 = sphi 0, %s345
      %s347 = sphi 0, %s345
      %s348 = sphi 0, %s347
      %s362 = sphi 0, %s348
      %s366 = sphi 0, %s366
      %s368 = sphi 0, %s366
      %s369 = sphi 0, %s368
      %s383 = sphi 0, %s369
      %s387 = sphi 0, %s387
      %s389 = sphi 0, %s387
      %s390 = sphi 0, %s389
      %s404 = sphi 0, %s390
      %s408 = sphi 0, %s408
      %s410 = sphi 0, %s408
      %s411 = sphi 0, %s410
      %s425 = sphi 0, %s411
      %s429 = sphi 0, %s429
      %s431 = sphi 0, %s429
      %s432 = sphi 0, %s431
      %s446 = sphi 0, %s432
      %s454 = sphi 0, %s456
      %s457 = sphi 0, %s454
      %s458 = sphi 0, %s457
      %s474 = sphi 0, %s458
    $region4: #{tpu_custom_call.1} parent=1 // loop_header_branch
      %30 = sbr.rel (%p28) target = $region8
    $region5: #{tpu_custom_call.1} parent=1 // loop_body
      %s32 = ssub.s32 %s27, 1
      %s33 = ssub.s32 %s27, 2
      %s43 = sadd.s32 1, %s36
      %p44 = scmp.ge.s32.totalorder %s43, 1
      %s45 = scalar_select %p44, 0, %s43
      %s46 = sadd.s32 1, %s35
      %s47 = scalar_select %p44, %s46, %s35
      %p48 = scmp.ge.s32.totalorder %s47, 1
      %s49 = scalar_select %p48, 0, %s47
      %s50 = sadd.s32 1, %s34
      %s51 = scalar_select %p48, %s50, %s34
      %p52 = scmp.ge.s32.totalorder %s51, 2
      %s53 = scalar_select %p52, 0, %s51
      %s54 = ssub.s32 %s34, %s53
      %s55 = ssub.s32 %s35, %s49
      %s56 = sor.u32 %s54, %s55
      %p57 = scmp.eq.s32.totalorder %s56, 0
      %s59 = sadd.s32 %s58, 1
      %s60 = scalar_select %p57, %s58, %s59
      %p63 = pneg %p57
      %p64 = scmp.eq.s32.totalorder %s27, 1
      %p65 = por %p63, %p64
      %p66 = scmp.ne.s32.totalorder %s58, %s61
      %p67 = scmp.eq.s32.totalorder %s27, 0
      %p68 = por %p66, %p67
      %p69 = scmp.ne.s32.totalorder %s58, %s61
      %p70 = scmp.eq.s32.totalorder %s32, 1
      %p71 = por %p69, %p70
      %p72 = scmp.ne.s32.totalorder %s61, %s62
      %p73 = scmp.eq.s32.totalorder %s32, 0
      %p74 = por %p72, %p73
      %p75 = scmp.ne.s32.totalorder %s61, %s62
      %p76 = scmp.eq.s32.totalorder %s33, 1
      %p77 = por %p75, %p76
      %p79 = scmp.ne.s32.totalorder %s62, %s78
      %p80 = scmp.eq.s32.totalorder %s33, 0
      %p81 = por %p79, %p80
      %p82 = scmp.eq.s32.totalorder %s35, 0
      %s83 = scalar_select %p82, %s36, 0
      %p84 = scmp.eq.s32.totalorder %s49, 0
      %s85 = scalar_select %p84, %s45, 0
      %s86 = ssub.s32 %s34, %s53
      %s87 = ssub.s32 %s83, %s85
      %s88 = sor.u32 %s86, %s87
      %p89 = scmp.eq.s32.totalorder %s88, 0
      %s91 = sadd.s32 %s90, 1
      %s92 = scalar_select %p89, %s90, %s91
      %p95 = pneg %p89
      %p96 = scmp.eq.s32.totalorder %s27, 1
      %p97 = por %p95, %p96
      %p98 = scmp.ne.s32.totalorder %s90, %s93
      %p99 = scmp.eq.s32.totalorder %s27, 0
      %p100 = por %p98, %p99
      %p101 = scmp.ne.s32.totalorder %s90, %s93
      %p102 = scmp.eq.s32.totalorder %s32, 1
      %p103 = por %p101, %p102
      %p104 = scmp.ne.s32.totalorder %s93, %s94
      %p105 = scmp.eq.s32.totalorder %s32, 0
      %p106 = por %p104, %p105
      %p107 = scmp.ne.s32.totalorder %s93, %s94
      %p108 = scmp.eq.s32.totalorder %s33, 1
      %p109 = por %p107, %p108
      %p111 = scmp.ne.s32.totalorder %s94, %s110
      %p112 = scmp.eq.s32.totalorder %s33, 0
      %p113 = por %p111, %p112
      %s115 = sadd.s32 %s114, 1
      %p118 = scmp.eq.s32.totalorder %s27, 1
      %p119 = scmp.ne.s32.totalorder %s114, %s116
      %p120 = scmp.eq.s32.totalorder %s27, 0
      %p121 = por %p119, %p120
      %p122 = scmp.ne.s32.totalorder %s114, %s116
      %p123 = scmp.eq.s32.totalorder %s32, 1
      %p124 = por %p122, %p123
      %p125 = scmp.ne.s32.totalorder %s116, %s117
      %p126 = scmp.eq.s32.totalorder %s32, 0
      %p127 = por %p125, %p126
      %p128 = scmp.ne.s32.totalorder %s116, %s117
      %p129 = scmp.eq.s32.totalorder %s33, 1
      %p130 = por %p128, %p129
      %p132 = scmp.ne.s32.totalorder %s117, %s131
      %p133 = scmp.eq.s32.totalorder %s33, 0
      %p134 = por %p132, %p133
      %s136 = sadd.s32 %s135, 1
      %p139 = scmp.eq.s32.totalorder %s27, 1
      %p140 = scmp.ne.s32.totalorder %s135, %s137
      %p141 = scmp.eq.s32.totalorder %s27, 0
      %p142 = por %p140, %p141
      %p143 = scmp.ne.s32.totalorder %s135, %s137
      %p144 = scmp.eq.s32.totalorder %s32, 1
      %p145 = por %p143, %p144
      %p146 = scmp.ne.s32.totalorder %s137, %s138
      %p147 = scmp.eq.s32.totalorder %s32, 0
      %p148 = por %p146, %p147
      %p149 = scmp.ne.s32.totalorder %s137, %s138
      %p150 = scmp.eq.s32.totalorder %s33, 1
      %p151 = por %p149, %p150
      %p153 = scmp.ne.s32.totalorder %s138, %s152
      %p154 = scmp.eq.s32.totalorder %s33, 0
      %p155 = por %p153, %p154
      %s157 = sadd.s32 %s156, 1
      %p160 = scmp.eq.s32.totalorder %s27, 1
      %p161 = scmp.ne.s32.totalorder %s156, %s158
      %p162 = scmp.eq.s32.totalorder %s27, 0
      %p163 = por %p161, %p162
      %p164 = scmp.ne.s32.totalorder %s156, %s158
      %p165 = scmp.eq.s32.totalorder %s32, 1
      %p166 = por %p164, %p165
      %p167 = scmp.ne.s32.totalorder %s158, %s159
      %p168 = scmp.eq.s32.totalorder %s32, 0
      %p169 = por %p167, %p168
      %p170 = scmp.ne.s32.totalorder %s158, %s159
      %p171 = scmp.eq.s32.totalorder %s33, 1
      %p172 = por %p170, %p171
      %p174 = scmp.ne.s32.totalorder %s159, %s173
      %p175 = scmp.eq.s32.totalorder %s33, 0
      %p176 = por %p174, %p175
      %s178 = sadd.s32 %s177, 1
      %p181 = scmp.eq.s32.totalorder %s27, 1
      %p182 = scmp.ne.s32.totalorder %s177, %s179
      %p183 = scmp.eq.s32.totalorder %s27, 0
      %p184 = por %p182, %p183
      %p185 = scmp.ne.s32.totalorder %s177, %s179
      %p186 = scmp.eq.s32.totalorder %s32, 1
      %p187 = por %p185, %p186
      %p188 = scmp.ne.s32.totalorder %s179, %s180
      %p189 = scmp.eq.s32.totalorder %s32, 0
      %p190 = por %p188, %p189
      %p191 = scmp.ne.s32.totalorder %s179, %s180
      %p192 = scmp.eq.s32.totalorder %s33, 1
      %p193 = por %p191, %p192
      %p195 = scmp.ne.s32.totalorder %s180, %s194
      %p196 = scmp.eq.s32.totalorder %s33, 0
      %p197 = por %p195, %p196
      %s199 = sadd.s32 %s198, 1
      %p202 = scmp.eq.s32.totalorder %s27, 1
      %p203 = scmp.ne.s32.totalorder %s198, %s200
      %p204 = scmp.eq.s32.totalorder %s27, 0
      %p205 = por %p203, %p204
      %p206 = scmp.ne.s32.totalorder %s198, %s200
      %p207 = scmp.eq.s32.totalorder %s32, 1
      %p208 = por %p206, %p207
      %p209 = scmp.ne.s32.totalorder %s200, %s201
      %p210 = scmp.eq.s32.totalorder %s32, 0
      %p211 = por %p209, %p210
      %p212 = scmp.ne.s32.totalorder %s200, %s201
      %p213 = scmp.eq.s32.totalorder %s33, 1
      %p214 = por %p212, %p213
      %p216 = scmp.ne.s32.totalorder %s201, %s215
      %p217 = scmp.eq.s32.totalorder %s33, 0
      %p218 = por %p216, %p217
      %s220 = sadd.s32 %s219, 1
      %p223 = scmp.eq.s32.totalorder %s27, 1
      %p224 = scmp.ne.s32.totalorder %s219, %s221
      %p225 = scmp.eq.s32.totalorder %s27, 0
      %p226 = por %p224, %p225
      %p227 = scmp.ne.s32.totalorder %s219, %s221
      %p228 = scmp.eq.s32.totalorder %s32, 1
      %p229 = por %p227, %p228
      %p230 = scmp.ne.s32.totalorder %s221, %s222
      %p231 = scmp.eq.s32.totalorder %s32, 0
      %p232 = por %p230, %p231
      %p233 = scmp.ne.s32.totalorder %s221, %s222
      %p234 = scmp.eq.s32.totalorder %s33, 1
      %p235 = por %p233, %p234
      %p237 = scmp.ne.s32.totalorder %s222, %s236
      %p238 = scmp.eq.s32.totalorder %s33, 0
      %p239 = por %p237, %p238
      %s241 = sadd.s32 %s240, 1
      %p244 = scmp.eq.s32.totalorder %s27, 1
      %p245 = scmp.ne.s32.totalorder %s240, %s242
      %p246 = scmp.eq.s32.totalorder %s27, 0
      %p247 = por %p245, %p246
      %p248 = scmp.ne.s32.totalorder %s240, %s242
      %p249 = scmp.eq.s32.totalorder %s32, 1
      %p250 = por %p248, %p249
      %p251 = scmp.ne.s32.totalorder %s242, %s243
      %p252 = scmp.eq.s32.totalorder %s32, 0
      %p253 = por %p251, %p252
      %p254 = scmp.ne.s32.totalorder %s242, %s243
      %p255 = scmp.eq.s32.totalorder %s33, 1
      %p256 = por %p254, %p255
      %p258 = scmp.ne.s32.totalorder %s243, %s257
      %p259 = scmp.eq.s32.totalorder %s33, 0
      %p260 = por %p258, %p259
      %s262 = sadd.s32 %s261, 1
      %p265 = scmp.eq.s32.totalorder %s27, 1
      %p266 = scmp.ne.s32.totalorder %s261, %s263
      %p267 = scmp.eq.s32.totalorder %s27, 0
      %p268 = por %p266, %p267
      %p269 = scmp.ne.s32.totalorder %s261, %s263
      %p270 = scmp.eq.s32.totalorder %s32, 1
      %p271 = por %p269, %p270
      %p272 = scmp.ne.s32.totalorder %s263, %s264
      %p273 = scmp.eq.s32.totalorder %s32, 0
      %p274 = por %p272, %p273
      %p275 = scmp.ne.s32.totalorder %s263, %s264
      %p276 = scmp.eq.s32.totalorder %s33, 1
      %p277 = por %p275, %p276
      %p279 = scmp.ne.s32.totalorder %s264, %s278
      %p280 = scmp.eq.s32.totalorder %s33, 0
      %p281 = por %p279, %p280
      %s283 = sadd.s32 %s282, 1
      %p286 = scmp.eq.s32.totalorder %s27, 1
      %p287 = scmp.ne.s32.totalorder %s282, %s284
      %p288 = scmp.eq.s32.totalorder %s27, 0
      %p289 = por %p287, %p288
      %p290 = scmp.ne.s32.totalorder %s282, %s284
      %p291 = scmp.eq.s32.totalorder %s32, 1
      %p292 = por %p290, %p291
      %p293 = scmp.ne.s32.totalorder %s284, %s285
      %p294 = scmp.eq.s32.totalorder %s32, 0
      %p295 = por %p293, %p294
      %p296 = scmp.ne.s32.totalorder %s284, %s285
      %p297 = scmp.eq.s32.totalorder %s33, 1
      %p298 = por %p296, %p297
      %p300 = scmp.ne.s32.totalorder %s285, %s299
      %p301 = scmp.eq.s32.totalorder %s33, 0
      %p302 = por %p300, %p301
      %s304 = sadd.s32 %s303, 1
      %p307 = scmp.eq.s32.totalorder %s27, 1
      %p308 = scmp.ne.s32.totalorder %s303, %s305
      %p309 = scmp.eq.s32.totalorder %s27, 0
      %p310 = por %p308, %p309
      %p311 = scmp.ne.s32.totalorder %s303, %s305
      %p312 = scmp.eq.s32.totalorder %s32, 1
      %p313 = por %p311, %p312
      %p314 = scmp.ne.s32.totalorder %s305, %s306
      %p315 = scmp.eq.s32.totalorder %s32, 0
      %p316 = por %p314, %p315
      %p317 = scmp.ne.s32.totalorder %s305, %s306
      %p318 = scmp.eq.s32.totalorder %s33, 1
      %p319 = por %p317, %p318
      %p321 = scmp.ne.s32.totalorder %s306, %s320
      %p322 = scmp.eq.s32.totalorder %s33, 0
      %p323 = por %p321, %p322
      %s325 = sadd.s32 %s324, 1
      %p328 = scmp.eq.s32.totalorder %s27, 1
      %p329 = scmp.ne.s32.totalorder %s324, %s326
      %p330 = scmp.eq.s32.totalorder %s27, 0
      %p331 = por %p329, %p330
      %p332 = scmp.ne.s32.totalorder %s324, %s326
      %p333 = scmp.eq.s32.totalorder %s32, 1
      %p334 = por %p332, %p333
      %p335 = scmp.ne.s32.totalorder %s326, %s327
      %p336 = scmp.eq.s32.totalorder %s32, 0
      %p337 = por %p335, %p336
      %p338 = scmp.ne.s32.totalorder %s326, %s327
      %p339 = scmp.eq.s32.totalorder %s33, 1
      %p340 = por %p338, %p339
      %p342 = scmp.ne.s32.totalorder %s327, %s341
      %p343 = scmp.eq.s32.totalorder %s33, 0
      %p344 = por %p342, %p343
      %s346 = sadd.s32 %s345, 1
      %p349 = scmp.eq.s32.totalorder %s27, 1
      %p350 = scmp.ne.s32.totalorder %s345, %s347
      %p351 = scmp.eq.s32.totalorder %s27, 0
      %p352 = por %p350, %p351
      %p353 = scmp.ne.s32.totalorder %s345, %s347
      %p354 = scmp.eq.s32.totalorder %s32, 1
      %p355 = por %p353, %p354
      %p356 = scmp.ne.s32.totalorder %s347, %s348
      %p357 = scmp.eq.s32.totalorder %s32, 0
      %p358 = por %p356, %p357
      %p359 = scmp.ne.s32.totalorder %s347, %s348
      %p360 = scmp.eq.s32.totalorder %s33, 1
      %p361 = por %p359, %p360
      %p363 = scmp.ne.s32.totalorder %s348, %s362
      %p364 = scmp.eq.s32.totalorder %s33, 0
      %p365 = por %p363, %p364
      %s367 = sadd.s32 %s366, 1
      %p370 = scmp.eq.s32.totalorder %s27, 1
      %p371 = scmp.ne.s32.totalorder %s366, %s368
      %p372 = scmp.eq.s32.totalorder %s27, 0
      %p373 = por %p371, %p372
      %p374 = scmp.ne.s32.totalorder %s366, %s368
      %p375 = scmp.eq.s32.totalorder %s32, 1
      %p376 = por %p374, %p375
      %p377 = scmp.ne.s32.totalorder %s368, %s369
      %p378 = scmp.eq.s32.totalorder %s32, 0
      %p379 = por %p377, %p378
      %p380 = scmp.ne.s32.totalorder %s368, %s369
      %p381 = scmp.eq.s32.totalorder %s33, 1
      %p382 = por %p380, %p381
      %p384 = scmp.ne.s32.totalorder %s369, %s383
      %p385 = scmp.eq.s32.totalorder %s33, 0
      %p386 = por %p384, %p385
      %s388 = sadd.s32 %s387, 1
      %p391 = scmp.eq.s32.totalorder %s27, 1
      %p392 = scmp.ne.s32.totalorder %s387, %s389
      %p393 = scmp.eq.s32.totalorder %s27, 0
      %p394 = por %p392, %p393
      %p395 = scmp.ne.s32.totalorder %s387, %s389
      %p396 = scmp.eq.s32.totalorder %s32, 1
      %p397 = por %p395, %p396
      %p398 = scmp.ne.s32.totalorder %s389, %s390
      %p399 = scmp.eq.s32.totalorder %s32, 0
      %p400 = por %p398, %p399
      %p401 = scmp.ne.s32.totalorder %s389, %s390
      %p402 = scmp.eq.s32.totalorder %s33, 1
      %p403 = por %p401, %p402
      %p405 = scmp.ne.s32.totalorder %s390, %s404
      %p406 = scmp.eq.s32.totalorder %s33, 0
      %p407 = por %p405, %p406
      %s409 = sadd.s32 %s408, 1
      %p412 = scmp.eq.s32.totalorder %s27, 1
      %p413 = scmp.ne.s32.totalorder %s408, %s410
      %p414 = scmp.eq.s32.totalorder %s27, 0
      %p415 = por %p413, %p414
      %p416 = scmp.ne.s32.totalorder %s408, %s410
      %p417 = scmp.eq.s32.totalorder %s32, 1
      %p418 = por %p416, %p417
      %p419 = scmp.ne.s32.totalorder %s410, %s411
      %p420 = scmp.eq.s32.totalorder %s32, 0
      %p421 = por %p419, %p420
      %p422 = scmp.ne.s32.totalorder %s410, %s411
      %p423 = scmp.eq.s32.totalorder %s33, 1
      %p424 = por %p422, %p423
      %p426 = scmp.ne.s32.totalorder %s411, %s425
      %p427 = scmp.eq.s32.totalorder %s33, 0
      %p428 = por %p426, %p427
      %s430 = sadd.s32 %s429, 1
      %p433 = scmp.eq.s32.totalorder %s27, 1
      %p434 = scmp.ne.s32.totalorder %s429, %s431
      %p435 = scmp.eq.s32.totalorder %s27, 0
      %p436 = por %p434, %p435
      %p437 = scmp.ne.s32.totalorder %s429, %s431
      %p438 = scmp.eq.s32.totalorder %s32, 1
      %p439 = por %p437, %p438
      %p440 = scmp.ne.s32.totalorder %s431, %s432
      %p441 = scmp.eq.s32.totalorder %s32, 0
      %p442 = por %p440, %p441
      %p443 = scmp.ne.s32.totalorder %s431, %s432
      %p444 = scmp.eq.s32.totalorder %s33, 1
      %p445 = por %p443, %p444
      %p447 = scmp.ne.s32.totalorder %s432, %s446
      %p448 = scmp.eq.s32.totalorder %s33, 0
      %p449 = por %p447, %p448
      %s450 = ssub.s32 %s34, %s53
      %s451 = ssub.s32 %s35, %s49
      %s452 = sor.u32 %s450, %s451
      %p453 = scmp.eq.s32.totalorder %s452, 0
      %s455 = sadd.s32 %s454, 1
      %s456 = scalar_select %p453, %s454, %s455
      %p459 = pneg %p453
      %p460 = scmp.eq.s32.totalorder %s27, 1
      %p461 = por %p459, %p460
      %p462 = scmp.ne.s32.totalorder %s454, %s457
      %p463 = scmp.eq.s32.totalorder %s27, 0
      %p464 = por %p462, %p463
      %p465 = scmp.ne.s32.totalorder %s454, %s457
      %p466 = scmp.eq.s32.totalorder %s32, 1
      %p467 = por %p465, %p466
      %p468 = scmp.ne.s32.totalorder %s457, %s458
      %p469 = scmp.eq.s32.totalorder %s32, 0
      %p470 = por %p468, %p469
      %p471 = scmp.ne.s32.totalorder %s457, %s458
      %p472 = scmp.eq.s32.totalorder %s33, 1
      %p473 = por %p471, %p472
      %p475 = scmp.ne.s32.totalorder %s458, %s474
      %p476 = scmp.eq.s32.totalorder %s33, 0
      %p477 = por %p475, %p476
      %p478 = scmp.le.s32.totalorder 1, %s27
      %p479 = scmp.lt.s32.totalorder %s27, 3
      %p480 = pnand %p478, %p479
      %p481 = pneg %p480
      // Predicated region
      $region9: #{tpu_custom_call.1} parent=5 // pred_check
        _
      $region10: #{tpu_custom_call.1} parent=5 // pred_check_branch
        %483 = sbr.rel (%p480) target = $region12
      $region11: #{tpu_custom_call.1} parent=5 // pred_region
        %s484 = ssub.s32 %s27, 1
        // Predicated region
        $region13: #{tpu_custom_call.1} parent=11 // pred_check
          %p485 = pneg %p127
        $region14: #{tpu_custom_call.1} parent=11 // pred_check_branch
          %487 = sbr.rel (%p485) target = $region16
        $region15: #{tpu_custom_call.1} parent=11 // pred_region
          _
        $region16: #{tpu_custom_call.1} parent=11 // pred_fallthru
          _
        // Predicated region
        $region17: #{tpu_custom_call.1} parent=11 // pred_check
          %p488 = pneg %p148
        $region18: #{tpu_custom_call.1} parent=11 // pred_check_branch
          %490 = sbr.rel (%p488) target = $region20
        $region19: #{tpu_custom_call.1} parent=11 // pred_region
          _
        $region20: #{tpu_custom_call.1} parent=11 // pred_fallthru
          _
        // Predicated region
        $region21: #{tpu_custom_call.1} parent=11 // pred_check
          %p491 = pneg %p169
        $region22: #{tpu_custom_call.1} parent=11 // pred_check_branch
          %493 = sbr.rel (%p491) target = $region24
        $region23: #{tpu_custom_call.1} parent=11 // pred_region
          _
        $region24: #{tpu_custom_call.1} parent=11 // pred_fallthru
          _
        // Predicated region
        $region25: #{tpu_custom_call.1} parent=11 // pred_check
          %p494 = pneg %p190
        $region26: #{tpu_custom_call.1} parent=11 // pred_check_branch
          %496 = sbr.rel (%p494) target = $region28
        $region27: #{tpu_custom_call.1} parent=11 // pred_region
          _
        $region28: #{tpu_custom_call.1} parent=11 // pred_fallthru
          _
        // Predicated region
        $region29: #{tpu_custom_call.1} parent=11 // pred_check
          %p497 = pneg %p211
        $region30: #{tpu_custom_call.1} parent=11 // pred_check_branch
          %499 = sbr.rel (%p497) target = $region32
        $region31: #{tpu_custom_call.1} parent=11 // pred_region
          _
        $region32: #{tpu_custom_call.1} parent=11 // pred_fallthru
          _
        // Predicated region
        $region33: #{tpu_custom_call.1} parent=11 // pred_check
          %p500 = pneg %p232
        $region34: #{tpu_custom_call.1} parent=11 // pred_check_branch
          %502 = sbr.rel (%p500) target = $region36
        $region35: #{tpu_custom_call.1} parent=11 // pred_region
          _
        $region36: #{tpu_custom_call.1} parent=11 // pred_fallthru
          _
        // Predicated region
        $region37: #{tpu_custom_call.1} parent=11 // pred_check
          %p503 = pneg %p253
        $region38: #{tpu_custom_call.1} parent=11 // pred_check_branch
          %505 = sbr.rel (%p503) target = $region40
        $region39: #{tpu_custom_call.1} parent=11 // pred_region
          _
        $region40: #{tpu_custom_call.1} parent=11 // pred_fallthru
          _
        // Predicated region
        $region41: #{tpu_custom_call.1} parent=11 // pred_check
          %p506 = pneg %p274
        $region42: #{tpu_custom_call.1} parent=11 // pred_check_branch
          %508 = sbr.rel (%p506) target = $region44
        $region43: #{tpu_custom_call.1} parent=11 // pred_region
          _
        $region44: #{tpu_custom_call.1} parent=11 // pred_fallthru
          _
        // Predicated region
        $region45: #{tpu_custom_call.1} parent=11 // pred_check
          %p509 = pneg %p295
        $region46: #{tpu_custom_call.1} parent=11 // pred_check_branch
          %511 = sbr.rel (%p509) target = $region48
        $region47: #{tpu_custom_call.1} parent=11 // pred_region
          _
        $region48: #{tpu_custom_call.1} parent=11 // pred_fallthru
          _
        // Predicated region
        $region49: #{tpu_custom_call.1} parent=11 // pred_check
          %p512 = pneg %p316
        $region50: #{tpu_custom_call.1} parent=11 // pred_check_branch
          %514 = sbr.rel (%p512) target = $region52
        $region51: #{tpu_custom_call.1} parent=11 // pred_region
          _
        $region52: #{tpu_custom_call.1} parent=11 // pred_fallthru
          _
        // Predicated region
        $region53: #{tpu_custom_call.1} parent=11 // pred_check
          %p515 = pneg %p337
        $region54: #{tpu_custom_call.1} parent=11 // pred_check_branch
          %517 = sbr.rel (%p515) target = $region56
        $region55: #{tpu_custom_call.1} parent=11 // pred_region
          _
        $region56: #{tpu_custom_call.1} parent=11 // pred_fallthru
          _
        // Predicated region
        $region57: #{tpu_custom_call.1} parent=11 // pred_check
          %p518 = pneg %p358
        $region58: #{tpu_custom_call.1} parent=11 // pred_check_branch
          %520 = sbr.rel (%p518) target = $region60
        $region59: #{tpu_custom_call.1} parent=11 // pred_region
          _
        $region60: #{tpu_custom_call.1} parent=11 // pred_fallthru
          _
        // Predicated region
        $region61: #{tpu_custom_call.1} parent=11 // pred_check
          %p521 = pneg %p379
        $region62: #{tpu_custom_call.1} parent=11 // pred_check_branch
          %523 = sbr.rel (%p521) target = $region64
        $region63: #{tpu_custom_call.1} parent=11 // pred_region
          _
        $region64: #{tpu_custom_call.1} parent=11 // pred_fallthru
          _
        // Predicated region
        $region65: #{tpu_custom_call.1} parent=11 // pred_check
          %p524 = pneg %p400
        $region66: #{tpu_custom_call.1} parent=11 // pred_check_branch
          %526 = sbr.rel (%p524) target = $region68
        $region67: #{tpu_custom_call.1} parent=11 // pred_region
          _
        $region68: #{tpu_custom_call.1} parent=11 // pred_fallthru
          _
        // Predicated region
        $region69: #{tpu_custom_call.1} parent=11 // pred_check
          %p527 = pneg %p421
        $region70: #{tpu_custom_call.1} parent=11 // pred_check_branch
          %529 = sbr.rel (%p527) target = $region72
        $region71: #{tpu_custom_call.1} parent=11 // pred_region
          _
        $region72: #{tpu_custom_call.1} parent=11 // pred_fallthru
          _
        // Predicated region
        $region73: #{tpu_custom_call.1} parent=11 // pred_check
          %p530 = pneg %p442
        $region74: #{tpu_custom_call.1} parent=11 // pred_check_branch
          %532 = sbr.rel (%p530) target = $region76
        $region75: #{tpu_custom_call.1} parent=11 // pred_region
          _
        $region76: #{tpu_custom_call.1} parent=11 // pred_fallthru
          _
      $region12: #{tpu_custom_call.1} parent=5 // pred_fallthru
        _
      %p533 = scmp.lt.s32.totalorder %s27, 2
      // Predicated region
      $region77: #{tpu_custom_call.1} parent=5 // pred_check
        %p534 = pneg %p533
      $region78: #{tpu_custom_call.1} parent=5 // pred_check_branch
        %536 = sbr.rel (%p534) target = $region80
      $region79: #{tpu_custom_call.1} parent=5 // pred_region
        // Predicated region
        $region81: #{tpu_custom_call.1} parent=79 // pred_check
          %p537 = pneg %p68
        $region82: #{tpu_custom_call.1} parent=79 // pred_check_branch
          %539 = sbr.rel (%p537) target = $region84
        $region83: #{tpu_custom_call.1} parent=79 // pred_region
          %p540 = scmp.lt.s32.totalorder %s34, 1
          %s541 = scalar_select %p540, %s34, 1
          %p542 = scmp.lt.s32.totalorder %s35, 0
          %s543 = scalar_select %p542, %s35, 0
          %s544 = sadd.s32 %s543, %s541
          %s545 = smul.addr %s544, 8
          %s546 = scalar_lea.vmem %s0, %s545
        $region84: #{tpu_custom_call.1} parent=79 // pred_fallthru
          _
        // Predicated region
        $region85: #{tpu_custom_call.1} parent=79 // pred_check
          %p547 = pneg %p100
        $region86: #{tpu_custom_call.1} parent=79 // pred_check_branch
          %549 = sbr.rel (%p547) target = $region88
        $region87: #{tpu_custom_call.1} parent=79 // pred_region
          %p550 = scmp.eq.s32.totalorder %s35, 0
          %s551 = scalar_select %p550, %s36, 0
          %p552 = scmp.lt.s32.totalorder %s34, 1
          %s553 = scalar_select %p552, %s34, 1
          %p554 = scmp.lt.s32.totalorder %s551, 0
          %s555 = scalar_select %p554, %s551, 0
          %s556 = sadd.s32 %s555, %s553
          %s557 = smul.addr %s556, 8
          %s558 = scalar_lea.vmem %s1, %s557
          %p559 = scmp.eq.s32.totalorder %s35, 0
          %s560 = scalar_select %p559, %s36, 0
        $region88: #{tpu_custom_call.1} parent=79 // pred_fallthru
          _
      $region80: #{tpu_custom_call.1} parent=5 // pred_fallthru
        _
      %p561 = scmp.le.s32.totalorder 1, %s27
      %p562 = scmp.lt.s32.totalorder %s27, 3
      %p563 = pnand %p561, %p562
      %p564 = pneg %p563
      // Predicated region
      $region89: #{tpu_custom_call.1} parent=5 // pred_check
        _
      $region90: #{tpu_custom_call.1} parent=5 // pred_check_branch
        %566 = sbr.rel (%p563) target = $region92
      $region91: #{tpu_custom_call.1} parent=5 // pred_region
        %s567 = ssub.s32 %s27, 1
        %p568 = scmp.lt.s32.totalorder %s37, 1
        %s569 = scalar_select %p568, %s37, 1
        %p570 = scmp.lt.s32.totalorder %s38, 0
        %s571 = scalar_select %p570, %s38, 0
        %s572 = sadd.s32 %s571, %s569
        %s573 = smul.addr %s572, 8
        %s574 = scalar_lea.vmem %s0, %s573
        %p575 = pneg %p74
        %p576 = pneg %p71
        %p577 = scmp.eq.s32.totalorder %s38, 0
        %s578 = scalar_select %p577, %s39, 0
        %p579 = scmp.lt.s32.totalorder %s37, 1
        %s580 = scalar_select %p579, %s37, 1
        %p581 = scmp.lt.s32.totalorder %s578, 0
        %s582 = scalar_select %p581, %s578, 0
        %s583 = sadd.s32 %s582, %s580
        %s584 = smul.addr %s583, 8
        %s585 = scalar_lea.vmem %s1, %s584
        %p586 = pneg %p106
        %p587 = pneg %p103
        %p588 = pneg %p127
        %p589 = pneg %p124
        %p590 = pneg %p148
        %p591 = pneg %p145
        %p592 = pneg %p169
        %p593 = pneg %p166
        %p594 = pneg %p190
        %p595 = pneg %p187
        %p596 = pneg %p211
        %p597 = pneg %p208
        %p598 = pneg %p232
        %p599 = pneg %p229
        %p600 = pneg %p253
        %p601 = pneg %p250
        %p602 = pneg %p274
        %p603 = pneg %p271
        %p604 = pneg %p295
        %p605 = pneg %p292
        %p606 = pneg %p316
        %p607 = pneg %p313
        %p608 = pneg %p337
        %p609 = pneg %p334
        %p610 = pneg %p358
        %p611 = pneg %p355
        %p612 = pneg %p379
        %p613 = pneg %p376
        %p614 = pneg %p400
        %p615 = pneg %p397
        %p616 = pneg %p421
        %p617 = pneg %p418
        %p618 = pneg %p442
        %p619 = pneg %p439
        %p620 = pneg %p470
        %p621 = pneg %p467
        %s622 = sand.u32 %s457, 1
        %s623 = scalar_lea.sflag [#allocation9], %s622
        %s624 = sand.u32 %s457, 1
        %s625 = smul.addr %s624, 8
        %s626 = scalar_lea.vmem [#allocation8], %s625
        %p627 = scmp.lt.s32.totalorder %s37, 1
        %s628 = scalar_select %p627, %s37, 1
        %p629 = scmp.lt.s32.totalorder %s38, 0
        %s630 = scalar_select %p629, %s38, 0
        %s631 = sadd.s32 %s630, %s628
        %s632 = smul.addr %s631, 8
        %s633 = scalar_lea.vmem %s0, %s632
        %p634 = scmp.eq.s32.totalorder %s38, 0
        %s635 = scalar_select %p634, %s39, 0
        %p636 = scmp.lt.s32.totalorder %s37, 1
        %s637 = scalar_select %p636, %s37, 1
        %p638 = scmp.lt.s32.totalorder %s635, 0
        %s639 = scalar_select %p638, %s635, 0
        %s640 = sadd.s32 %s639, %s637
        %s641 = smul.addr %s640, 8
        %s642 = scalar_lea.vmem %s1, %s641
        %p643 = scmp.eq.s32.totalorder %s38, 0
        %s644 = scalar_select %p643, %s39, 0
        %p646 = scmp.eq.s32.totalorder %s39, 0
        // Predicated region
        $region93: #{tpu_custom_call.1} parent=91 // pred_check
          %p647 = pneg %p646
        $region94: #{tpu_custom_call.1} parent=91 // pred_check_branch
          %649 = sbr.rel (%p647) target = $region96
        $region95: #{tpu_custom_call.1} parent=91 // pred_region
          %v650 = vld [vmem:[%s633] sm:$0xff]
          %v651 = vpack.c.bf16 %v650, %v650
          %v652 = vld [vmem:[%s2] sm:$0xf]
          %v653 = vld [vmem:[%s2 + $0x4] sm:$0xf]
          %v654 = vld [vmem:[%s2 + $0x8] sm:$0xf]
          %v655 = vld [vmem:[%s2 + $0xc] sm:$0xf]
          %v656 = vld [vmem:[%s2 + $0x10] sm:$0xf]
          %v657 = vld [vmem:[%s2 + $0x14] sm:$0xf]
          %v658 = vld [vmem:[%s2 + $0x18] sm:$0xf]
          %v659 = vld [vmem:[%s2 + $0x1c] sm:$0xf]
          %v660 = vld [vmem:[%s2 + $0x20] sm:$0xf]
          %v661 = vld [vmem:[%s2 + $0x24] sm:$0xf]
          %v662 = vld [vmem:[%s2 + $0x28] sm:$0xf]
          %v663 = vld [vmem:[%s2 + $0x2c] sm:$0xf]
          %v664 = vld [vmem:[%s2 + $0x30] sm:$0xf]
          %v665 = vld [vmem:[%s2 + $0x34] sm:$0xf]
          %v666 = vld [vmem:[%s2 + $0x38] sm:$0xf]
          %v667 = vld [vmem:[%s2 + $0x3c] sm:$0xf]
          %v668 = vld [vmem:[%s3] sm:$0x1]
          %v669 = vld [vmem:[%s3 + $0x1] sm:$0x1]
          %v670 = vld [vmem:[%s3 + $0x2] sm:$0x1]
          %v671 = vld [vmem:[%s3 + $0x3] sm:$0x1]
          %v676 = vlaneseq
          %v677 = vshrl.u32 %v676, 7
          %v678 = vsub.s32 0, %v677
          %v679 = vrot.slane %v668, %v678
          %v680 = vlaneseq
          %v681 = vshrl.u32 %v680, 7
          %v682 = vsub.s32 0, %v681
          %v683 = vrot.slane %v669, %v682
          %v684 = vlaneseq
          %v685 = vshrl.u32 %v684, 7
          %v686 = vsub.s32 0, %v685
          %v687 = vrot.slane %v670, %v686
          %v688 = vlaneseq
          %v689 = vshrl.u32 %v688, 7
          %v690 = vsub.s32 0, %v689
          %v691 = vrot.slane %v671, %v690
          %v700 = vunpack.c.l.b16 %v652
          %v701 = vunpack.c.l.b16 %v653
          %v702 = vunpack.c.l.b16 %v654
          %v703 = vunpack.c.l.b16 %v655
          %v704 = vpack.c.b16 %v701, %v700
          %v705 = vpack.c.b16 %v703, %v702
          %vm708 = vcmask 261120
          %v710 = vsel %vm708, %v651, 0
          %712 = vmatprep.subr.bf16.mxu0 0
          %713 = vmatpush1.bf16.msra.mxu0 0
          %714 = vmatprep.subr.bf16.mxu0 0
          %715 = vmatpush1.bf16.msra.mxu0 0
          %716 = vmatprep.subr.bf16.mxu0 0
          %717 = vmatpush1.bf16.msra.mxu0 0
          %718 = vmatprep.subr.bf16.mxu0 0
          %719 = vmatpush1.bf16.msra.mxu0 0
          %720 = vmatprep.subr.bf16.mxu0 0
          %721 = vmatpush1.bf16.msra.mxu0 0
          %722 = vmatprep.subr.bf16.mxu0 0
          %723 = vmatpush1.bf16.msra.mxu0 0
          %724 = vmatprep.subr.bf16.mxu0 0
          %725 = vmatpush1.bf16.msra.mxu0 %v705
          %726 = vmatprep.subr.bf16.mxu0 0
          %727 = vmatpush1.bf16.msra.mxu0 %v704
          %728 = vmatprep.subr.bf16.mxu0 0
          %729 = vmatpush2.bf16.msra.mxu0 0
          %730 = vmatprep.subr.bf16.mxu0 0
          %731 = vmatpush2.bf16.msra.mxu0 0
          %732 = vmatprep.subr.bf16.mxu0 0
          %733 = vmatpush2.bf16.msra.mxu0 0
          %734 = vmatprep.subr.bf16.mxu0 0
          %735 = vmatpush2.bf16.msra.mxu0 0
          %736 = vmatprep.subr.bf16.mxu0 0
          %737 = vmatpush2.bf16.msra.mxu0 0
          %738 = vmatprep.subr.bf16.mxu0 0
          %739 = vmatpush2.bf16.msra.mxu0 0
          %740 = vmatprep.subr.bf16.mxu0 0
          %741 = vmatpush2.bf16.msra.mxu0 0
          %742 = vmatprep.subr.bf16.mxu0 0
          %743 = vmatpush2.bf16.msra.mxu0 0
          %744 = vmatprep.mubr.bf16.mxu0 0
          %745 = vmatmul.mubr.bf16.gmra.mxu0 %v710
          %v746 = vpop.f32.mrf.mxu0
          %v747 = vadd.f32 %v679, %v746
          %v748 = vpop.f32.mrf.mxu0
          %v749 = vpop.f32.mrf.mxu0
          %v750 = vpop.f32.mrf.mxu0
          %751 = vdwg.mxu0
          %v756 = vunpack.c.l.b16 %v656
          %v757 = vunpack.c.l.b16 %v657
          %v758 = vunpack.c.l.b16 %v658
          %v759 = vunpack.c.l.b16 %v659
          %v760 = vpack.c.b16 %v757, %v756
          %v761 = vpack.c.b16 %v759, %v758
          %764 = vmatprep.subr.bf16.mxu0 0
          %765 = vmatpush1.bf16.msra.mxu0 0
          %766 = vmatprep.subr.bf16.mxu0 0
          %767 = vmatpush1.bf16.msra.mxu0 0
          %768 = vmatprep.subr.bf16.mxu0 0
          %769 = vmatpush1.bf16.msra.mxu0 0
          %770 = vmatprep.subr.bf16.mxu0 0
          %771 = vmatpush1.bf16.msra.mxu0 0
          %772 = vmatprep.subr.bf16.mxu0 0
          %773 = vmatpush1.bf16.msra.mxu0 0
          %774 = vmatprep.subr.bf16.mxu0 0
          %775 = vmatpush1.bf16.msra.mxu0 0
          %776 = vmatprep.subr.bf16.mxu0 0
          %777 = vmatpush1.bf16.msra.mxu0 %v761
          %778 = vmatprep.subr.bf16.mxu0 0
          %779 = vmatpush1.bf16.msra.mxu0 %v760
          %780 = vmatprep.subr.bf16.mxu0 0
          %781 = vmatpush2.bf16.msra.mxu0 0
          %782 = vmatprep.subr.bf16.mxu0 0
          %783 = vmatpush2.bf16.msra.mxu0 0
          %784 = vmatprep.subr.bf16.mxu0 0
          %785 = vmatpush2.bf16.msra.mxu0 0
          %786 = vmatprep.subr.bf16.mxu0 0
          %787 = vmatpush2.bf16.msra.mxu0 0
          %788 = vmatprep.subr.bf16.mxu0 0
          %789 = vmatpush2.bf16.msra.mxu0 0
          %790 = vmatprep.subr.bf16.mxu0 0
          %791 = vmatpush2.bf16.msra.mxu0 0
          %792 = vmatprep.subr.bf16.mxu0 0
          %793 = vmatpush2.bf16.msra.mxu0 0
          %794 = vmatprep.subr.bf16.mxu0 0
          %795 = vmatpush2.bf16.msra.mxu0 0
          %796 = vmatprep.mubr.bf16.mxu0 0
          %797 = vmatmul.mubr.bf16.gmra.mxu0 %v710
          %v798 = vpop.f32.mrf.mxu0
          %v799 = vadd.f32 %v683, %v798
          %v800 = vpop.f32.mrf.mxu0
          %v801 = vpop.f32.mrf.mxu0
          %v802 = vpop.f32.mrf.mxu0
          %803 = vdwg.mxu0
          %v808 = vunpack.c.l.b16 %v660
          %v809 = vunpack.c.l.b16 %v661
          %v810 = vunpack.c.l.b16 %v662
          %v811 = vunpack.c.l.b16 %v663
          %v812 = vpack.c.b16 %v809, %v808
          %v813 = vpack.c.b16 %v811, %v810
          %816 = vmatprep.subr.bf16.mxu0 0
          %817 = vmatpush1.bf16.msra.mxu0 0
          %818 = vmatprep.subr.bf16.mxu0 0
          %819 = vmatpush1.bf16.msra.mxu0 0
          %820 = vmatprep.subr.bf16.mxu0 0
          %821 = vmatpush1.bf16.msra.mxu0 0
          %822 = vmatprep.subr.bf16.mxu0 0
          %823 = vmatpush1.bf16.msra.mxu0 0
          %824 = vmatprep.subr.bf16.mxu0 0
          %825 = vmatpush1.bf16.msra.mxu0 0
          %826 = vmatprep.subr.bf16.mxu0 0
          %827 = vmatpush1.bf16.msra.mxu0 0
          %828 = vmatprep.subr.bf16.mxu0 0
          %829 = vmatpush1.bf16.msra.mxu0 %v813
          %830 = vmatprep.subr.bf16.mxu0 0
          %831 = vmatpush1.bf16.msra.mxu0 %v812
          %832 = vmatprep.subr.bf16.mxu0 0
          %833 = vmatpush2.bf16.msra.mxu0 0
          %834 = vmatprep.subr.bf16.mxu0 0
          %835 = vmatpush2.bf16.msra.mxu0 0
          %836 = vmatprep.subr.bf16.mxu0 0
          %837 = vmatpush2.bf16.msra.mxu0 0
          %838 = vmatprep.subr.bf16.mxu0 0
          %839 = vmatpush2.bf16.msra.mxu0 0
          %840 = vmatprep.subr.bf16.mxu0 0
          %841 = vmatpush2.bf16.msra.mxu0 0
          %842 = vmatprep.subr.bf16.mxu0 0
          %843 = vmatpush2.bf16.msra.mxu0 0
          %844 = vmatprep.subr.bf16.mxu0 0
          %845 = vmatpush2.bf16.msra.mxu0 0
          %846 = vmatprep.subr.bf16.mxu0 0
          %847 = vmatpush2.bf16.msra.mxu0 0
          %848 = vmatprep.mubr.bf16.mxu0 0
          %849 = vmatmul.mubr.bf16.gmra.mxu0 %v710
          %v850 = vpop.f32.mrf.mxu0
          %v851 = vadd.f32 %v687, %v850
          %v852 = vpop.f32.mrf.mxu0
          %v853 = vpop.f32.mrf.mxu0
          %v854 = vpop.f32.mrf.mxu0
          %855 = vdwg.mxu0
          %v860 = vunpack.c.l.b16 %v664
          %v861 = vunpack.c.l.b16 %v665
          %v862 = vunpack.c.l.b16 %v666
          %v863 = vunpack.c.l.b16 %v667
          %v864 = vpack.c.b16 %v861, %v860
          %v865 = vpack.c.b16 %v863, %v862
          %868 = vmatprep.subr.bf16.mxu0 0
          %869 = vmatpush1.bf16.msra.mxu0 0
          %870 = vmatprep.subr.bf16.mxu0 0
          %871 = vmatpush1.bf16.msra.mxu0 0
          %872 = vmatprep.subr.bf16.mxu0 0
          %873 = vmatpush1.bf16.msra.mxu0 0
          %874 = vmatprep.subr.bf16.mxu0 0
          %875 = vmatpush1.bf16.msra.mxu0 0
          %876 = vmatprep.subr.bf16.mxu0 0
          %877 = vmatpush1.bf16.msra.mxu0 0
          %878 = vmatprep.subr.bf16.mxu0 0
          %879 = vmatpush1.bf16.msra.mxu0 0
          %880 = vmatprep.subr.bf16.mxu0 0
          %881 = vmatpush1.bf16.msra.mxu0 %v865
          %882 = vmatprep.subr.bf16.mxu0 0
          %883 = vmatpush1.bf16.msra.mxu0 %v864
          %884 = vmatprep.subr.bf16.mxu0 0
          %885 = vmatpush2.bf16.msra.mxu0 0
          %886 = vmatprep.subr.bf16.mxu0 0
          %887 = vmatpush2.bf16.msra.mxu0 0
          %888 = vmatprep.subr.bf16.mxu0 0
          %889 = vmatpush2.bf16.msra.mxu0 0
          %890 = vmatprep.subr.bf16.mxu0 0
          %891 = vmatpush2.bf16.msra.mxu0 0
          %892 = vmatprep.subr.bf16.mxu0 0
          %893 = vmatpush2.bf16.msra.mxu0 0
          %894 = vmatprep.subr.bf16.mxu0 0
          %895 = vmatpush2.bf16.msra.mxu0 0
          %896 = vmatprep.subr.bf16.mxu0 0
          %897 = vmatpush2.bf16.msra.mxu0 0
          %898 = vmatprep.subr.bf16.mxu0 0
          %899 = vmatpush2.bf16.msra.mxu0 0
          %900 = vmatprep.mubr.bf16.mxu0 0
          %901 = vmatmul.mubr.bf16.gmra.mxu0 %v710
          %v902 = vpop.f32.mrf.mxu0
          %v903 = vadd.f32 %v691, %v902
          %v904 = vpop.f32.mrf.mxu0
          %v905 = vpop.f32.mrf.mxu0
          %v906 = vpop.f32.mrf.mxu0
          %907 = vdwg.mxu0
          %v908 = vpack.c.bf16 %v747, %v747
          %v909 = vpack.c.bf16 %v799, %v799
          %v910 = vpack.c.bf16 %v851, %v851
          %v911 = vpack.c.bf16 %v903, %v903
          %vm912 = vcmask 60416
          %913 = vst.msk [vmem:[#allocation2] sm:$0xf] %vm912, %v908
          %914 = vst.msk [vmem:[#allocation2 + $0x4] sm:$0xf] %vm912, %v909
          %915 = vst.msk [vmem:[#allocation2 + $0x8] sm:$0xf] %vm912, %v910
          %916 = vst.msk [vmem:[#allocation2 + $0xc] sm:$0xf] %vm912, %v911
          %vm917 = vcmask 7168
          %918 = vst.msk [vmem:[#allocation3] sm:$0xff] %vm917, -inf
          %919 = vst.msk [vmem:[#allocation3 + $0x8] sm:$0xff] %vm917, -inf
          %920 = vst.msk [vmem:[#allocation3 + $0x10] sm:$0xff] %vm917, -inf
          %921 = vst.msk [vmem:[#allocation3 + $0x18] sm:$0xff] %vm917, -inf
          %922 = vst.msk [vmem:[#allocation4] sm:$0xff] %vm917, 0.0
          %923 = vst.msk [vmem:[#allocation4 + $0x8] sm:$0xff] %vm917, 0.0
          %924 = vst.msk [vmem:[#allocation4 + $0x10] sm:$0xff] %vm917, 0.0
          %925 = vst.msk [vmem:[#allocation4 + $0x18] sm:$0xff] %vm917, 0.0
          %vm926 = vcmask 64512
          %927 = vst.msk [vmem:[#allocation5] sm:$0xff] %vm926, 0.0
          %928 = vst.msk [vmem:[#allocation5 + $0x8] sm:$0xff] %vm926, 0.0
          %929 = vst.msk [vmem:[#allocation5 + $0x10] sm:$0xff] %vm926, 0.0
          %930 = vst.msk [vmem:[#allocation5 + $0x18] sm:$0xff] %vm926, 0.0
        $region96: #{tpu_custom_call.1} parent=91 // pred_fallthru
          _
        %p931 = scmp.eq.s32.totalorder %s38, 0
        // Predicated region
        $region97: #{tpu_custom_call.1} parent=91 // pred_check
          %p932 = pneg %p931
        $region98: #{tpu_custom_call.1} parent=91 // pred_check_branch
          %934 = sbr.rel (%p932) target = $region100
        $region99: #{tpu_custom_call.1} parent=91 // pred_region
          %v935 = vld [vmem:[%s642] sm:$0xff]
          %v936 = vpack.c.bf16 %v935, %v935
          %v937 = vld [vmem:[%s4] sm:$0xf]
          %v938 = vld [vmem:[%s4 + $0x4] sm:$0xf]
          %v939 = vld [vmem:[%s4 + $0x8] sm:$0xf]
          %v940 = vld [vmem:[%s4 + $0xc] sm:$0xf]
          %v941 = vld [vmem:[%s4 + $0x10] sm:$0xf]
          %v942 = vld [vmem:[%s4 + $0x14] sm:$0xf]
          %v943 = vld [vmem:[%s4 + $0x18] sm:$0xf]
          %v944 = vld [vmem:[%s4 + $0x1c] sm:$0xf]
          %v945 = vld [vmem:[%s4 + $0x20] sm:$0xf]
          %v946 = vld [vmem:[%s4 + $0x24] sm:$0xf]
          %v947 = vld [vmem:[%s4 + $0x28] sm:$0xf]
          %v948 = vld [vmem:[%s4 + $0x2c] sm:$0xf]
          %v949 = vld [vmem:[%s4 + $0x30] sm:$0xf]
          %v950 = vld [vmem:[%s4 + $0x34] sm:$0xf]
          %v951 = vld [vmem:[%s4 + $0x38] sm:$0xf]
          %v952 = vld [vmem:[%s4 + $0x3c] sm:$0xf]
          %v953 = vld [vmem:[%s5] sm:$0x1]
          %v954 = vld [vmem:[%s5 + $0x1] sm:$0x1]
          %v955 = vld [vmem:[%s5 + $0x2] sm:$0x1]
          %v956 = vld [vmem:[%s5 + $0x3] sm:$0x1]
          %v961 = vlaneseq
          %v962 = vshrl.u32 %v961, 7
          %v963 = vsub.s32 0, %v962
          %v964 = vrot.slane %v953, %v963
          %v965 = vlaneseq
          %v966 = vshrl.u32 %v965, 7
          %v967 = vsub.s32 0, %v966
          %v968 = vrot.slane %v954, %v967
          %v969 = vlaneseq
          %v970 = vshrl.u32 %v969, 7
          %v971 = vsub.s32 0, %v970
          %v972 = vrot.slane %v955, %v971
          %v973 = vlaneseq
          %v974 = vshrl.u32 %v973, 7
          %v975 = vsub.s32 0, %v974
          %v976 = vrot.slane %v956, %v975
          %v985 = vunpack.c.l.b16 %v937
          %v986 = vunpack.c.l.b16 %v938
          %v987 = vunpack.c.l.b16 %v939
          %v988 = vunpack.c.l.b16 %v940
          %v989 = vpack.c.b16 %v986, %v985
          %v990 = vpack.c.b16 %v988, %v987
          %vm993 = vcmask 261120
          %v995 = vsel %vm993, %v936, 0
          %997 = vmatprep.subr.bf16.mxu0 0
          %998 = vmatpush1.bf16.msra.mxu0 0
          %999 = vmatprep.subr.bf16.mxu0 0
          %1000 = vmatpush1.bf16.msra.mxu0 0
          %1001 = vmatprep.subr.bf16.mxu0 0
          %1002 = vmatpush1.bf16.msra.mxu0 0
          %1003 = vmatprep.subr.bf16.mxu0 0
          %1004 = vmatpush1.bf16.msra.mxu0 0
          %1005 = vmatprep.subr.bf16.mxu0 0
          %1006 = vmatpush1.bf16.msra.mxu0 0
          %1007 = vmatprep.subr.bf16.mxu0 0
          %1008 = vmatpush1.bf16.msra.mxu0 0
          %1009 = vmatprep.subr.bf16.mxu0 0
          %1010 = vmatpush1.bf16.msra.mxu0 %v990
          %1011 = vmatprep.subr.bf16.mxu0 0
          %1012 = vmatpush1.bf16.msra.mxu0 %v989
          %1013 = vmatprep.subr.bf16.mxu0 0
          %1014 = vmatpush2.bf16.msra.mxu0 0
          %1015 = vmatprep.subr.bf16.mxu0 0
          %1016 = vmatpush2.bf16.msra.mxu0 0
          %1017 = vmatprep.subr.bf16.mxu0 0
          %1018 = vmatpush2.bf16.msra.mxu0 0
          %1019 = vmatprep.subr.bf16.mxu0 0
          %1020 = vmatpush2.bf16.msra.mxu0 0
          %1021 = vmatprep.subr.bf16.mxu0 0
          %1022 = vmatpush2.bf16.msra.mxu0 0
          %1023 = vmatprep.subr.bf16.mxu0 0
          %1024 = vmatpush2.bf16.msra.mxu0 0
          %1025 = vmatprep.subr.bf16.mxu0 0
          %1026 = vmatpush2.bf16.msra.mxu0 0
          %1027 = vmatprep.subr.bf16.mxu0 0
          %1028 = vmatpush2.bf16.msra.mxu0 0
          %1029 = vmatprep.mubr.bf16.mxu0 0
          %1030 = vmatmul.mubr.bf16.gmra.mxu0 %v995
          %v1031 = vpop.f32.mrf.mxu0
          %v1032 = vadd.f32 %v964, %v1031
          %v1033 = vpop.f32.mrf.mxu0
          %v1034 = vpop.f32.mrf.mxu0
          %v1035 = vpop.f32.mrf.mxu0
          %1036 = vdwg.mxu0
          %v1041 = vunpack.c.l.b16 %v941
          %v1042 = vunpack.c.l.b16 %v942
          %v1043 = vunpack.c.l.b16 %v943
          %v1044 = vunpack.c.l.b16 %v944
          %v1045 = vpack.c.b16 %v1042, %v1041
          %v1046 = vpack.c.b16 %v1044, %v1043
          %1049 = vmatprep.subr.bf16.mxu0 0
          %1050 = vmatpush1.bf16.msra.mxu0 0
          %1051 = vmatprep.subr.bf16.mxu0 0
          %1052 = vmatpush1.bf16.msra.mxu0 0
          %1053 = vmatprep.subr.bf16.mxu0 0
          %1054 = vmatpush1.bf16.msra.mxu0 0
          %1055 = vmatprep.subr.bf16.mxu0 0
          %1056 = vmatpush1.bf16.msra.mxu0 0
          %1057 = vmatprep.subr.bf16.mxu0 0
          %1058 = vmatpush1.bf16.msra.mxu0 0
          %1059 = vmatprep.subr.bf16.mxu0 0
          %1060 = vmatpush1.bf16.msra.mxu0 0
          %1061 = vmatprep.subr.bf16.mxu0 0
          %1062 = vmatpush1.bf16.msra.mxu0 %v1046
          %1063 = vmatprep.subr.bf16.mxu0 0
          %1064 = vmatpush1.bf16.msra.mxu0 %v1045
          %1065 = vmatprep.subr.bf16.mxu0 0
          %1066 = vmatpush2.bf16.msra.mxu0 0
          %1067 = vmatprep.subr.bf16.mxu0 0
          %1068 = vmatpush2.bf16.msra.mxu0 0
          %1069 = vmatprep.subr.bf16.mxu0 0
          %1070 = vmatpush2.bf16.msra.mxu0 0
          %1071 = vmatprep.subr.bf16.mxu0 0
          %1072 = vmatpush2.bf16.msra.mxu0 0
          %1073 = vmatprep.subr.bf16.mxu0 0
          %1074 = vmatpush2.bf16.msra.mxu0 0
          %1075 = vmatprep.subr.bf16.mxu0 0
          %1076 = vmatpush2.bf16.msra.mxu0 0
          %1077 = vmatprep.subr.bf16.mxu0 0
          %1078 = vmatpush2.bf16.msra.mxu0 0
          %1079 = vmatprep.subr.bf16.mxu0 0
          %1080 = vmatpush2.bf16.msra.mxu0 0
          %1081 = vmatprep.mubr.bf16.mxu0 0
          %1082 = vmatmul.mubr.bf16.gmra.mxu0 %v995
          %v1083 = vpop.f32.mrf.mxu0
          %v1084 = vadd.f32 %v968, %v1083
          %v1085 = vpop.f32.mrf.mxu0
          %v1086 = vpop.f32.mrf.mxu0
          %v1087 = vpop.f32.mrf.mxu0
          %1088 = vdwg.mxu0
          %v1093 = vunpack.c.l.b16 %v945
          %v1094 = vunpack.c.l.b16 %v946
          %v1095 = vunpack.c.l.b16 %v947
          %v1096 = vunpack.c.l.b16 %v948
          %v1097 = vpack.c.b16 %v1094, %v1093
          %v1098 = vpack.c.b16 %v1096, %v1095
          %1101 = vmatprep.subr.bf16.mxu0 0
          %1102 = vmatpush1.bf16.msra.mxu0 0
          %1103 = vmatprep.subr.bf16.mxu0 0
          %1104 = vmatpush1.bf16.msra.mxu0 0
          %1105 = vmatprep.subr.bf16.mxu0 0
          %1106 = vmatpush1.bf16.msra.mxu0 0
          %1107 = vmatprep.subr.bf16.mxu0 0
          %1108 = vmatpush1.bf16.msra.mxu0 0
          %1109 = vmatprep.subr.bf16.mxu0 0
          %1110 = vmatpush1.bf16.msra.mxu0 0
          %1111 = vmatprep.subr.bf16.mxu0 0
          %1112 = vmatpush1.bf16.msra.mxu0 0
          %1113 = vmatprep.subr.bf16.mxu0 0
          %1114 = vmatpush1.bf16.msra.mxu0 %v1098
          %1115 = vmatprep.subr.bf16.mxu0 0
          %1116 = vmatpush1.bf16.msra.mxu0 %v1097
          %1117 = vmatprep.subr.bf16.mxu0 0
          %1118 = vmatpush2.bf16.msra.mxu0 0
          %1119 = vmatprep.subr.bf16.mxu0 0
          %1120 = vmatpush2.bf16.msra.mxu0 0
          %1121 = vmatprep.subr.bf16.mxu0 0
          %1122 = vmatpush2.bf16.msra.mxu0 0
          %1123 = vmatprep.subr.bf16.mxu0 0
          %1124 = vmatpush2.bf16.msra.mxu0 0
          %1125 = vmatprep.subr.bf16.mxu0 0
          %1126 = vmatpush2.bf16.msra.mxu0 0
          %1127 = vmatprep.subr.bf16.mxu0 0
          %1128 = vmatpush2.bf16.msra.mxu0 0
          %1129 = vmatprep.subr.bf16.mxu0 0
          %1130 = vmatpush2.bf16.msra.mxu0 0
          %1131 = vmatprep.subr.bf16.mxu0 0
          %1132 = vmatpush2.bf16.msra.mxu0 0
          %1133 = vmatprep.mubr.bf16.mxu0 0
          %1134 = vmatmul.mubr.bf16.gmra.mxu0 %v995
          %v1135 = vpop.f32.mrf.mxu0
          %v1136 = vadd.f32 %v972, %v1135
          %v1137 = vpop.f32.mrf.mxu0
          %v1138 = vpop.f32.mrf.mxu0
          %v1139 = vpop.f32.mrf.mxu0
          %1140 = vdwg.mxu0
          %v1145 = vunpack.c.l.b16 %v949
          %v1146 = vunpack.c.l.b16 %v950
          %v1147 = vunpack.c.l.b16 %v951
          %v1148 = vunpack.c.l.b16 %v952
          %v1149 = vpack.c.b16 %v1146, %v1145
          %v1150 = vpack.c.b16 %v1148, %v1147
          %1153 = vmatprep.subr.bf16.mxu0 0
          %1154 = vmatpush1.bf16.msra.mxu0 0
          %1155 = vmatprep.subr.bf16.mxu0 0
          %1156 = vmatpush1.bf16.msra.mxu0 0
          %1157 = vmatprep.subr.bf16.mxu0 0
          %1158 = vmatpush1.bf16.msra.mxu0 0
          %1159 = vmatprep.subr.bf16.mxu0 0
          %1160 = vmatpush1.bf16.msra.mxu0 0
          %1161 = vmatprep.subr.bf16.mxu0 0
          %1162 = vmatpush1.bf16.msra.mxu0 0
          %1163 = vmatprep.subr.bf16.mxu0 0
          %1164 = vmatpush1.bf16.msra.mxu0 0
          %1165 = vmatprep.subr.bf16.mxu0 0
          %1166 = vmatpush1.bf16.msra.mxu0 %v1150
          %1167 = vmatprep.subr.bf16.mxu0 0
          %1168 = vmatpush1.bf16.msra.mxu0 %v1149
          %1169 = vmatprep.subr.bf16.mxu0 0
          %1170 = vmatpush2.bf16.msra.mxu0 0
          %1171 = vmatprep.subr.bf16.mxu0 0
          %1172 = vmatpush2.bf16.msra.mxu0 0
          %1173 = vmatprep.subr.bf16.mxu0 0
          %1174 = vmatpush2.bf16.msra.mxu0 0
          %1175 = vmatprep.subr.bf16.mxu0 0
          %1176 = vmatpush2.bf16.msra.mxu0 0
          %1177 = vmatprep.subr.bf16.mxu0 0
          %1178 = vmatpush2.bf16.msra.mxu0 0
          %1179 = vmatprep.subr.bf16.mxu0 0
          %1180 = vmatpush2.bf16.msra.mxu0 0
          %1181 = vmatprep.subr.bf16.mxu0 0
          %1182 = vmatpush2.bf16.msra.mxu0 0
          %1183 = vmatprep.subr.bf16.mxu0 0
          %1184 = vmatpush2.bf16.msra.mxu0 0
          %1185 = vmatprep.mubr.bf16.mxu0 0
          %1186 = vmatmul.mubr.bf16.gmra.mxu0 %v995
          %v1187 = vpop.f32.mrf.mxu0
          %v1188 = vadd.f32 %v976, %v1187
          %v1189 = vpop.f32.mrf.mxu0
          %v1190 = vpop.f32.mrf.mxu0
          %v1191 = vpop.f32.mrf.mxu0
          %1192 = vdwg.mxu0
          %v1193 = vld [vmem:[%s6] sm:$0xf]
          %v1194 = vld [vmem:[%s6 + $0x4] sm:$0xf]
          %v1195 = vld [vmem:[%s6 + $0x8] sm:$0xf]
          %v1196 = vld [vmem:[%s6 + $0xc] sm:$0xf]
          %v1197 = vld [vmem:[%s6 + $0x10] sm:$0xf]
          %v1198 = vld [vmem:[%s6 + $0x14] sm:$0xf]
          %v1199 = vld [vmem:[%s6 + $0x18] sm:$0xf]
          %v1200 = vld [vmem:[%s6 + $0x1c] sm:$0xf]
          %v1201 = vld [vmem:[%s6 + $0x20] sm:$0xf]
          %v1202 = vld [vmem:[%s6 + $0x24] sm:$0xf]
          %v1203 = vld [vmem:[%s6 + $0x28] sm:$0xf]
          %v1204 = vld [vmem:[%s6 + $0x2c] sm:$0xf]
          %v1205 = vld [vmem:[%s6 + $0x30] sm:$0xf]
          %v1206 = vld [vmem:[%s6 + $0x34] sm:$0xf]
          %v1207 = vld [vmem:[%s6 + $0x38] sm:$0xf]
          %v1208 = vld [vmem:[%s6 + $0x3c] sm:$0xf]
          %v1209 = vld [vmem:[%s7] sm:$0x1]
          %v1210 = vld [vmem:[%s7 + $0x1] sm:$0x1]
          %v1211 = vld [vmem:[%s7 + $0x2] sm:$0x1]
          %v1212 = vld [vmem:[%s7 + $0x3] sm:$0x1]
          %v1217 = vlaneseq
          %v1218 = vshrl.u32 %v1217, 7
          %v1219 = vsub.s32 0, %v1218
          %v1220 = vrot.slane %v1209, %v1219
          %v1221 = vlaneseq
          %v1222 = vshrl.u32 %v1221, 7
          %v1223 = vsub.s32 0, %v1222
          %v1224 = vrot.slane %v1210, %v1223
          %v1225 = vlaneseq
          %v1226 = vshrl.u32 %v1225, 7
          %v1227 = vsub.s32 0, %v1226
          %v1228 = vrot.slane %v1211, %v1227
          %v1229 = vlaneseq
          %v1230 = vshrl.u32 %v1229, 7
          %v1231 = vsub.s32 0, %v1230
          %v1232 = vrot.slane %v1212, %v1231
          %v1241 = vunpack.c.l.b16 %v1193
          %v1242 = vunpack.c.l.b16 %v1194
          %v1243 = vunpack.c.l.b16 %v1195
          %v1244 = vunpack.c.l.b16 %v1196
          %v1245 = vpack.c.b16 %v1242, %v1241
          %v1246 = vpack.c.b16 %v1244, %v1243
          %1249 = vmatprep.subr.bf16.mxu0 0
          %1250 = vmatpush1.bf16.msra.mxu0 0
          %1251 = vmatprep.subr.bf16.mxu0 0
          %1252 = vmatpush1.bf16.msra.mxu0 0
          %1253 = vmatprep.subr.bf16.mxu0 0
          %1254 = vmatpush1.bf16.msra.mxu0 0
          %1255 = vmatprep.subr.bf16.mxu0 0
          %1256 = vmatpush1.bf16.msra.mxu0 0
          %1257 = vmatprep.subr.bf16.mxu0 0
          %1258 = vmatpush1.bf16.msra.mxu0 0
          %1259 = vmatprep.subr.bf16.mxu0 0
          %1260 = vmatpush1.bf16.msra.mxu0 0
          %1261 = vmatprep.subr.bf16.mxu0 0
          %1262 = vmatpush1.bf16.msra.mxu0 %v1246
          %1263 = vmatprep.subr.bf16.mxu0 0
          %1264 = vmatpush1.bf16.msra.mxu0 %v1245
          %1265 = vmatprep.subr.bf16.mxu0 0
          %1266 = vmatpush2.bf16.msra.mxu0 0
          %1267 = vmatprep.subr.bf16.mxu0 0
          %1268 = vmatpush2.bf16.msra.mxu0 0
          %1269 = vmatprep.subr.bf16.mxu0 0
          %1270 = vmatpush2.bf16.msra.mxu0 0
          %1271 = vmatprep.subr.bf16.mxu0 0
          %1272 = vmatpush2.bf16.msra.mxu0 0
          %1273 = vmatprep.subr.bf16.mxu0 0
          %1274 = vmatpush2.bf16.msra.mxu0 0
          %1275 = vmatprep.subr.bf16.mxu0 0
          %1276 = vmatpush2.bf16.msra.mxu0 0
          %1277 = vmatprep.subr.bf16.mxu0 0
          %1278 = vmatpush2.bf16.msra.mxu0 0
          %1279 = vmatprep.subr.bf16.mxu0 0
          %1280 = vmatpush2.bf16.msra.mxu0 0
          %1281 = vmatprep.mubr.bf16.mxu0 0
          %1282 = vmatmul.mubr.bf16.gmra.mxu0 %v995
          %v1283 = vpop.f32.mrf.mxu0
          %v1284 = vadd.f32 %v1220, %v1283
          %v1285 = vpop.f32.mrf.mxu0
          %v1286 = vpop.f32.mrf.mxu0
          %v1287 = vpop.f32.mrf.mxu0
          %1288 = vdwg.mxu0
          %v1293 = vunpack.c.l.b16 %v1197
          %v1294 = vunpack.c.l.b16 %v1198
          %v1295 = vunpack.c.l.b16 %v1199
          %v1296 = vunpack.c.l.b16 %v1200
          %v1297 = vpack.c.b16 %v1294, %v1293
          %v1298 = vpack.c.b16 %v1296, %v1295
          %1301 = vmatprep.subr.bf16.mxu0 0
          %1302 = vmatpush1.bf16.msra.mxu0 0
          %1303 = vmatprep.subr.bf16.mxu0 0
          %1304 = vmatpush1.bf16.msra.mxu0 0
          %1305 = vmatprep.subr.bf16.mxu0 0
          %1306 = vmatpush1.bf16.msra.mxu0 0
          %1307 = vmatprep.subr.bf16.mxu0 0
          %1308 = vmatpush1.bf16.msra.mxu0 0
          %1309 = vmatprep.subr.bf16.mxu0 0
          %1310 = vmatpush1.bf16.msra.mxu0 0
          %1311 = vmatprep.subr.bf16.mxu0 0
          %1312 = vmatpush1.bf16.msra.mxu0 0
          %1313 = vmatprep.subr.bf16.mxu0 0
          %1314 = vmatpush1.bf16.msra.mxu0 %v1298
          %1315 = vmatprep.subr.bf16.mxu0 0
          %1316 = vmatpush1.bf16.msra.mxu0 %v1297
          %1317 = vmatprep.subr.bf16.mxu0 0
          %1318 = vmatpush2.bf16.msra.mxu0 0
          %1319 = vmatprep.subr.bf16.mxu0 0
          %1320 = vmatpush2.bf16.msra.mxu0 0
          %1321 = vmatprep.subr.bf16.mxu0 0
          %1322 = vmatpush2.bf16.msra.mxu0 0
          %1323 = vmatprep.subr.bf16.mxu0 0
          %1324 = vmatpush2.bf16.msra.mxu0 0
          %1325 = vmatprep.subr.bf16.mxu0 0
          %1326 = vmatpush2.bf16.msra.mxu0 0
          %1327 = vmatprep.subr.bf16.mxu0 0
          %1328 = vmatpush2.bf16.msra.mxu0 0
          %1329 = vmatprep.subr.bf16.mxu0 0
          %1330 = vmatpush2.bf16.msra.mxu0 0
          %1331 = vmatprep.subr.bf16.mxu0 0
          %1332 = vmatpush2.bf16.msra.mxu0 0
          %1333 = vmatprep.mubr.bf16.mxu0 0
          %1334 = vmatmul.mubr.bf16.gmra.mxu0 %v995
          %v1335 = vpop.f32.mrf.mxu0
          %v1336 = vadd.f32 %v1224, %v1335
          %v1337 = vpop.f32.mrf.mxu0
          %v1338 = vpop.f32.mrf.mxu0
          %v1339 = vpop.f32.mrf.mxu0
          %1340 = vdwg.mxu0
          %v1345 = vunpack.c.l.b16 %v1201
          %v1346 = vunpack.c.l.b16 %v1202
          %v1347 = vunpack.c.l.b16 %v1203
          %v1348 = vunpack.c.l.b16 %v1204
          %v1349 = vpack.c.b16 %v1346, %v1345
          %v1350 = vpack.c.b16 %v1348, %v1347
          %1353 = vmatprep.subr.bf16.mxu0 0
          %1354 = vmatpush1.bf16.msra.mxu0 0
          %1355 = vmatprep.subr.bf16.mxu0 0
          %1356 = vmatpush1.bf16.msra.mxu0 0
          %1357 = vmatprep.subr.bf16.mxu0 0
          %1358 = vmatpush1.bf16.msra.mxu0 0
          %1359 = vmatprep.subr.bf16.mxu0 0
          %1360 = vmatpush1.bf16.msra.mxu0 0
          %1361 = vmatprep.subr.bf16.mxu0 0
          %1362 = vmatpush1.bf16.msra.mxu0 0
          %1363 = vmatprep.subr.bf16.mxu0 0
          %1364 = vmatpush1.bf16.msra.mxu0 0
          %1365 = vmatprep.subr.bf16.mxu0 0
          %1366 = vmatpush1.bf16.msra.mxu0 %v1350
          %1367 = vmatprep.subr.bf16.mxu0 0
          %1368 = vmatpush1.bf16.msra.mxu0 %v1349
          %1369 = vmatprep.subr.bf16.mxu0 0
          %1370 = vmatpush2.bf16.msra.mxu0 0
          %1371 = vmatprep.subr.bf16.mxu0 0
          %1372 = vmatpush2.bf16.msra.mxu0 0
          %1373 = vmatprep.subr.bf16.mxu0 0
          %1374 = vmatpush2.bf16.msra.mxu0 0
          %1375 = vmatprep.subr.bf16.mxu0 0
          %1376 = vmatpush2.bf16.msra.mxu0 0
          %1377 = vmatprep.subr.bf16.mxu0 0
          %1378 = vmatpush2.bf16.msra.mxu0 0
          %1379 = vmatprep.subr.bf16.mxu0 0
          %1380 = vmatpush2.bf16.msra.mxu0 0
          %1381 = vmatprep.subr.bf16.mxu0 0
          %1382 = vmatpush2.bf16.msra.mxu0 0
          %1383 = vmatprep.subr.bf16.mxu0 0
          %1384 = vmatpush2.bf16.msra.mxu0 0
          %1385 = vmatprep.mubr.bf16.mxu0 0
          %1386 = vmatmul.mubr.bf16.gmra.mxu0 %v995
          %v1387 = vpop.f32.mrf.mxu0
          %v1388 = vadd.f32 %v1228, %v1387
          %v1389 = vpop.f32.mrf.mxu0
          %v1390 = vpop.f32.mrf.mxu0
          %v1391 = vpop.f32.mrf.mxu0
          %1392 = vdwg.mxu0
          %v1397 = vunpack.c.l.b16 %v1205
          %v1398 = vunpack.c.l.b16 %v1206
          %v1399 = vunpack.c.l.b16 %v1207
          %v1400 = vunpack.c.l.b16 %v1208
          %v1401 = vpack.c.b16 %v1398, %v1397
          %v1402 = vpack.c.b16 %v1400, %v1399
          %1405 = vmatprep.subr.bf16.mxu0 0
          %1406 = vmatpush1.bf16.msra.mxu0 0
          %1407 = vmatprep.subr.bf16.mxu0 0
          %1408 = vmatpush1.bf16.msra.mxu0 0
          %1409 = vmatprep.subr.bf16.mxu0 0
          %1410 = vmatpush1.bf16.msra.mxu0 0
          %1411 = vmatprep.subr.bf16.mxu0 0
          %1412 = vmatpush1.bf16.msra.mxu0 0
          %1413 = vmatprep.subr.bf16.mxu0 0
          %1414 = vmatpush1.bf16.msra.mxu0 0
          %1415 = vmatprep.subr.bf16.mxu0 0
          %1416 = vmatpush1.bf16.msra.mxu0 0
          %1417 = vmatprep.subr.bf16.mxu0 0
          %1418 = vmatpush1.bf16.msra.mxu0 %v1402
          %1419 = vmatprep.subr.bf16.mxu0 0
          %1420 = vmatpush1.bf16.msra.mxu0 %v1401
          %1421 = vmatprep.subr.bf16.mxu0 0
          %1422 = vmatpush2.bf16.msra.mxu0 0
          %1423 = vmatprep.subr.bf16.mxu0 0
          %1424 = vmatpush2.bf16.msra.mxu0 0
          %1425 = vmatprep.subr.bf16.mxu0 0
          %1426 = vmatpush2.bf16.msra.mxu0 0
          %1427 = vmatprep.subr.bf16.mxu0 0
          %1428 = vmatpush2.bf16.msra.mxu0 0
          %1429 = vmatprep.subr.bf16.mxu0 0
          %1430 = vmatpush2.bf16.msra.mxu0 0
          %1431 = vmatprep.subr.bf16.mxu0 0
          %1432 = vmatpush2.bf16.msra.mxu0 0
          %1433 = vmatprep.subr.bf16.mxu0 0
          %1434 = vmatpush2.bf16.msra.mxu0 0
          %1435 = vmatprep.subr.bf16.mxu0 0
          %1436 = vmatpush2.bf16.msra.mxu0 0
          %1437 = vmatprep.mubr.bf16.mxu0 0
          %1438 = vmatmul.mubr.bf16.gmra.mxu0 %v995
          %v1439 = vpop.f32.mrf.mxu0
          %v1440 = vadd.f32 %v1232, %v1439
          %v1441 = vpop.f32.mrf.mxu0
          %v1442 = vpop.f32.mrf.mxu0
          %v1443 = vpop.f32.mrf.mxu0
          %1444 = vdwg.mxu0
          %v1445 = vpack.c.bf16 %v1032, %v1032
          %v1446 = vpack.c.bf16 %v1084, %v1084
          %v1447 = vpack.c.bf16 %v1136, %v1136
          %v1448 = vpack.c.bf16 %v1188, %v1188
          %s1449 = smul.u32 %s39, 4
          %s1450 = smul.addr %s1449, 4
          %s1451 = scalar_lea.vmem [#allocation6], %s1450
          %vm1452 = vcmask 60416
          %1453 = vst.msk [vmem:[%s1451] sm:$0xf] %vm1452, %v1445
          %1454 = vst.msk [vmem:[%s1451 + $0x4] sm:$0xf] %vm1452, %v1446
          %1455 = vst.msk [vmem:[%s1451 + $0x8] sm:$0xf] %vm1452, %v1447
          %1456 = vst.msk [vmem:[%s1451 + $0xc] sm:$0xf] %vm1452, %v1448
          %v1457 = vpack.c.bf16 %v1284, %v1284
          %v1458 = vpack.c.bf16 %v1336, %v1336
          %v1459 = vpack.c.bf16 %v1388, %v1388
          %v1460 = vpack.c.bf16 %v1440, %v1440
          %s1461 = smul.addr %s1449, 4
          %s1462 = scalar_lea.vmem [#allocation7], %s1461
          %1463 = vst.msk [vmem:[%s1462] sm:$0xf] %vm1452, %v1457
          %1464 = vst.msk [vmem:[%s1462 + $0x4] sm:$0xf] %vm1452, %v1458
          %1465 = vst.msk [vmem:[%s1462 + $0x8] sm:$0xf] %vm1452, %v1459
          %1466 = vst.msk [vmem:[%s1462 + $0xc] sm:$0xf] %vm1452, %v1460
        $region100: #{tpu_custom_call.1} parent=91 // pred_fallthru
          _
        %s1467 = smul.u32 %s39, 4
        %s1468 = smul.addr %s1467, 4
        %s1469 = scalar_lea.vmem [#allocation6], %s1468
        %v1470 = vld [vmem:[%s1469] sm:$0xf]
        %v1471 = vld [vmem:[%s1469 + $0x4] sm:$0xf]
        %v1472 = vld [vmem:[%s1469 + $0x8] sm:$0xf]
        %v1473 = vld [vmem:[%s1469 + $0xc] sm:$0xf]
        %s1474 = smul.addr %s1467, 4
        %s1475 = scalar_lea.vmem [#allocation7], %s1474
        %v1476 = vld [vmem:[%s1475] sm:$0xf]
        %v1477 = vld [vmem:[%s1475 + $0x4] sm:$0xf]
        %v1478 = vld [vmem:[%s1475 + $0x8] sm:$0xf]
        %v1479 = vld [vmem:[%s1475 + $0xc] sm:$0xf]
        %v1480 = vld [vmem:[#allocation2] sm:$0xf]
        %v1481 = vld [vmem:[#allocation2 + $0x4] sm:$0xf]
        %v1482 = vld [vmem:[#allocation2 + $0x8] sm:$0xf]
        %v1483 = vld [vmem:[#allocation2 + $0xc] sm:$0xf]
        %vm1484 = vcmask 64512
        %v1486 = vsel %vm1484, %v1480, 0
        %v1489 = vsel %vm1484, %v1470, 0
        %1491 = vmatprep.subr.bf16.mxu0 0
        %1492 = vmatpush1.bf16.xpose.msra.mxu0 0
        %1493 = vmatprep.subr.bf16.mxu0 0
        %1494 = vmatpush1.bf16.xpose.msra.mxu0 0
        %1495 = vmatprep.subr.bf16.mxu0 0
        %1496 = vmatpush1.bf16.xpose.msra.mxu0 0
        %1497 = vmatprep.subr.bf16.mxu0 0
        %1498 = vmatpush1.bf16.xpose.msra.mxu0 0
        %1499 = vmatprep.subr.bf16.mxu0 0
        %1500 = vmatpush1.bf16.xpose.msra.mxu0 0
        %1501 = vmatprep.subr.bf16.mxu0 0
        %1502 = vmatpush1.bf16.xpose.msra.mxu0 0
        %1503 = vmatprep.subr.bf16.mxu0 0
        %1504 = vmatpush1.bf16.xpose.msra.mxu0 0
        %1505 = vmatprep.subr.bf16.mxu0 0
        %1506 = vmatpush1.bf16.xpose.msra.mxu0 %v1489
        %1507 = vmatprep.subr.bf16.mxu0 0
        %1508 = vmatpush2.bf16.xpose.msra.mxu0 0
        %1509 = vmatprep.subr.bf16.mxu0 0
        %1510 = vmatpush2.bf16.xpose.msra.mxu0 0
        %1511 = vmatprep.subr.bf16.mxu0 0
        %1512 = vmatpush2.bf16.xpose.msra.mxu0 0
        %1513 = vmatprep.subr.bf16.mxu0 0
        %1514 = vmatpush2.bf16.xpose.msra.mxu0 0
        %1515 = vmatprep.subr.bf16.mxu0 0
        %1516 = vmatpush2.bf16.xpose.msra.mxu0 0
        %1517 = vmatprep.subr.bf16.mxu0 0
        %1518 = vmatpush2.bf16.xpose.msra.mxu0 0
        %1519 = vmatprep.subr.bf16.mxu0 0
        %1520 = vmatpush2.bf16.xpose.msra.mxu0 0
        %1521 = vmatprep.subr.bf16.mxu0 0
        %1522 = vmatpush2.bf16.xpose.msra.mxu0 0
        %1523 = vmatprep.mubr.bf16.mxu0 0
        %1524 = vmatmul.mubr.bf16.gmra.mxu0 %v1486
        %v1525 = vpop.f32.mrf.mxu0
        %v1526 = vadd.f32 0.0, %v1525
        %v1527 = vpop.f32.mrf.mxu0
        %v1528 = vpop.f32.mrf.mxu0
        %v1529 = vpop.f32.mrf.mxu0
        %1530 = vdwg.mxu0
        %v1532 = vsel %vm1484, %v1481, 0
        %v1535 = vsel %vm1484, %v1471, 0
        %1537 = vmatprep.subr.bf16.mxu0 0
        %1538 = vmatpush1.bf16.xpose.msra.mxu0 0
        %1539 = vmatprep.subr.bf16.mxu0 0
        %1540 = vmatpush1.bf16.xpose.msra.mxu0 0
        %1541 = vmatprep.subr.bf16.mxu0 0
        %1542 = vmatpush1.bf16.xpose.msra.mxu0 0
        %1543 = vmatprep.subr.bf16.mxu0 0
        %1544 = vmatpush1.bf16.xpose.msra.mxu0 0
        %1545 = vmatprep.subr.bf16.mxu0 0
        %1546 = vmatpush1.bf16.xpose.msra.mxu0 0
        %1547 = vmatprep.subr.bf16.mxu0 0
        %1548 = vmatpush1.bf16.xpose.msra.mxu0 0
        %1549 = vmatprep.subr.bf16.mxu0 0
        %1550 = vmatpush1.bf16.xpose.msra.mxu0 0
        %1551 = vmatprep.subr.bf16.mxu0 0
        %1552 = vmatpush1.bf16.xpose.msra.mxu0 %v1535
        %1553 = vmatprep.subr.bf16.mxu0 0
        %1554 = vmatpush2.bf16.xpose.msra.mxu0 0
        %1555 = vmatprep.subr.bf16.mxu0 0
        %1556 = vmatpush2.bf16.xpose.msra.mxu0 0
        %1557 = vmatprep.subr.bf16.mxu0 0
        %1558 = vmatpush2.bf16.xpose.msra.mxu0 0
        %1559 = vmatprep.subr.bf16.mxu0 0
        %1560 = vmatpush2.bf16.xpose.msra.mxu0 0
        %1561 = vmatprep.subr.bf16.mxu0 0
        %1562 = vmatpush2.bf16.xpose.msra.mxu0 0
        %1563 = vmatprep.subr.bf16.mxu0 0
        %1564 = vmatpush2.bf16.xpose.msra.mxu0 0
        %1565 = vmatprep.subr.bf16.mxu0 0
        %1566 = vmatpush2.bf16.xpose.msra.mxu0 0
        %1567 = vmatprep.subr.bf16.mxu0 0
        %1568 = vmatpush2.bf16.xpose.msra.mxu0 0
        %1569 = vmatprep.mubr.bf16.mxu0 0
        %1570 = vmatmul.mubr.bf16.gmra.mxu0 %v1532
        %v1571 = vpop.f32.mrf.mxu0
        %v1572 = vadd.f32 0.0, %v1571
        %v1573 = vpop.f32.mrf.mxu0
        %v1574 = vpop.f32.mrf.mxu0
        %v1575 = vpop.f32.mrf.mxu0
        %1576 = vdwg.mxu0
        %v1578 = vsel %vm1484, %v1482, 0
        %v1581 = vsel %vm1484, %v1472, 0
        %1583 = vmatprep.subr.bf16.mxu0 0
        %1584 = vmatpush1.bf16.xpose.msra.mxu0 0
        %1585 = vmatprep.subr.bf16.mxu0 0
        %1586 = vmatpush1.bf16.xpose.msra.mxu0 0
        %1587 = vmatprep.subr.bf16.mxu0 0
        %1588 = vmatpush1.bf16.xpose.msra.mxu0 0
        %1589 = vmatprep.subr.bf16.mxu0 0
        %1590 = vmatpush1.bf16.xpose.msra.mxu0 0
        %1591 = vmatprep.subr.bf16.mxu0 0
        %1592 = vmatpush1.bf16.xpose.msra.mxu0 0
        %1593 = vmatprep.subr.bf16.mxu0 0
        %1594 = vmatpush1.bf16.xpose.msra.mxu0 0
        %1595 = vmatprep.subr.bf16.mxu0 0
        %1596 = vmatpush1.bf16.xpose.msra.mxu0 0
        %1597 = vmatprep.subr.bf16.mxu0 0
        %1598 = vmatpush1.bf16.xpose.msra.mxu0 %v1581
        %1599 = vmatprep.subr.bf16.mxu0 0
        %1600 = vmatpush2.bf16.xpose.msra.mxu0 0
        %1601 = vmatprep.subr.bf16.mxu0 0
        %1602 = vmatpush2.bf16.xpose.msra.mxu0 0
        %1603 = vmatprep.subr.bf16.mxu0 0
        %1604 = vmatpush2.bf16.xpose.msra.mxu0 0
        %1605 = vmatprep.subr.bf16.mxu0 0
        %1606 = vmatpush2.bf16.xpose.msra.mxu0 0
        %1607 = vmatprep.subr.bf16.mxu0 0
        %1608 = vmatpush2.bf16.xpose.msra.mxu0 0
        %1609 = vmatprep.subr.bf16.mxu0 0
        %1610 = vmatpush2.bf16.xpose.msra.mxu0 0
        %1611 = vmatprep.subr.bf16.mxu0 0
        %1612 = vmatpush2.bf16.xpose.msra.mxu0 0
        %1613 = vmatprep.subr.bf16.mxu0 0
        %1614 = vmatpush2.bf16.xpose.msra.mxu0 0
        %1615 = vmatprep.mubr.bf16.mxu0 0
        %1616 = vmatmul.mubr.bf16.gmra.mxu0 %v1578
        %v1617 = vpop.f32.mrf.mxu0
        %v1618 = vadd.f32 0.0, %v1617
        %v1619 = vpop.f32.mrf.mxu0
        %v1620 = vpop.f32.mrf.mxu0
        %v1621 = vpop.f32.mrf.mxu0
        %1622 = vdwg.mxu0
        %v1624 = vsel %vm1484, %v1483, 0
        %v1627 = vsel %vm1484, %v1473, 0
        %1629 = vmatprep.subr.bf16.mxu0 0
        %1630 = vmatpush1.bf16.xpose.msra.mxu0 0
        %1631 = vmatprep.subr.bf16.mxu0 0
        %1632 = vmatpush1.bf16.xpose.msra.mxu0 0
        %1633 = vmatprep.subr.bf16.mxu0 0
        %1634 = vmatpush1.bf16.xpose.msra.mxu0 0
        %1635 = vmatprep.subr.bf16.mxu0 0
        %1636 = vmatpush1.bf16.xpose.msra.mxu0 0
        %1637 = vmatprep.subr.bf16.mxu0 0
        %1638 = vmatpush1.bf16.xpose.msra.mxu0 0
        %1639 = vmatprep.subr.bf16.mxu0 0
        %1640 = vmatpush1.bf16.xpose.msra.mxu0 0
        %1641 = vmatprep.subr.bf16.mxu0 0
        %1642 = vmatpush1.bf16.xpose.msra.mxu0 0
        %1643 = vmatprep.subr.bf16.mxu0 0
        %1644 = vmatpush1.bf16.xpose.msra.mxu0 %v1627
        %1645 = vmatprep.subr.bf16.mxu0 0
        %1646 = vmatpush2.bf16.xpose.msra.mxu0 0
        %1647 = vmatprep.subr.bf16.mxu0 0
        %1648 = vmatpush2.bf16.xpose.msra.mxu0 0
        %1649 = vmatprep.subr.bf16.mxu0 0
        %1650 = vmatpush2.bf16.xpose.msra.mxu0 0
        %1651 = vmatprep.subr.bf16.mxu0 0
        %1652 = vmatpush2.bf16.xpose.msra.mxu0 0
        %1653 = vmatprep.subr.bf16.mxu0 0
        %1654 = vmatpush2.bf16.xpose.msra.mxu0 0
        %1655 = vmatprep.subr.bf16.mxu0 0
        %1656 = vmatpush2.bf16.xpose.msra.mxu0 0
        %1657 = vmatprep.subr.bf16.mxu0 0
        %1658 = vmatpush2.bf16.xpose.msra.mxu0 0
        %1659 = vmatprep.subr.bf16.mxu0 0
        %1660 = vmatpush2.bf16.xpose.msra.mxu0 0
        %1661 = vmatprep.mubr.bf16.mxu0 0
        %1662 = vmatmul.mubr.bf16.gmra.mxu0 %v1624
        %v1663 = vpop.f32.mrf.mxu0
        %v1664 = vadd.f32 0.0, %v1663
        %v1665 = vpop.f32.mrf.mxu0
        %v1666 = vpop.f32.mrf.mxu0
        %v1667 = vpop.f32.mrf.mxu0
        %1668 = vdwg.mxu0
        %v1669 = vld [vmem:[#allocation3] sm:$0xff]
        %v1670 = vld [vmem:[#allocation3 + $0x8] sm:$0xff]
        %v1671 = vld [vmem:[#allocation3 + $0x10] sm:$0xff]
        %v1672 = vld [vmem:[#allocation3 + $0x18] sm:$0xff]
        %v1673 = vsel %vm1484, %v1526, -inf
        %1674 = vmax.xlane.f32.xlu0 %v1673
        %v1675 = vpop.xlane.xlu0 %1674
        %v1676 = vsel %vm1484, %v1572, -inf
        %1677 = vmax.xlane.f32.xlu0 %v1676
        %v1678 = vpop.xlane.xlu0 %1677
        %v1679 = vsel %vm1484, %v1618, -inf
        %1680 = vmax.xlane.f32.xlu0 %v1679
        %v1681 = vpop.xlane.xlu0 %1680
        %v1682 = vsel %vm1484, %v1664, -inf
        %1683 = vmax.xlane.f32.xlu0 %v1682
        %v1684 = vpop.xlane.xlu0 %1683
        %v1685 = vmax.f32 %v1669, %v1675
        %v1686 = vmax.f32 %v1670, %v1678
        %v1687 = vmax.f32 %v1671, %v1681
        %v1688 = vmax.f32 %v1672, %v1684
        %v1689 = vsub.f32 %v1669, %v1685
        %v1690 = vsub.f32 %v1670, %v1686
        %v1691 = vsub.f32 %v1671, %v1687
        %v1692 = vsub.f32 %v1672, %v1688
        %v1693 = vmul.f32 %v1689, 1.442695
        %v1694 = vpow.pop %v1693
        %v1695 = vmul.f32 %v1690, 1.442695
        %v1696 = vpow.pop %v1695
        %v1697 = vmul.f32 %v1691, 1.442695
        %v1698 = vpow.pop %v1697
        %v1699 = vmul.f32 %v1692, 1.442695
        %v1700 = vpow.pop %v1699
        %1702 = vset.pattern.permute.xlu0 0
        %1703 = vperm.xlu0 %1702, %v1685
        %v1704 = vpop.permute.xlu0 %1703
        %1707 = vset.pattern.permute.xlu0 0
        %1708 = vperm.xlu0 %1707, %v1686
        %v1709 = vpop.permute.xlu0 %1708
        %1712 = vset.pattern.permute.xlu0 0
        %1713 = vperm.xlu0 %1712, %v1687
        %v1714 = vpop.permute.xlu0 %1713
        %1717 = vset.pattern.permute.xlu0 0
        %1718 = vperm.xlu0 %1717, %v1688
        %v1719 = vpop.permute.xlu0 %1718
        %v1721 = vsub.f32 %v1526, %v1704
        %v1722 = vsub.f32 %v1572, %v1709
        %v1723 = vsub.f32 %v1618, %v1714
        %v1724 = vsub.f32 %v1664, %v1719
        %v1725 = vmul.f32 %v1721, 1.442695
        %v1726 = vpow.pop %v1725
        %v1727 = vmul.f32 %v1722, 1.442695
        %v1728 = vpow.pop %v1727
        %v1729 = vmul.f32 %v1723, 1.442695
        %v1730 = vpow.pop %v1729
        %v1731 = vmul.f32 %v1724, 1.442695
        %v1732 = vpow.pop %v1731
        %v1733 = vld [vmem:[#allocation4] sm:$0xff]
        %v1734 = vld [vmem:[#allocation4 + $0x8] sm:$0xff]
        %v1735 = vld [vmem:[#allocation4 + $0x10] sm:$0xff]
        %v1736 = vld [vmem:[#allocation4 + $0x18] sm:$0xff]
        %v1737 = vmul.f32 %v1694, %v1733
        %v1738 = vmul.f32 %v1696, %v1734
        %v1739 = vmul.f32 %v1698, %v1735
        %v1740 = vmul.f32 %v1700, %v1736
        %v1741 = vsel %vm1484, %v1726, 0.0
        %1742 = vadd.xlane.f32.xlu0 %v1741
        %v1743 = vpop.xlane.xlu0 %1742
        %v1744 = vsel %vm1484, %v1728, 0.0
        %1745 = vadd.xlane.f32.xlu0 %v1744
        %v1746 = vpop.xlane.xlu0 %1745
        %v1747 = vsel %vm1484, %v1730, 0.0
        %1748 = vadd.xlane.f32.xlu0 %v1747
        %v1749 = vpop.xlane.xlu0 %1748
        %v1750 = vsel %vm1484, %v1732, 0.0
        %1751 = vadd.xlane.f32.xlu0 %v1750
        %v1752 = vpop.xlane.xlu0 %1751
        %v1753 = vadd.f32 %v1737, %v1743
        %v1754 = vadd.f32 %v1738, %v1746
        %v1755 = vadd.f32 %v1739, %v1749
        %v1756 = vadd.f32 %v1740, %v1752
        %vm1757 = vcmask 7168
        %1758 = vst.msk [vmem:[#allocation4] sm:$0xff] %vm1757, %v1753
        %1759 = vst.msk [vmem:[#allocation4 + $0x8] sm:$0xff] %vm1757, %v1754
        %1760 = vst.msk [vmem:[#allocation4 + $0x10] sm:$0xff] %vm1757, %v1755
        %1761 = vst.msk [vmem:[#allocation4 + $0x18] sm:$0xff] %vm1757, %v1756
        %v1762 = vld [vmem:[#allocation5] sm:$0xff]
        %v1763 = vld [vmem:[#allocation5 + $0x8] sm:$0xff]
        %v1764 = vld [vmem:[#allocation5 + $0x10] sm:$0xff]
        %v1765 = vld [vmem:[#allocation5 + $0x18] sm:$0xff]
        %1767 = vset.pattern.permute.xlu0 0
        %1768 = vperm.xlu0 %1767, %v1694
        %v1769 = vpop.permute.xlu0 %1768
        %1772 = vset.pattern.permute.xlu0 0
        %1773 = vperm.xlu0 %1772, %v1696
        %v1774 = vpop.permute.xlu0 %1773
        %1777 = vset.pattern.permute.xlu0 0
        %1778 = vperm.xlu0 %1777, %v1698
        %v1779 = vpop.permute.xlu0 %1778
        %1782 = vset.pattern.permute.xlu0 0
        %1783 = vperm.xlu0 %1782, %v1700
        %v1784 = vpop.permute.xlu0 %1783
        %v1786 = vmul.f32 %v1769, %v1762
        %v1787 = vmul.f32 %v1774, %v1763
        %v1788 = vmul.f32 %v1779, %v1764
        %v1789 = vmul.f32 %v1784, %v1765
        %v1790 = vpack.c.bf16 %v1726, %v1726
        %v1791 = vpack.c.bf16 %v1728, %v1728
        %v1792 = vpack.c.bf16 %v1730, %v1730
        %v1793 = vpack.c.bf16 %v1732, %v1732
        %v1795 = vsel %vm1484, %v1790, 0
        %vm1797 = vcmask 1043456
        %v1799 = vsel %vm1797, %v1476, 0
        %1801 = vmatprep.subr.bf16.mxu0 0
        %1802 = vmatpush1.bf16.msra.mxu0 0
        %1803 = vmatprep.subr.bf16.mxu0 0
        %1804 = vmatpush1.bf16.msra.mxu0 0
        %1805 = vmatprep.subr.bf16.mxu0 0
        %1806 = vmatpush1.bf16.msra.mxu0 0
        %1807 = vmatprep.subr.bf16.mxu0 0
        %1808 = vmatpush1.bf16.msra.mxu0 0
        %1809 = vmatprep.subr.bf16.mxu0 0
        %1810 = vmatpush1.bf16.msra.mxu0 0
        %1811 = vmatprep.subr.bf16.mxu0 0
        %1812 = vmatpush1.bf16.msra.mxu0 0
        %1813 = vmatprep.subr.bf16.mxu0 0
        %1814 = vmatpush1.bf16.msra.mxu0 0
        %1815 = vmatprep.subr.bf16.mxu0 0
        %1816 = vmatpush1.bf16.msra.mxu0 %v1799
        %1817 = vmatprep.subr.bf16.mxu0 0
        %1818 = vmatpush2.bf16.msra.mxu0 0
        %1819 = vmatprep.subr.bf16.mxu0 0
        %1820 = vmatpush2.bf16.msra.mxu0 0
        %1821 = vmatprep.subr.bf16.mxu0 0
        %1822 = vmatpush2.bf16.msra.mxu0 0
        %1823 = vmatprep.subr.bf16.mxu0 0
        %1824 = vmatpush2.bf16.msra.mxu0 0
        %1825 = vmatprep.subr.bf16.mxu0 0
        %1826 = vmatpush2.bf16.msra.mxu0 0
        %1827 = vmatprep.subr.bf16.mxu0 0
        %1828 = vmatpush2.bf16.msra.mxu0 0
        %1829 = vmatprep.subr.bf16.mxu0 0
        %1830 = vmatpush2.bf16.msra.mxu0 0
        %1831 = vmatprep.subr.bf16.mxu0 0
        %1832 = vmatpush2.bf16.msra.mxu0 0
        %1833 = vmatprep.mubr.bf16.mxu0 0
        %1834 = vmatmul.mubr.bf16.gmra.mxu0 %v1795
        %v1835 = vpop.f32.mrf.mxu0
        %v1836 = vadd.f32 0.0, %v1835
        %v1837 = vpop.f32.mrf.mxu0
        %v1838 = vpop.f32.mrf.mxu0
        %v1839 = vpop.f32.mrf.mxu0
        %1840 = vdwg.mxu0
        %v1842 = vsel %vm1484, %v1791, 0
        %v1845 = vsel %vm1797, %v1477, 0
        %1847 = vmatprep.subr.bf16.mxu0 0
        %1848 = vmatpush1.bf16.msra.mxu0 0
        %1849 = vmatprep.subr.bf16.mxu0 0
        %1850 = vmatpush1.bf16.msra.mxu0 0
        %1851 = vmatprep.subr.bf16.mxu0 0
        %1852 = vmatpush1.bf16.msra.mxu0 0
        %1853 = vmatprep.subr.bf16.mxu0 0
        %1854 = vmatpush1.bf16.msra.mxu0 0
        %1855 = vmatprep.subr.bf16.mxu0 0
        %1856 = vmatpush1.bf16.msra.mxu0 0
        %1857 = vmatprep.subr.bf16.mxu0 0
        %1858 = vmatpush1.bf16.msra.mxu0 0
        %1859 = vmatprep.subr.bf16.mxu0 0
        %1860 = vmatpush1.bf16.msra.mxu0 0
        %1861 = vmatprep.subr.bf16.mxu0 0
        %1862 = vmatpush1.bf16.msra.mxu0 %v1845
        %1863 = vmatprep.subr.bf16.mxu0 0
        %1864 = vmatpush2.bf16.msra.mxu0 0
        %1865 = vmatprep.subr.bf16.mxu0 0
        %1866 = vmatpush2.bf16.msra.mxu0 0
        %1867 = vmatprep.subr.bf16.mxu0 0
        %1868 = vmatpush2.bf16.msra.mxu0 0
        %1869 = vmatprep.subr.bf16.mxu0 0
        %1870 = vmatpush2.bf16.msra.mxu0 0
        %1871 = vmatprep.subr.bf16.mxu0 0
        %1872 = vmatpush2.bf16.msra.mxu0 0
        %1873 = vmatprep.subr.bf16.mxu0 0
        %1874 = vmatpush2.bf16.msra.mxu0 0
        %1875 = vmatprep.subr.bf16.mxu0 0
        %1876 = vmatpush2.bf16.msra.mxu0 0
        %1877 = vmatprep.subr.bf16.mxu0 0
        %1878 = vmatpush2.bf16.msra.mxu0 0
        %1879 = vmatprep.mubr.bf16.mxu0 0
        %1880 = vmatmul.mubr.bf16.gmra.mxu0 %v1842
        %v1881 = vpop.f32.mrf.mxu0
        %v1882 = vadd.f32 0.0, %v1881
        %v1883 = vpop.f32.mrf.mxu0
        %v1884 = vpop.f32.mrf.mxu0
        %v1885 = vpop.f32.mrf.mxu0
        %1886 = vdwg.mxu0
        %v1888 = vsel %vm1484, %v1792, 0
        %v1891 = vsel %vm1797, %v1478, 0
        %1893 = vmatprep.subr.bf16.mxu0 0
        %1894 = vmatpush1.bf16.msra.mxu0 0
        %1895 = vmatprep.subr.bf16.mxu0 0
        %1896 = vmatpush1.bf16.msra.mxu0 0
        %1897 = vmatprep.subr.bf16.mxu0 0
        %1898 = vmatpush1.bf16.msra.mxu0 0
        %1899 = vmatprep.subr.bf16.mxu0 0
        %1900 = vmatpush1.bf16.msra.mxu0 0
        %1901 = vmatprep.subr.bf16.mxu0 0
        %1902 = vmatpush1.bf16.msra.mxu0 0
        %1903 = vmatprep.subr.bf16.mxu0 0
        %1904 = vmatpush1.bf16.msra.mxu0 0
        %1905 = vmatprep.subr.bf16.mxu0 0
        %1906 = vmatpush1.bf16.msra.mxu0 0
        %1907 = vmatprep.subr.bf16.mxu0 0
        %1908 = vmatpush1.bf16.msra.mxu0 %v1891
        %1909 = vmatprep.subr.bf16.mxu0 0
        %1910 = vmatpush2.bf16.msra.mxu0 0
        %1911 = vmatprep.subr.bf16.mxu0 0
        %1912 = vmatpush2.bf16.msra.mxu0 0
        %1913 = vmatprep.subr.bf16.mxu0 0
        %1914 = vmatpush2.bf16.msra.mxu0 0
        %1915 = vmatprep.subr.bf16.mxu0 0
        %1916 = vmatpush2.bf16.msra.mxu0 0
        %1917 = vmatprep.subr.bf16.mxu0 0
        %1918 = vmatpush2.bf16.msra.mxu0 0
        %1919 = vmatprep.subr.bf16.mxu0 0
        %1920 = vmatpush2.bf16.msra.mxu0 0
        %1921 = vmatprep.subr.bf16.mxu0 0
        %1922 = vmatpush2.bf16.msra.mxu0 0
        %1923 = vmatprep.subr.bf16.mxu0 0
        %1924 = vmatpush2.bf16.msra.mxu0 0
        %1925 = vmatprep.mubr.bf16.mxu0 0
        %1926 = vmatmul.mubr.bf16.gmra.mxu0 %v1888
        %v1927 = vpop.f32.mrf.mxu0
        %v1928 = vadd.f32 0.0, %v1927
        %v1929 = vpop.f32.mrf.mxu0
        %v1930 = vpop.f32.mrf.mxu0
        %v1931 = vpop.f32.mrf.mxu0
        %1932 = vdwg.mxu0
        %v1934 = vsel %vm1484, %v1793, 0
        %v1937 = vsel %vm1797, %v1479, 0
        %1939 = vmatprep.subr.bf16.mxu0 0
        %1940 = vmatpush1.bf16.msra.mxu0 0
        %1941 = vmatprep.subr.bf16.mxu0 0
        %1942 = vmatpush1.bf16.msra.mxu0 0
        %1943 = vmatprep.subr.bf16.mxu0 0
        %1944 = vmatpush1.bf16.msra.mxu0 0
        %1945 = vmatprep.subr.bf16.mxu0 0
        %1946 = vmatpush1.bf16.msra.mxu0 0
        %1947 = vmatprep.subr.bf16.mxu0 0
        %1948 = vmatpush1.bf16.msra.mxu0 0
        %1949 = vmatprep.subr.bf16.mxu0 0
        %1950 = vmatpush1.bf16.msra.mxu0 0
        %1951 = vmatprep.subr.bf16.mxu0 0
        %1952 = vmatpush1.bf16.msra.mxu0 0
        %1953 = vmatprep.subr.bf16.mxu0 0
        %1954 = vmatpush1.bf16.msra.mxu0 %v1937
        %1955 = vmatprep.subr.bf16.mxu0 0
        %1956 = vmatpush2.bf16.msra.mxu0 0
        %1957 = vmatprep.subr.bf16.mxu0 0
        %1958 = vmatpush2.bf16.msra.mxu0 0
        %1959 = vmatprep.subr.bf16.mxu0 0
        %1960 = vmatpush2.bf16.msra.mxu0 0
        %1961 = vmatprep.subr.bf16.mxu0 0
        %1962 = vmatpush2.bf16.msra.mxu0 0
        %1963 = vmatprep.subr.bf16.mxu0 0
        %1964 = vmatpush2.bf16.msra.mxu0 0
        %1965 = vmatprep.subr.bf16.mxu0 0
        %1966 = vmatpush2.bf16.msra.mxu0 0
        %1967 = vmatprep.subr.bf16.mxu0 0
        %1968 = vmatpush2.bf16.msra.mxu0 0
        %1969 = vmatprep.subr.bf16.mxu0 0
        %1970 = vmatpush2.bf16.msra.mxu0 0
        %1971 = vmatprep.mubr.bf16.mxu0 0
        %1972 = vmatmul.mubr.bf16.gmra.mxu0 %v1934
        %v1973 = vpop.f32.mrf.mxu0
        %v1974 = vadd.f32 0.0, %v1973
        %v1975 = vpop.f32.mrf.mxu0
        %v1976 = vpop.f32.mrf.mxu0
        %v1977 = vpop.f32.mrf.mxu0
        %1978 = vdwg.mxu0
        %v1979 = vadd.f32 %v1786, %v1836
        %v1980 = vadd.f32 %v1787, %v1882
        %v1981 = vadd.f32 %v1788, %v1928
        %v1982 = vadd.f32 %v1789, %v1974
        %1983 = vst.msk [vmem:[#allocation5] sm:$0xff] %vm1484, %v1979
        %1984 = vst.msk [vmem:[#allocation5 + $0x8] sm:$0xff] %vm1484, %v1980
        %1985 = vst.msk [vmem:[#allocation5 + $0x10] sm:$0xff] %vm1484, %v1981
        %1986 = vst.msk [vmem:[#allocation5 + $0x18] sm:$0xff] %vm1484, %v1982
        %1987 = vst.msk [vmem:[#allocation3] sm:$0xff] %vm1757, %v1685
        %1988 = vst.msk [vmem:[#allocation3 + $0x8] sm:$0xff] %vm1757, %v1686
        %1989 = vst.msk [vmem:[#allocation3 + $0x10] sm:$0xff] %vm1757, %v1687
        %1990 = vst.msk [vmem:[#allocation3 + $0x18] sm:$0xff] %vm1757, %v1688
        // Predicated region
        $region101: #{tpu_custom_call.1} parent=91 // pred_check
          %p1991 = pneg %p646
        $region102: #{tpu_custom_call.1} parent=91 // pred_check_branch
          %1993 = sbr.rel (%p1991) target = $region104
        $region103: #{tpu_custom_call.1} parent=91 // pred_region
          %v1994 = vld [vmem:[#allocation4] sm:$0xff]
          %v1995 = vld [vmem:[#allocation4 + $0x8] sm:$0xff]
          %v1996 = vld [vmem:[#allocation4 + $0x10] sm:$0xff]
          %v1997 = vld [vmem:[#allocation4 + $0x18] sm:$0xff]
          %v1998 = vrcp.pop %v1994
          %v1999 = vrcp.pop %v1995
          %v2000 = vrcp.pop %v1996
          %v2001 = vrcp.pop %v1997
          %v2002 = vld [vmem:[#allocation5] sm:$0xff]
          %v2003 = vld [vmem:[#allocation5 + $0x8] sm:$0xff]
          %v2004 = vld [vmem:[#allocation5 + $0x10] sm:$0xff]
          %v2005 = vld [vmem:[#allocation5 + $0x18] sm:$0xff]
          %2007 = vset.pattern.permute.xlu0 0
          %2008 = vperm.xlu0 %2007, %v1998
          %v2009 = vpop.permute.xlu0 %2008
          %2012 = vset.pattern.permute.xlu0 0
          %2013 = vperm.xlu0 %2012, %v1999
          %v2014 = vpop.permute.xlu0 %2013
          %2017 = vset.pattern.permute.xlu0 0
          %2018 = vperm.xlu0 %2017, %v2000
          %v2019 = vpop.permute.xlu0 %2018
          %2022 = vset.pattern.permute.xlu0 0
          %2023 = vperm.xlu0 %2022, %v2001
          %v2024 = vpop.permute.xlu0 %2023
          %v2026 = vmul.f32 %v2002, %v2009
          %v2027 = vmul.f32 %v2003, %v2014
          %v2028 = vmul.f32 %v2004, %v2019
          %v2029 = vmul.f32 %v2005, %v2024
          %v2030 = vpack.c.bf16 %v2026, %v2026
          %v2031 = vpack.c.bf16 %v2027, %v2027
          %v2032 = vpack.c.bf16 %v2028, %v2028
          %v2033 = vpack.c.bf16 %v2029, %v2029
          %v2034 = vld [vmem:[%s8] sm:$0xf]
          %v2035 = vld [vmem:[%s8 + $0x4] sm:$0xf]
          %v2036 = vld [vmem:[%s8 + $0x8] sm:$0xf]
          %v2037 = vld [vmem:[%s8 + $0xc] sm:$0xf]
          %v2039 = vsel %vm1484, %v2030, 0
          %v2042 = vsel %vm1797, %v2034, 0
          %2044 = vmatprep.subr.bf16.mxu0 0
          %2045 = vmatpush1.bf16.msra.mxu0 0
          %2046 = vmatprep.subr.bf16.mxu0 0
          %2047 = vmatpush1.bf16.msra.mxu0 0
          %2048 = vmatprep.subr.bf16.mxu0 0
          %2049 = vmatpush1.bf16.msra.mxu0 0
          %2050 = vmatprep.subr.bf16.mxu0 0
          %2051 = vmatpush1.bf16.msra.mxu0 0
          %2052 = vmatprep.subr.bf16.mxu0 0
          %2053 = vmatpush1.bf16.msra.mxu0 0
          %2054 = vmatprep.subr.bf16.mxu0 0
          %2055 = vmatpush1.bf16.msra.mxu0 0
          %2056 = vmatprep.subr.bf16.mxu0 0
          %2057 = vmatpush1.bf16.msra.mxu0 0
          %2058 = vmatprep.subr.bf16.mxu0 0
          %2059 = vmatpush1.bf16.msra.mxu0 %v2042
          %2060 = vmatprep.subr.bf16.mxu0 0
          %2061 = vmatpush2.bf16.msra.mxu0 0
          %2062 = vmatprep.subr.bf16.mxu0 0
          %2063 = vmatpush2.bf16.msra.mxu0 0
          %2064 = vmatprep.subr.bf16.mxu0 0
          %2065 = vmatpush2.bf16.msra.mxu0 0
          %2066 = vmatprep.subr.bf16.mxu0 0
          %2067 = vmatpush2.bf16.msra.mxu0 0
          %2068 = vmatprep.subr.bf16.mxu0 0
          %2069 = vmatpush2.bf16.msra.mxu0 0
          %2070 = vmatprep.subr.bf16.mxu0 0
          %2071 = vmatpush2.bf16.msra.mxu0 0
          %2072 = vmatprep.subr.bf16.mxu0 0
          %2073 = vmatpush2.bf16.msra.mxu0 0
          %2074 = vmatprep.subr.bf16.mxu0 0
          %2075 = vmatpush2.bf16.msra.mxu0 0
          %2076 = vmatprep.mubr.bf16.mxu0 0
          %2077 = vmatmul.mubr.bf16.gmra.mxu0 %v2039
          %v2078 = vpop.f32.mrf.mxu0
          %v2079 = vadd.f32 0.0, %v2078
          %v2080 = vpop.f32.mrf.mxu0
          %v2081 = vpop.f32.mrf.mxu0
          %v2082 = vpop.f32.mrf.mxu0
          %2083 = vdwg.mxu0
          %v2085 = vsel %vm1484, %v2031, 0
          %v2088 = vsel %vm1797, %v2035, 0
          %2090 = vmatprep.subr.bf16.mxu0 0
          %2091 = vmatpush1.bf16.msra.mxu0 0
          %2092 = vmatprep.subr.bf16.mxu0 0
          %2093 = vmatpush1.bf16.msra.mxu0 0
          %2094 = vmatprep.subr.bf16.mxu0 0
          %2095 = vmatpush1.bf16.msra.mxu0 0
          %2096 = vmatprep.subr.bf16.mxu0 0
          %2097 = vmatpush1.bf16.msra.mxu0 0
          %2098 = vmatprep.subr.bf16.mxu0 0
          %2099 = vmatpush1.bf16.msra.mxu0 0
          %2100 = vmatprep.subr.bf16.mxu0 0
          %2101 = vmatpush1.bf16.msra.mxu0 0
          %2102 = vmatprep.subr.bf16.mxu0 0
          %2103 = vmatpush1.bf16.msra.mxu0 0
          %2104 = vmatprep.subr.bf16.mxu0 0
          %2105 = vmatpush1.bf16.msra.mxu0 %v2088
          %2106 = vmatprep.subr.bf16.mxu0 0
          %2107 = vmatpush2.bf16.msra.mxu0 0
          %2108 = vmatprep.subr.bf16.mxu0 0
          %2109 = vmatpush2.bf16.msra.mxu0 0
          %2110 = vmatprep.subr.bf16.mxu0 0
          %2111 = vmatpush2.bf16.msra.mxu0 0
          %2112 = vmatprep.subr.bf16.mxu0 0
          %2113 = vmatpush2.bf16.msra.mxu0 0
          %2114 = vmatprep.subr.bf16.mxu0 0
          %2115 = vmatpush2.bf16.msra.mxu0 0
          %2116 = vmatprep.subr.bf16.mxu0 0
          %2117 = vmatpush2.bf16.msra.mxu0 0
          %2118 = vmatprep.subr.bf16.mxu0 0
          %2119 = vmatpush2.bf16.msra.mxu0 0
          %2120 = vmatprep.subr.bf16.mxu0 0
          %2121 = vmatpush2.bf16.msra.mxu0 0
          %2122 = vmatprep.mubr.bf16.mxu0 0
          %2123 = vmatmul.mubr.bf16.gmra.mxu0 %v2085
          %v2124 = vpop.f32.mrf.mxu0
          %v2125 = vadd.f32 0.0, %v2124
          %v2126 = vpop.f32.mrf.mxu0
          %v2127 = vpop.f32.mrf.mxu0
          %v2128 = vpop.f32.mrf.mxu0
          %2129 = vdwg.mxu0
          %v2131 = vsel %vm1484, %v2032, 0
          %v2134 = vsel %vm1797, %v2036, 0
          %2136 = vmatprep.subr.bf16.mxu0 0
          %2137 = vmatpush1.bf16.msra.mxu0 0
          %2138 = vmatprep.subr.bf16.mxu0 0
          %2139 = vmatpush1.bf16.msra.mxu0 0
          %2140 = vmatprep.subr.bf16.mxu0 0
          %2141 = vmatpush1.bf16.msra.mxu0 0
          %2142 = vmatprep.subr.bf16.mxu0 0
          %2143 = vmatpush1.bf16.msra.mxu0 0
          %2144 = vmatprep.subr.bf16.mxu0 0
          %2145 = vmatpush1.bf16.msra.mxu0 0
          %2146 = vmatprep.subr.bf16.mxu0 0
          %2147 = vmatpush1.bf16.msra.mxu0 0
          %2148 = vmatprep.subr.bf16.mxu0 0
          %2149 = vmatpush1.bf16.msra.mxu0 0
          %2150 = vmatprep.subr.bf16.mxu0 0
          %2151 = vmatpush1.bf16.msra.mxu0 %v2134
          %2152 = vmatprep.subr.bf16.mxu0 0
          %2153 = vmatpush2.bf16.msra.mxu0 0
          %2154 = vmatprep.subr.bf16.mxu0 0
          %2155 = vmatpush2.bf16.msra.mxu0 0
          %2156 = vmatprep.subr.bf16.mxu0 0
          %2157 = vmatpush2.bf16.msra.mxu0 0
          %2158 = vmatprep.subr.bf16.mxu0 0
          %2159 = vmatpush2.bf16.msra.mxu0 0
          %2160 = vmatprep.subr.bf16.mxu0 0
          %2161 = vmatpush2.bf16.msra.mxu0 0
          %2162 = vmatprep.subr.bf16.mxu0 0
          %2163 = vmatpush2.bf16.msra.mxu0 0
          %2164 = vmatprep.subr.bf16.mxu0 0
          %2165 = vmatpush2.bf16.msra.mxu0 0
          %2166 = vmatprep.subr.bf16.mxu0 0
          %2167 = vmatpush2.bf16.msra.mxu0 0
          %2168 = vmatprep.mubr.bf16.mxu0 0
          %2169 = vmatmul.mubr.bf16.gmra.mxu0 %v2131
          %v2170 = vpop.f32.mrf.mxu0
          %v2171 = vadd.f32 0.0, %v2170
          %v2172 = vpop.f32.mrf.mxu0
          %v2173 = vpop.f32.mrf.mxu0
          %v2174 = vpop.f32.mrf.mxu0
          %2175 = vdwg.mxu0
          %v2177 = vsel %vm1484, %v2033, 0
          %v2180 = vsel %vm1797, %v2037, 0
          %2182 = vmatprep.subr.bf16.mxu0 0
          %2183 = vmatpush1.bf16.msra.mxu0 0
          %2184 = vmatprep.subr.bf16.mxu0 0
          %2185 = vmatpush1.bf16.msra.mxu0 0
          %2186 = vmatprep.subr.bf16.mxu0 0
          %2187 = vmatpush1.bf16.msra.mxu0 0
          %2188 = vmatprep.subr.bf16.mxu0 0
          %2189 = vmatpush1.bf16.msra.mxu0 0
          %2190 = vmatprep.subr.bf16.mxu0 0
          %2191 = vmatpush1.bf16.msra.mxu0 0
          %2192 = vmatprep.subr.bf16.mxu0 0
          %2193 = vmatpush1.bf16.msra.mxu0 0
          %2194 = vmatprep.subr.bf16.mxu0 0
          %2195 = vmatpush1.bf16.msra.mxu0 0
          %2196 = vmatprep.subr.bf16.mxu0 0
          %2197 = vmatpush1.bf16.msra.mxu0 %v2180
          %2198 = vmatprep.subr.bf16.mxu0 0
          %2199 = vmatpush2.bf16.msra.mxu0 0
          %2200 = vmatprep.subr.bf16.mxu0 0
          %2201 = vmatpush2.bf16.msra.mxu0 0
          %2202 = vmatprep.subr.bf16.mxu0 0
          %2203 = vmatpush2.bf16.msra.mxu0 0
          %2204 = vmatprep.subr.bf16.mxu0 0
          %2205 = vmatpush2.bf16.msra.mxu0 0
          %2206 = vmatprep.subr.bf16.mxu0 0
          %2207 = vmatpush2.bf16.msra.mxu0 0
          %2208 = vmatprep.subr.bf16.mxu0 0
          %2209 = vmatpush2.bf16.msra.mxu0 0
          %2210 = vmatprep.subr.bf16.mxu0 0
          %2211 = vmatpush2.bf16.msra.mxu0 0
          %2212 = vmatprep.subr.bf16.mxu0 0
          %2213 = vmatpush2.bf16.msra.mxu0 0
          %2214 = vmatprep.mubr.bf16.mxu0 0
          %2215 = vmatmul.mubr.bf16.gmra.mxu0 %v2177
          %v2216 = vpop.f32.mrf.mxu0
          %v2217 = vadd.f32 0.0, %v2216
          %v2218 = vpop.f32.mrf.mxu0
          %v2219 = vpop.f32.mrf.mxu0
          %v2220 = vpop.f32.mrf.mxu0
          %2221 = vdwg.mxu0
          %vm2222 = vcmask 261120
          %v2223 = vsel %vm2222, %v2079, 0.0
          %v2224 = vsel %vm2222, %v2125, 0.0
          %v2225 = vadd.f32 %v2223, %v2224
          %v2226 = vsel %vm2222, %v2171, 0.0
          %v2227 = vadd.f32 %v2225, %v2226
          %v2228 = vsel %vm2222, %v2217, 0.0
          %v2229 = vadd.f32 %v2227, %v2228
          %v2230 = vld [vmem:[%s9] sm:$0x1]
          %v2232 = vlaneseq
          %v2233 = vshrl.u32 %v2232, 7
          %v2234 = vsub.s32 0, %v2233
          %v2235 = vrot.slane %v2230, %v2234
          %v2237 = vadd.f32 %v2229, %v2235
          %v2238 = vld [vmem:[%s633] sm:$0xff]
          %v2239 = vadd.f32 %v2237, %v2238
          %v2240 = vld [vmem:[%s10] sm:$0x1]
          %v2241 = vld [vmem:[%s11] sm:$0x1]
          %v2242 = vsel %vm2222, %v2239, 0.0
          %2243 = vadd.xlane.f32.xlu0 %v2242
          %v2244 = vpop.xlane.xlu0 %2243
          %v2245 = vrcp.pop 32.0
          %v2246 = vmul.f32 %v2244, %v2245
          %v2247 = vsub.f32 %v2239, %v2246
          %v2248 = vmul.f32 %v2247, %v2247
          %v2249 = vsel %vm2222, %v2248, 0.0
          %2250 = vadd.xlane.f32.xlu0 %v2249
          %v2251 = vpop.xlane.xlu0 %2250
          %v2252 = vmul.f32 %v2251, %v2245
          %v2253 = vadd.f32 %v2252, 1e-05
          %v2254 = vrsqrt.pop %v2253
          %v2255 = vmul.f32 %v2253, %v2254
          %vm2256 = vcmp.eq.f32.partialorder %v2253, inf
          %v2257 = vsel %vm2256, %v2253, %v2255
          %vm2258 = vcmp.eq.f32.partialorder %v2253, 0.0
          %v2259 = vand.u32 %v2253, 2147483648
          %v2260 = vsel %vm2258, %v2259, %v2257
          %v2261 = vrcp.pop %v2260
          %v2262 = vmul.f32 %v2247, %v2261
          %v2264 = vlaneseq
          %v2265 = vshrl.u32 %v2264, 7
          %v2266 = vsub.s32 0, %v2265
          %v2267 = vrot.slane %v2240, %v2266
          %v2269 = vmul.f32 %v2262, %v2267
          %v2271 = vlaneseq
          %v2272 = vshrl.u32 %v2271, 7
          %v2273 = vsub.s32 0, %v2272
          %v2274 = vrot.slane %v2241, %v2273
          %v2276 = vadd.f32 %v2269, %v2274
          %v2277 = vpack.c.bf16 %v2276, %v2276
          %v2278 = vld [vmem:[%s12] sm:$0xf]
          %v2279 = vld [vmem:[%s12 + $0x4] sm:$0xf]
          %v2280 = vld [vmem:[%s12 + $0x8] sm:$0xf]
          %v2281 = vld [vmem:[%s12 + $0xc] sm:$0xf]
          %v2282 = vld [vmem:[%s13] sm:$0x1]
          %v2284 = vlaneseq
          %v2285 = vshrl.u32 %v2284, 7
          %v2286 = vsub.s32 0, %v2285
          %v2287 = vrot.slane %v2282, %v2286
          %v2293 = vunpack.c.l.b16 %v2278
          %v2294 = vunpack.c.l.b16 %v2279
          %v2295 = vunpack.c.l.b16 %v2280
          %v2296 = vunpack.c.l.b16 %v2281
          %v2297 = vpack.c.b16 %v2294, %v2293
          %v2298 = vpack.c.b16 %v2296, %v2295
          %v2302 = vsel %vm2222, %v2277, 0
          %2304 = vmatprep.subr.bf16.mxu0 0
          %2305 = vmatpush1.bf16.msra.mxu0 0
          %2306 = vmatprep.subr.bf16.mxu0 0
          %2307 = vmatpush1.bf16.msra.mxu0 0
          %2308 = vmatprep.subr.bf16.mxu0 0
          %2309 = vmatpush1.bf16.msra.mxu0 0
          %2310 = vmatprep.subr.bf16.mxu0 0
          %2311 = vmatpush1.bf16.msra.mxu0 0
          %2312 = vmatprep.subr.bf16.mxu0 0
          %2313 = vmatpush1.bf16.msra.mxu0 0
          %2314 = vmatprep.subr.bf16.mxu0 0
          %2315 = vmatpush1.bf16.msra.mxu0 0
          %2316 = vmatprep.subr.bf16.mxu0 0
          %2317 = vmatpush1.bf16.msra.mxu0 %v2298
          %2318 = vmatprep.subr.bf16.mxu0 0
          %2319 = vmatpush1.bf16.msra.mxu0 %v2297
          %2320 = vmatprep.subr.bf16.mxu0 0
          %2321 = vmatpush2.bf16.msra.mxu0 0
          %2322 = vmatprep.subr.bf16.mxu0 0
          %2323 = vmatpush2.bf16.msra.mxu0 0
          %2324 = vmatprep.subr.bf16.mxu0 0
          %2325 = vmatpush2.bf16.msra.mxu0 0
          %2326 = vmatprep.subr.bf16.mxu0 0
          %2327 = vmatpush2.bf16.msra.mxu0 0
          %2328 = vmatprep.subr.bf16.mxu0 0
          %2329 = vmatpush2.bf16.msra.mxu0 0
          %2330 = vmatprep.subr.bf16.mxu0 0
          %2331 = vmatpush2.bf16.msra.mxu0 0
          %2332 = vmatprep.subr.bf16.mxu0 0
          %2333 = vmatpush2.bf16.msra.mxu0 0
          %2334 = vmatprep.subr.bf16.mxu0 0
          %2335 = vmatpush2.bf16.msra.mxu0 0
          %2336 = vmatprep.mubr.bf16.mxu0 0
          %2337 = vmatmul.mubr.bf16.gmra.mxu0 %v2302
          %v2338 = vpop.f32.mrf.mxu0
          %v2339 = vadd.f32 %v2287, %v2338
          %v2340 = vpop.f32.mrf.mxu0
          %v2341 = vpop.f32.mrf.mxu0
          %v2342 = vpop.f32.mrf.mxu0
          %2343 = vdwg.mxu0
          %v2344 = vmul.f32 %v2339, 0.5
          %v2345 = vmul.f32 %v2339, 0.70710677
          %v2346 = verf.f32.pop %v2345
          %v2347 = vadd.f32 %v2346, 1.0
          %v2348 = vmul.f32 %v2344, %v2347
          %v2349 = vpack.c.bf16 %v2348, %v2348
          %v2350 = vld [vmem:[%s14] sm:$0xf]
          %v2351 = vld [vmem:[%s14 + $0x4] sm:$0xf]
          %v2352 = vld [vmem:[%s14 + $0x8] sm:$0xf]
          %v2353 = vld [vmem:[%s14 + $0xc] sm:$0xf]
          %v2354 = vld [vmem:[%s14 + $0x10] sm:$0xf]
          %v2355 = vld [vmem:[%s14 + $0x14] sm:$0xf]
          %v2356 = vld [vmem:[%s14 + $0x18] sm:$0xf]
          %v2357 = vld [vmem:[%s14 + $0x1c] sm:$0xf]
          %v2358 = vld [vmem:[%s15] sm:$0x1]
          %v2360 = vlaneseq
          %v2361 = vshrl.u32 %v2360, 7
          %v2362 = vsub.s32 0, %v2361
          %v2363 = vrot.slane %v2358, %v2362
          %v2373 = vunpack.c.l.b16 %v2350
          %v2374 = vunpack.c.l.b16 %v2351
          %v2375 = vunpack.c.l.b16 %v2352
          %v2376 = vunpack.c.l.b16 %v2353
          %v2377 = vunpack.c.l.b16 %v2354
          %v2378 = vunpack.c.l.b16 %v2355
          %v2379 = vunpack.c.l.b16 %v2356
          %v2380 = vunpack.c.l.b16 %v2357
          %v2381 = vpack.c.b16 %v2374, %v2373
          %v2382 = vpack.c.b16 %v2376, %v2375
          %v2383 = vpack.c.b16 %v2378, %v2377
          %v2384 = vpack.c.b16 %v2380, %v2379
          %vm2389 = vcmask 523264
          %v2391 = vsel %vm2389, %v2349, 0
          %2393 = vmatprep.subr.bf16.mxu0 0
          %2394 = vmatpush1.bf16.msra.mxu0 0
          %2395 = vmatprep.subr.bf16.mxu0 0
          %2396 = vmatpush1.bf16.msra.mxu0 0
          %2397 = vmatprep.subr.bf16.mxu0 0
          %2398 = vmatpush1.bf16.msra.mxu0 0
          %2399 = vmatprep.subr.bf16.mxu0 0
          %2400 = vmatpush1.bf16.msra.mxu0 0
          %2401 = vmatprep.subr.bf16.mxu0 0
          %2402 = vmatpush1.bf16.msra.mxu0 %v2384
          %2403 = vmatprep.subr.bf16.mxu0 0
          %2404 = vmatpush1.bf16.msra.mxu0 %v2383
          %2405 = vmatprep.subr.bf16.mxu0 0
          %2406 = vmatpush1.bf16.msra.mxu0 %v2382
          %2407 = vmatprep.subr.bf16.mxu0 0
          %2408 = vmatpush1.bf16.msra.mxu0 %v2381
          %2409 = vmatprep.subr.bf16.mxu0 0
          %2410 = vmatpush2.bf16.msra.mxu0 0
          %2411 = vmatprep.subr.bf16.mxu0 0
          %2412 = vmatpush2.bf16.msra.mxu0 0
          %2413 = vmatprep.subr.bf16.mxu0 0
          %2414 = vmatpush2.bf16.msra.mxu0 0
          %2415 = vmatprep.subr.bf16.mxu0 0
          %2416 = vmatpush2.bf16.msra.mxu0 0
          %2417 = vmatprep.subr.bf16.mxu0 0
          %2418 = vmatpush2.bf16.msra.mxu0 0
          %2419 = vmatprep.subr.bf16.mxu0 0
          %2420 = vmatpush2.bf16.msra.mxu0 0
          %2421 = vmatprep.subr.bf16.mxu0 0
          %2422 = vmatpush2.bf16.msra.mxu0 0
          %2423 = vmatprep.subr.bf16.mxu0 0
          %2424 = vmatpush2.bf16.msra.mxu0 0
          %2425 = vmatprep.mubr.bf16.mxu0 0
          %2426 = vmatmul.mubr.bf16.gmra.mxu0 %v2391
          %v2427 = vpop.f32.mrf.mxu0
          %v2428 = vadd.f32 %v2363, %v2427
          %v2429 = vpop.f32.mrf.mxu0
          %v2430 = vpop.f32.mrf.mxu0
          %v2431 = vpop.f32.mrf.mxu0
          %2432 = vdwg.mxu0
          %v2433 = vadd.f32 %v2428, %v2276
          %v2434 = vld [vmem:[%s16] sm:$0x1]
          %v2435 = vld [vmem:[%s17] sm:$0x1]
          %v2436 = vsel %vm2222, %v2433, 0.0
          %2437 = vadd.xlane.f32.xlu0 %v2436
          %v2438 = vpop.xlane.xlu0 %2437
          %v2439 = vmul.f32 %v2438, %v2245
          %v2440 = vsub.f32 %v2433, %v2439
          %v2441 = vmul.f32 %v2440, %v2440
          %v2442 = vsel %vm2222, %v2441, 0.0
          %2443 = vadd.xlane.f32.xlu0 %v2442
          %v2444 = vpop.xlane.xlu0 %2443
          %v2445 = vmul.f32 %v2444, %v2245
          %v2446 = vadd.f32 %v2445, 1e-05
          %v2447 = vrsqrt.pop %v2446
          %v2448 = vmul.f32 %v2446, %v2447
          %vm2449 = vcmp.eq.f32.partialorder %v2446, inf
          %v2450 = vsel %vm2449, %v2446, %v2448
          %vm2451 = vcmp.eq.f32.partialorder %v2446, 0.0
          %v2452 = vand.u32 %v2446, 2147483648
          %v2453 = vsel %vm2451, %v2452, %v2450
          %v2454 = vrcp.pop %v2453
          %v2455 = vmul.f32 %v2440, %v2454
          %v2457 = vlaneseq
          %v2458 = vshrl.u32 %v2457, 7
          %v2459 = vsub.s32 0, %v2458
          %v2460 = vrot.slane %v2434, %v2459
          %v2462 = vmul.f32 %v2455, %v2460
          %v2464 = vlaneseq
          %v2465 = vshrl.u32 %v2464, 7
          %v2466 = vsub.s32 0, %v2465
          %v2467 = vrot.slane %v2435, %v2466
          %v2469 = vadd.f32 %v2462, %v2467
          %2470 = vst.msk [vmem:[%s626] sm:$0xff] %vm2222, %v2469
        $region104: #{tpu_custom_call.1} parent=91 // pred_fallthru
          _
        %s2471 = sand.u32 %s457, 1
        %s2472 = scalar_lea.sflag [#allocation9], %s2471
        %s2473 = sand.u32 %s457, 1
        %s2474 = smul.addr %s2473, 8
        %s2475 = scalar_lea.vmem [#allocation8], %s2474
        // Predicated region
        $region105: #{tpu_custom_call.1} parent=91 // pred_check
          %p2476 = pneg %p467
        $region106: #{tpu_custom_call.1} parent=91 // pred_check_branch
          %2478 = sbr.rel (%p2476) target = $region108
        $region107: #{tpu_custom_call.1} parent=91 // pred_region
          %s2480 = ssub.s32 128, 128
          %2481 = vsyncadd %s2472, %s2480
          %s2482 = sadd.s32 %s38, %s37
          %s2483 = smul.addr %s2482, 128
          %s2484 = scalar_lea.hbm %s18, %s2483
          %s2486 = sshll.u32 %s2475, 4
          %s2487 = int_to_ptr.vmem [resolvable:$true] %s2486
          %2489 = dma.vmem_to_hbm [thread:$0]  %s2487, 128, %s2484, %s2472
        $region108: #{tpu_custom_call.1} parent=91 // pred_fallthru
          _
      $region92: #{tpu_custom_call.1} parent=5 // pred_fallthru
        _
      %p2490 = scmp.le.s32.totalorder 2, %s27
      // Predicated region
      $region109: #{tpu_custom_call.1} parent=5 // pred_check
        %p2491 = pneg %p2490
      $region110: #{tpu_custom_call.1} parent=5 // pred_check_branch
        %2493 = sbr.rel (%p2491) target = $region112
      $region111: #{tpu_custom_call.1} parent=5 // pred_region
        %s2494 = ssub.s32 %s27, 2
        // Predicated region
        $region113: #{tpu_custom_call.1} parent=111 // pred_check
          %p2495 = pneg %p473
        $region114: #{tpu_custom_call.1} parent=111 // pred_check_branch
          %2497 = sbr.rel (%p2495) target = $region116
        $region115: #{tpu_custom_call.1} parent=111 // pred_region
          %s2498 = sand.u32 %s458, 1
          %s2499 = scalar_lea.sflag [#allocation9], %s2498
          %s2500 = sand.u32 %s458, 1
          %s2501 = smul.addr %s2500, 8
          %s2502 = scalar_lea.vmem [#allocation8], %s2501
          %2503 = dma.done %s2499, 128
        $region116: #{tpu_custom_call.1} parent=111 // pred_fallthru
          _
      $region112: #{tpu_custom_call.1} parent=5 // pred_fallthru
        _
    $region6: #{tpu_custom_call.1} parent=1 // loop_footer
      %s31 = sadd.s32 1, %s27
    $region7: #{tpu_custom_call.1} parent=1 // loop_footer_branch
      %26 = sbr.rel target = $region3
    $region8: #{tpu_custom_call.1} parent=1 // loop_exit
      _
    %2504 = vsyncpa [#allocation9], 1
    %s2505 = scalar_lea.sflag [#allocation9], 1
    %2506 = vsyncpa %s2505, 1

</llo_original>
